<compile_context>
chip_gen: v5e
topology: v5e:2x2
jax: 0.10.0
libtpu: 0.0.40
codegen_flags: <defaults>
</compile_context>

<pallas_src>
import functools

import jax
import jax.numpy as jnp
from jax.experimental import pallas as pl
from jax.experimental.pallas import tpu as pltpu


# ----------------------------------------------------------------------------
# Fused Pallas kernel: L residual LSTM blocks + fc head, one batch tile per grid step
# ----------------------------------------------------------------------------
def _lstm_decoder_fused_kernel(x_ref, wg_ref, wl_ref, whh_ref, bg_ref, bl_ref,
                               fcw_ref, fcb_ref, out_ref,
                               xbuf, gbuf, rbuf, *,
                               T, B, H, num_layers, compute_dtype):
    """Layouts (per batch tile of B rows; time-major flat: row t*B + b  <->  x[b, t, :]):
         x_ref : (T*B, H)   input activations (compute_dtype)
         wg    : (L, H, 4H) W_ih^T per layer          (compute_dtype)
         wl    : (L, H, H)  residual Linear W^T       (compute_dtype)
         whh   : (L, H, 4H) W_hh^T per layer          (compute_dtype)
         bg    : (L, 1, 4H) b_ih + b_hh               (f32)
         bl    : (L, 1, H)  residual Linear bias      (f32)
         fcw   : (H, O), fcb: (1, O)
         xbuf  : (T*B, H)   VMEM scratch, current layer activations (compute_dtype)
         gbuf  : (T*B, 4H)  VMEM scratch, hoisted gate pre-activations (f32, lane-dense)
         rbuf  : (T*B, H)   VMEM scratch, hoisted residual Linear(x)  (f32)
       PyTorch LSTM gate order: i, f, g, o.
    """
    for layer in range(num_layers):                 # static & small -> Python loop
        w_g = wg_ref[layer]                         # (H, 4H)
        w_l = wl_ref[layer]                         # (H, H)
        w_hh = whh_ref[layer]                       # (H, 4H)

        # Layer 0 reads the input block directly (no x_ref -> xbuf copy).
        src = x_ref[...] if layer == 0 else xbuf[...]            # (T*B, H) compute_dtype

        # Time-invariant projections hoisted out of the recurrence: two big MXU matmuls over
        # ALL timesteps, each with a lane-dense output slab.
        gbuf[...] = jnp.dot(src, w_g, preferred_element_type=jnp.float32) + bg_ref[layer]
        rbuf[...] = jnp.dot(src, w_l, preferred_element_type=jnp.float32) + bl_ref[layer]

        def step(t, carry):
            h, c = carry                                          # f32 carries, live in vregs
            base = pl.multiple_of(t * B, B)                       # tile-aligned (B % 16 == 0)
            gates = gbuf[pl.ds(base, B), :] + jnp.dot(
                h.astype(compute_dtype), w_hh, preferred_element_type=jnp.float32)
            # sigmoid(x) == 0.5 * (tanh(x/2) + 1): one EUP push instead of exp + reciprocal.
            i_g = 0.5 * (jnp.tanh(0.5 * gates[:, 0 * H:1 * H]) + 1.0)
            f_g = 0.5 * (jnp.tanh(0.5 * gates[:, 1 * H:2 * H]) + 1.0)
            g_g = jnp.tanh(gates[:, 2 * H:3 * H])
            o_g = 0.5 * (jnp.tanh(0.5 * gates[:, 3 * H:4 * H]) + 1.0)
            c_new = f_g * c + i_g * g_g
            h_new = o_g * jnp.tanh(c_new)
            # block output = LSTM output + residual Linear(x_t); feeds the next layer.
            xbuf[pl.ds(base, B), :] = (h_new + rbuf[pl.ds(base, B), :]).astype(compute_dtype)
            return h_new, c_new

        zeros = jnp.zeros((B, H), jnp.float32)
        jax.lax.fori_loop(0, T, step, (zeros, zeros),
                          unroll=True if T <= 32 else 8)

    # fc head on the last timestep of the final activations (rows (T-1)*B .. T*B-1).
    last = xbuf[pl.ds((T - 1) * B, B), :]
    out_ref[...] = (jnp.dot(last, fcw_ref[...], preferred_element_type=jnp.float32)
                    + fcb_ref[...]).astype(out_ref.dtype)


# ----------------------------------------------------------------------------
# Wrapper
# ----------------------------------------------------------------------------
@functools.partial(jax.jit, static_argnames=("compute_dtype", "batch_tile"))
def lstm_decoder_forward(x_bth, params, compute_dtype=jnp.bfloat16, batch_tile=16):
    """Full LSTMDecoder forward.  x_bth: (B, T, H) batch_first, like PyTorch.
    compute_dtype controls MXU operands and inter-layer activation storage; gate math,
    h/c state and all accumulation are always f32."""
    B, T, H = x_bth.shape
    L = params["w_gates"].shape[0]
    O = params["fcw"].shape[1]
    assert L >= 1

    # Batch tile >= 16 and a multiple of 16 so bf16 activation stores fill a sublane group.
    B_tile = max(16, int(batch_tile))
    B_tile = ((B_tile + 15) // 16) * 16
    n_bt = (B + B_tile - 1) // B_tile
    B_pad = n_bt * B_tile

    x_p = x_bth.astype(compute_dtype)
    if B_pad != B:
        x_p = jnp.pad(x_p, ((0, B_pad - B), (0, 0), (0, 0)))
    # Per-batch-tile, time-major flat layout: within a tile, row t*B_tile + b_local.
    x_blk = x_p.reshape(n_bt, B_tile, T, H).transpose(0, 2, 1, 3).reshape(n_bt, T * B_tile, H)

    wg = params["w_gates"].astype(compute_dtype)   # (L, H, 4H)
    wl = params["w_lin"].astype(compute_dtype)     # (L, H, H)
    whh = params["w_hh"].astype(compute_dtype)     # (L, H, 4H)
    bg = params["b_gates"].astype(jnp.float32)     # (L, 1, 4H)
    bl = params["b_lin"].astype(jnp.float32)       # (L, 1, H)
    fcw = params["fcw"].astype(compute_dtype)      # (H, O)
    fcb = params["fcb"].astype(jnp.float32)        # (1, O)

    kernel = functools.partial(
        _lstm_decoder_fused_kernel,
        T=T, B=B_tile, H=H, num_layers=L, compute_dtype=compute_dtype)

    itemc = jnp.dtype(compute_dtype).itemsize
    # Per-core VMEM residents: (double-buffered) input tile + weights + out tile, plus scratch.
    x_block_bytes = T * B_tile * H * itemc
    w_bytes = ((wg.size + wl.size + whh.size + fcw.size) * itemc
               + (bg.size + bl.size + fcb.size) * 4)
    out_block_bytes = B_tile * O * 4
    scratch_bytes = (T * B_tile * H * itemc          # xbuf (compute_dtype)
                     + T * B_tile * 4 * H * 4        # gbuf (f32)
                     + T * B_tile * H * 4)           # rbuf (f32)
    needed = 2 * (x_block_bytes + w_bytes + out_block_bytes) + scratch_bytes
    vmem_limit = int(min(max(2 * needed, 32 << 20), 64 << 20))

    flops = L * 2 * T * B_pad * H * (9 * H) + 2 * B_pad * H * O
    transcendentals = L * 5 * T * B_pad * H
    bytes_accessed = (x_blk.size * itemc
                      + (wg.size + wl.size + whh.size + fcw.size) * itemc
                      + (bg.size + bl.size + fcb.size) * 4
                      + B_pad * O * 4)

    out = pl.pallas_call(
        kernel,
        out_shape=jax.ShapeDtypeStruct((B_pad, O), jnp.float32),
        grid_spec=pltpu.PrefetchScalarGridSpec(
            num_scalar_prefetch=0,
            grid=(n_bt,),
            in_specs=[
                pl.BlockSpec((None, T * B_tile, H), lambda b: (b, 0, 0)),   # x tile
                pl.BlockSpec((L, H, 4 * H), lambda b: (0, 0, 0)),           # W_ih^T
                pl.BlockSpec((L, H, H), lambda b: (0, 0, 0)),               # W_lin^T
                pl.BlockSpec((L, H, 4 * H), lambda b: (0, 0, 0)),           # W_hh^T
                pl.BlockSpec((L, 1, 4 * H), lambda b: (0, 0, 0)),           # b_ih + b_hh
                pl.BlockSpec((L, 1, H), lambda b: (0, 0, 0)),               # b_lin
                pl.BlockSpec((H, O), lambda b: (0, 0)),                     # fc W^T
                pl.BlockSpec((1, O), lambda b: (0, 0)),                     # fc b
            ],
            out_specs=pl.BlockSpec((B_tile, O), lambda b: (b, 0)),
            scratch_shapes=[
                pltpu.VMEM((T * B_tile, H), compute_dtype),     # layer activations
                pltpu.VMEM((T * B_tile, 4 * H), jnp.float32),   # hoisted gate pre-activations
                pltpu.VMEM((T * B_tile, H), jnp.float32),       # hoisted residual Linear(x)
            ]),
        compiler_params=pltpu.CompilerParams(
            dimension_semantics=("parallel",),
            vmem_limit_bytes=vmem_limit),
        cost_estimate=pl.CostEstimate(flops=flops,
                                      transcendentals=transcendentals,
                                      bytes_accessed=bytes_accessed),
    )(x_blk, wg, wl, whh, bg, bl, fcw, fcb)
    return out[:B]


# ----------------------------------------------------------------------------
# Deterministic parameter init (PyTorch-style U(-1/sqrt(H), 1/sqrt(H))), stacked per layer
# ----------------------------------------------------------------------------
def init_params(key, hidden_size, output_size, num_layers):
    H, O = hidden_size, output_size
    bound = 1.0 / float(H) ** 0.5

    def unif(k, shape):
        return jax.random.uniform(k, shape, jnp.float32, -bound, bound)

    wg, wl, whh, bg, bl = [], [], [], [], []
    for _ in range(num_layers):
        key, k1, k2, k3, k4, k5, k6 = jax.random.split(key, 7)
        w_ih = unif(k1, (4 * H, H))       # nn.LSTM weight_ih
        w_hh = unif(k2, (4 * H, H))       # nn.LSTM weight_hh
        b_ih = unif(k3, (4 * H,))
        b_hh = unif(k4, (4 * H,))
        w_lin = unif(k5, (H, H))          # nn.Linear(H, H)
        b_lin = unif(k6, (H,))
        wg.append(w_ih.T)                                  # (H, 4H)
        whh.append(w_hh.T)                                 # (H, 4H)
        wl.append(w_lin.T)                                 # (H, H)
        bg.append((b_ih + b_hh).reshape(1, 4 * H))
        bl.append(b_lin.reshape(1, H))

    key, k1, k2 = jax.random.split(key, 3)
    fc_w = unif(k1, (O, H))               # nn.Linear(H, O)
    fc_b = unif(k2, (O,))
    return dict(w_gates=jnp.stack(wg), w_lin=jnp.stack(wl), w_hh=jnp.stack(whh),
                b_gates=jnp.stack(bg), b_lin=jnp.stack(bl),
                fcw=fc_w.T, fcb=fc_b.reshape(1, O))


# ----------------------------------------------------------------------------
# Pure-JAX reference (for correctness check)
# ----------------------------------------------------------------------------
def reference_forward(x_bth, params):
    x = x_bth.astype(jnp.float32)
    B, T, H = x.shape
    L = params["w_gates"].shape[0]
    for layer in range(L):
        wg = params["w_gates"][layer]     # (H, 4H)
        whh = params["w_hh"][layer]       # (H, 4H)
        wl = params["w_lin"][layer]       # (H, H)
        bg = params["b_gates"][layer]     # (1, 4H)
        bl = params["b_lin"][layer]       # (1, H)

        def step(carry, x_t, wg=wg, whh=whh, bg=bg):
            h, c = carry
            gates = x_t @ wg + h @ whh + bg
            i = jax.nn.sigmoid(gates[:, 0 * H:1 * H])
            f = jax.nn.sigmoid(gates[:, 1 * H:2 * H])
            g = jnp.tanh(gates[:, 2 * H:3 * H])
            o = jax.nn.sigmoid(gates[:, 3 * H:4 * H])
            c = f * c + i * g
            h = o * jnp.tanh(c)
            return (h, c), h

        x_tbh = jnp.transpose(x, (1, 0, 2))
        init = (jnp.zeros((B, H), jnp.float32), jnp.zeros((B, H), jnp.float32))
        _, outs = jax.lax.scan(step, init, x_tbh)             # (T, B, H)
        resid = x @ wl + bl
        x = jnp.transpose(outs, (1, 0, 2)) + resid
    return x[:, -1, :] @ params["fcw"] + params["fcb"]


# ----------------------------------------------------------------------------
if __name__ == "__main__":
    B, T = 2, 8
    HIDDEN, OUT, NUM_LAYERS = 32, 4, 2

    key = jax.random.PRNGKey(0)
    kx, kp = jax.random.split(key)
    x = jax.random.normal(kx, (B, T, HIDDEN), jnp.float32)
    params = init_params(kp, HIDDEN, OUT, NUM_LAYERS)

    y_ref = reference_forward(x, params)

    # f32 MXU operands: tight parity check vs the pure-JAX reference.
    y_f32 = jax.block_until_ready(
        lstm_decoder_forward(x, params, compute_dtype=jnp.float32))
    assert y_f32.shape == (B, OUT)
    assert jnp.allclose(y_f32, y_ref, atol=2e-4, rtol=2e-4), "f32 mismatch vs JAX reference"

    # Default path: bf16 MXU operands + bf16 inter-layer activations (gates/state stay f32).
    y_bf16 = jax.block_until_ready(lstm_decoder_forward(x, params))
    assert y_bf16.shape == (B, OUT)
    assert jnp.allclose(y_bf16, y_ref, atol=2e-1, rtol=2e-1), "bf16 mismatch vs JAX reference"

    print("KERNEL_OK")
</pallas_src>

<mosaic_0001>
module attributes {stable_mosaic.version = 11 : i64} {
  func.func @_lstm_decoder_fused_kernel(%arg0: i32, %arg1: memref<1x128x32xf32, #tpu.memory_space<vmem>>, %arg2: memref<2x32x128xf32, #tpu.memory_space<vmem>>, %arg3: memref<2x32x32xf32, #tpu.memory_space<vmem>>, %arg4: memref<2x32x128xf32, #tpu.memory_space<vmem>>, %arg5: memref<2x1x128xf32, #tpu.memory_space<vmem>>, %arg6: memref<2x1x32xf32, #tpu.memory_space<vmem>>, %arg7: memref<32x4xf32, #tpu.memory_space<vmem>>, %arg8: memref<1x4xf32, #tpu.memory_space<vmem>>, %arg9: memref<16x4xf32, #tpu.memory_space<vmem>>, %arg10: memref<128x32xf32, #tpu.memory_space<vmem>>, %arg11: memref<128x128xf32, #tpu.memory_space<vmem>>, %arg12: memref<128x32xf32, #tpu.memory_space<vmem>>) attributes {dimension_semantics = [#tpu.dimension_semantics<parallel>], iteration_bounds = array<i64: 1>, scalar_prefetch = 0 : i64, scratch_operands = 3 : i64, tpu.core_type = #tpu.core_type<tc>, window_params = [{transform_indices = @transform_0, window_bounds = array<i64: 1, 128, 32>}, {pipeline_mode = #tpu.pipeline_mode<synchronous>, transform_indices = @transform_1, window_bounds = array<i64: 2, 32, 128>}, {pipeline_mode = #tpu.pipeline_mode<synchronous>, transform_indices = @transform_2, window_bounds = array<i64: 2, 32, 32>}, {pipeline_mode = #tpu.pipeline_mode<synchronous>, transform_indices = @transform_3, window_bounds = array<i64: 2, 32, 128>}, {pipeline_mode = #tpu.pipeline_mode<synchronous>, transform_indices = @transform_4, window_bounds = array<i64: 2, 1, 128>}, {pipeline_mode = #tpu.pipeline_mode<synchronous>, transform_indices = @transform_5, window_bounds = array<i64: 2, 1, 32>}, {pipeline_mode = #tpu.pipeline_mode<synchronous>, transform_indices = @transform_6, window_bounds = array<i64: 32, 4>}, {pipeline_mode = #tpu.pipeline_mode<synchronous>, transform_indices = @transform_7, window_bounds = array<i64: 1, 4>}, {transform_indices = @transform_8, window_bounds = array<i64: 16, 4>}]} {
    %c0 = arith.constant 0 : index
    %c0_0 = arith.constant 0 : index
    %c0_1 = arith.constant 0 : index
    %0 = vector.load %arg2[%c0, %c0_0, %c0_1] : memref<2x32x128xf32, #tpu.memory_space<vmem>>, vector<1x32x128xf32>
    %1 = vector.shape_cast %0 : vector<1x32x128xf32> to vector<32x128xf32>
    %c0_2 = arith.constant 0 : index
    %c0_3 = arith.constant 0 : index
    %c0_4 = arith.constant 0 : index
    %2 = vector.load %arg3[%c0_2, %c0_3, %c0_4] : memref<2x32x32xf32, #tpu.memory_space<vmem>>, vector<1x32x32xf32>
    %3 = vector.shape_cast %2 : vector<1x32x32xf32> to vector<32x32xf32>
    %c0_5 = arith.constant 0 : index
    %c0_6 = arith.constant 0 : index
    %c0_7 = arith.constant 0 : index
    %4 = vector.load %arg4[%c0_5, %c0_6, %c0_7] : memref<2x32x128xf32, #tpu.memory_space<vmem>>, vector<1x32x128xf32>
    %5 = vector.shape_cast %4 : vector<1x32x128xf32> to vector<32x128xf32>
    %c0_8 = arith.constant 0 : index
    %c0_9 = arith.constant 0 : index
    %c0_10 = arith.constant 0 : index
    %6 = vector.load %arg1[%c0_8, %c0_9, %c0_10] : memref<1x128x32xf32, #tpu.memory_space<vmem>>, vector<1x128x32xf32>
    %7 = vector.shape_cast %6 : vector<1x128x32xf32> to vector<128x32xf32>
    %cst = arith.constant dense<0.000000e+00> : vector<128x128xf32>
    %8 = tpu.matmul %7, %1, %cst {dimension_numbers = #tpu.dot_dimension_numbers<[1], [0], [0], [1], [0, 0, 1, 1], [], []>} : vector<128x32xf32>, vector<32x128xf32>, vector<128x128xf32> -> vector<128x128xf32>
    %c0_11 = arith.constant 0 : index
    %c0_12 = arith.constant 0 : index
    %c0_13 = arith.constant 0 : index
    %9 = vector.load %arg5[%c0_11, %c0_12, %c0_13] : memref<2x1x128xf32, #tpu.memory_space<vmem>>, vector<1x1x128xf32>
    %10 = vector.shape_cast %9 : vector<1x1x128xf32> to vector<1x128xf32>
    %11 = vector.broadcast %10 : vector<1x128xf32> to vector<128x128xf32>
    %12 = arith.addf %8, %11 : vector<128x128xf32>
    %c0_14 = arith.constant 0 : index
    %c0_15 = arith.constant 0 : index
    %13 = vector.load %arg11[%c0_14, %c0_15] : memref<128x128xf32, #tpu.memory_space<vmem>>, vector<128x128xf32>
    tpu.vector_store %arg11[%c0_14, %c0_15], %12 {strides = array<i32>} : memref<128x128xf32, #tpu.memory_space<vmem>>, vector<128x128xf32>,
    %cst_16 = arith.constant dense<0.000000e+00> : vector<128x32xf32>
    %14 = tpu.matmul %7, %3, %cst_16 {dimension_numbers = #tpu.dot_dimension_numbers<[1], [0], [0], [1], [0, 0, 1, 1], [], []>} : vector<128x32xf32>, vector<32x32xf32>, vector<128x32xf32> -> vector<128x32xf32>
    %c0_17 = arith.constant 0 : index
    %c0_18 = arith.constant 0 : index
    %c0_19 = arith.constant 0 : index
    %15 = vector.load %arg6[%c0_17, %c0_18, %c0_19] : memref<2x1x32xf32, #tpu.memory_space<vmem>>, vector<1x1x32xf32>
    %16 = vector.shape_cast %15 : vector<1x1x32xf32> to vector<1x32xf32>
    %17 = vector.broadcast %16 : vector<1x32xf32> to vector<128x32xf32>
    %18 = arith.addf %14, %17 : vector<128x32xf32>
    %c0_20 = arith.constant 0 : index
    %c0_21 = arith.constant 0 : index
    %19 = vector.load %arg12[%c0_20, %c0_21] : memref<128x32xf32, #tpu.memory_space<vmem>>, vector<128x32xf32>
    tpu.vector_store %arg12[%c0_20, %c0_21], %18 {strides = array<i32>} : memref<128x32xf32, #tpu.memory_space<vmem>>, vector<128x32xf32>,
    %cst_22 = arith.constant 0.000000e+00 : f32
    %20 = vector.broadcast %cst_22 : f32 to vector<16x32xf32>
    %c0_i32 = arith.constant 0 : i32
    %c16_i32 = arith.constant 16 : i32
    %21 = arith.muli %c0_i32, %c16_i32 : i32
    %22 = tpu.assume_multiple %21, 16 : i32
    %23 = arith.index_cast %22 : i32 to index
    %c0_23 = arith.constant 0 : index
    %24 = vector.load %arg11[%23, %c0_23] : memref<128x128xf32, #tpu.memory_space<vmem>>, vector<16x128xf32>
    %cst_24 = arith.constant dense<0.000000e+00> : vector<16x128xf32>
    %25 = tpu.matmul %20, %5, %cst_24 {dimension_numbers = #tpu.dot_dimension_numbers<[1], [0], [0], [1], [0, 0, 1, 1], [], []>} : vector<16x32xf32>, vector<32x128xf32>, vector<16x128xf32> -> vector<16x128xf32>
    %26 = arith.addf %24, %25 : vector<16x128xf32>
    %27 = vector.extract_strided_slice %26 {offsets = [0, 0], sizes = [16, 32], strides = [1, 1]} : vector<16x128xf32> to vector<16x32xf32>
    %cst_25 = arith.constant 5.000000e-01 : f32
    %28 = vector.broadcast %cst_25 : f32 to vector<16x32xf32>
    %29 = arith.mulf %28, %27 : vector<16x32xf32>
    %30 = math.tanh %29 : vector<16x32xf32>
    %cst_26 = arith.constant 1.000000e+00 : f32
    %31 = vector.broadcast %cst_26 : f32 to vector<16x32xf32>
    %32 = arith.addf %30, %31 : vector<16x32xf32>
    %cst_27 = arith.constant 5.000000e-01 : f32
    %33 = vector.broadcast %cst_27 : f32 to vector<16x32xf32>
    %34 = arith.mulf %33, %32 : vector<16x32xf32>
    %35 = vector.extract_strided_slice %26 {offsets = [0, 32], sizes = [16, 32], strides = [1, 1]} : vector<16x128xf32> to vector<16x32xf32>
    %cst_28 = arith.constant 5.000000e-01 : f32
    %36 = vector.broadcast %cst_28 : f32 to vector<16x32xf32>
    %37 = arith.mulf %36, %35 : vector<16x32xf32>
    %38 = math.tanh %37 : vector<16x32xf32>
    %cst_29 = arith.constant 1.000000e+00 : f32
    %39 = vector.broadcast %cst_29 : f32 to vector<16x32xf32>
    %40 = arith.addf %38, %39 : vector<16x32xf32>
    %cst_30 = arith.constant 5.000000e-01 : f32
    %41 = vector.broadcast %cst_30 : f32 to vector<16x32xf32>
    %42 = arith.mulf %41, %40 : vector<16x32xf32>
    %43 = vector.extract_strided_slice %26 {offsets = [0, 64], sizes = [16, 32], strides = [1, 1]} : vector<16x128xf32> to vector<16x32xf32>
    %44 = math.tanh %43 : vector<16x32xf32>
    %45 = vector.extract_strided_slice %26 {offsets = [0, 96], sizes = [16, 32], strides = [1, 1]} : vector<16x128xf32> to vector<16x32xf32>
    %cst_31 = arith.constant 5.000000e-01 : f32
    %46 = vector.broadcast %cst_31 : f32 to vector<16x32xf32>
    %47 = arith.mulf %46, %45 : vector<16x32xf32>
    %48 = math.tanh %47 : vector<16x32xf32>
    %cst_32 = arith.constant 1.000000e+00 : f32
    %49 = vector.broadcast %cst_32 : f32 to vector<16x32xf32>
    %50 = arith.addf %48, %49 : vector<16x32xf32>
    %cst_33 = arith.constant 5.000000e-01 : f32
    %51 = vector.broadcast %cst_33 : f32 to vector<16x32xf32>
    %52 = arith.mulf %51, %50 : vector<16x32xf32>
    %53 = arith.mulf %42, %20 : vector<16x32xf32>
    %54 = arith.mulf %34, %44 : vector<16x32xf32>
    %55 = arith.addf %53, %54 : vector<16x32xf32>
    %56 = math.tanh %55 : vector<16x32xf32>
    %57 = arith.mulf %52, %56 : vector<16x32xf32>
    %58 = arith.index_cast %22 : i32 to index
    %c0_34 = arith.constant 0 : index
    %59 = vector.load %arg12[%58, %c0_34] : memref<128x32xf32, #tpu.memory_space<vmem>>, vector<16x32xf32>
    %60 = arith.addf %57, %59 : vector<16x32xf32>
    %61 = arith.index_cast %22 : i32 to index
    %c0_35 = arith.constant 0 : index
    %62 = vector.load %arg10[%61, %c0_35] : memref<128x32xf32, #tpu.memory_space<vmem>>, vector<16x32xf32>
    tpu.vector_store %arg10[%61, %c0_35], %60 {strides = array<i32>} : memref<128x32xf32, #tpu.memory_space<vmem>>, vector<16x32xf32>,
    %c1_i32 = arith.constant 1 : i32
    %c16_i32_36 = arith.constant 16 : i32
    %63 = arith.muli %c1_i32, %c16_i32_36 : i32
    %64 = tpu.assume_multiple %63, 16 : i32
    %65 = arith.index_cast %64 : i32 to index
    %c0_37 = arith.constant 0 : index
    %66 = vector.load %arg11[%65, %c0_37] : memref<128x128xf32, #tpu.memory_space<vmem>>, vector<16x128xf32>
    %cst_38 = arith.constant dense<0.000000e+00> : vector<16x128xf32>
    %67 = tpu.matmul %57, %5, %cst_38 {dimension_numbers = #tpu.dot_dimension_numbers<[1], [0], [0], [1], [0, 0, 1, 1], [], []>} : vector<16x32xf32>, vector<32x128xf32>, vector<16x128xf32> -> vector<16x128xf32>
    %68 = arith.addf %66, %67 : vector<16x128xf32>
    %69 = vector.extract_strided_slice %68 {offsets = [0, 0], sizes = [16, 32], strides = [1, 1]} : vector<16x128xf32> to vector<16x32xf32>
    %cst_39 = arith.constant 5.000000e-01 : f32
    %70 = vector.broadcast %cst_39 : f32 to vector<16x32xf32>
    %71 = arith.mulf %70, %69 : vector<16x32xf32>
    %72 = math.tanh %71 : vector<16x32xf32>
    %cst_40 = arith.constant 1.000000e+00 : f32
    %73 = vector.broadcast %cst_40 : f32 to vector<16x32xf32>
    %74 = arith.addf %72, %73 : vector<16x32xf32>
    %cst_41 = arith.constant 5.000000e-01 : f32
    %75 = vector.broadcast %cst_41 : f32 to vector<16x32xf32>
    %76 = arith.mulf %75, %74 : vector<16x32xf32>
    %77 = vector.extract_strided_slice %68 {offsets = [0, 32], sizes = [16, 32], strides = [1, 1]} : vector<16x128xf32> to vector<16x32xf32>
    %cst_42 = arith.constant 5.000000e-01 : f32
    %78 = vector.broadcast %cst_42 : f32 to vector<16x32xf32>
    %79 = arith.mulf %78, %77 : vector<16x32xf32>
    %80 = math.tanh %79 : vector<16x32xf32>
    %cst_43 = arith.constant 1.000000e+00 : f32
    %81 = vector.broadcast %cst_43 : f32 to vector<16x32xf32>
    %82 = arith.addf %80, %81 : vector<16x32xf32>
    %cst_44 = arith.constant 5.000000e-01 : f32
    %83 = vector.broadcast %cst_44 : f32 to vector<16x32xf32>
    %84 = arith.mulf %83, %82 : vector<16x32xf32>
    %85 = vector.extract_strided_slice %68 {offsets = [0, 64], sizes = [16, 32], strides = [1, 1]} : vector<16x128xf32> to vector<16x32xf32>
    %86 = math.tanh %85 : vector<16x32xf32>
    %87 = vector.extract_strided_slice %68 {offsets = [0, 96], sizes = [16, 32], strides = [1, 1]} : vector<16x128xf32> to vector<16x32xf32>
    %cst_45 = arith.constant 5.000000e-01 : f32
    %88 = vector.broadcast %cst_45 : f32 to vector<16x32xf32>
    %89 = arith.mulf %88, %87 : vector<16x32xf32>
    %90 = math.tanh %89 : vector<16x32xf32>
    %cst_46 = arith.constant 1.000000e+00 : f32
    %91 = vector.broadcast %cst_46 : f32 to vector<16x32xf32>
    %92 = arith.addf %90, %91 : vector<16x32xf32>
    %cst_47 = arith.constant 5.000000e-01 : f32
    %93 = vector.broadcast %cst_47 : f32 to vector<16x32xf32>
    %94 = arith.mulf %93, %92 : vector<16x32xf32>
    %95 = arith.mulf %84, %55 : vector<16x32xf32>
    %96 = arith.mulf %76, %86 : vector<16x32xf32>
    %97 = arith.addf %95, %96 : vector<16x32xf32>
    %98 = math.tanh %97 : vector<16x32xf32>
    %99 = arith.mulf %94, %98 : vector<16x32xf32>
    %100 = arith.index_cast %64 : i32 to index
    %c0_48 = arith.constant 0 : index
    %101 = vector.load %arg12[%100, %c0_48] : memref<128x32xf32, #tpu.memory_space<vmem>>, vector<16x32xf32>
    %102 = arith.addf %99, %101 : vector<16x32xf32>
    %103 = arith.index_cast %64 : i32 to index
    %c0_49 = arith.constant 0 : index
    %104 = vector.load %arg10[%103, %c0_49] : memref<128x32xf32, #tpu.memory_space<vmem>>, vector<16x32xf32>
    tpu.vector_store %arg10[%103, %c0_49], %102 {strides = array<i32>} : memref<128x32xf32, #tpu.memory_space<vmem>>, vector<16x32xf32>,
    %c2_i32 = arith.constant 2 : i32
    %c16_i32_50 = arith.constant 16 : i32
    %105 = arith.muli %c2_i32, %c16_i32_50 : i32
    %106 = tpu.assume_multiple %105, 16 : i32
    %107 = arith.index_cast %106 : i32 to index
    %c0_51 = arith.constant 0 : index
    %108 = vector.load %arg11[%107, %c0_51] : memref<128x128xf32, #tpu.memory_space<vmem>>, vector<16x128xf32>
    %cst_52 = arith.constant dense<0.000000e+00> : vector<16x128xf32>
    %109 = tpu.matmul %99, %5, %cst_52 {dimension_numbers = #tpu.dot_dimension_numbers<[1], [0], [0], [1], [0, 0, 1, 1], [], []>} : vector<16x32xf32>, vector<32x128xf32>, vector<16x128xf32> -> vector<16x128xf32>
    %110 = arith.addf %108, %109 : vector<16x128xf32>
    %111 = vector.extract_strided_slice %110 {offsets = [0, 0], sizes = [16, 32], strides = [1, 1]} : vector<16x128xf32> to vector<16x32xf32>
    %cst_53 = arith.constant 5.000000e-01 : f32
    %112 = vector.broadcast %cst_53 : f32 to vector<16x32xf32>
    %113 = arith.mulf %112, %111 : vector<16x32xf32>
    %114 = math.tanh %113 : vector<16x32xf32>
    %cst_54 = arith.constant 1.000000e+00 : f32
    %115 = vector.broadcast %cst_54 : f32 to vector<16x32xf32>
    %116 = arith.addf %114, %115 : vector<16x32xf32>
    %cst_55 = arith.constant 5.000000e-01 : f32
    %117 = vector.broadcast %cst_55 : f32 to vector<16x32xf32>
    %118 = arith.mulf %117, %116 : vector<16x32xf32>
    %119 = vector.extract_strided_slice %110 {offsets = [0, 32], sizes = [16, 32], strides = [1, 1]} : vector<16x128xf32> to vector<16x32xf32>
    %cst_56 = arith.constant 5.000000e-01 : f32
    %120 = vector.broadcast %cst_56 : f32 to vector<16x32xf32>
    %121 = arith.mulf %120, %119 : vector<16x32xf32>
    %122 = math.tanh %121 : vector<16x32xf32>
    %cst_57 = arith.constant 1.000000e+00 : f32
    %123 = vector.broadcast %cst_57 : f32 to vector<16x32xf32>
    %124 = arith.addf %122, %123 : vector<16x32xf32>
    %cst_58 = arith.constant 5.000000e-01 : f32
    %125 = vector.broadcast %cst_58 : f32 to vector<16x32xf32>
    %126 = arith.mulf %125, %124 : vector<16x32xf32>
    %127 = vector.extract_strided_slice %110 {offsets = [0, 64], sizes = [16, 32], strides = [1, 1]} : vector<16x128xf32> to vector<16x32xf32>
    %128 = math.tanh %127 : vector<16x32xf32>
    %129 = vector.extract_strided_slice %110 {offsets = [0, 96], sizes = [16, 32], strides = [1, 1]} : vector<16x128xf32> to vector<16x32xf32>
    %cst_59 = arith.constant 5.000000e-01 : f32
    %130 = vector.broadcast %cst_59 : f32 to vector<16x32xf32>
    %131 = arith.mulf %130, %129 : vector<16x32xf32>
    %132 = math.tanh %131 : vector<16x32xf32>
    %cst_60 = arith.constant 1.000000e+00 : f32
    %133 = vector.broadcast %cst_60 : f32 to vector<16x32xf32>
    %134 = arith.addf %132, %133 : vector<16x32xf32>
    %cst_61 = arith.constant 5.000000e-01 : f32
    %135 = vector.broadcast %cst_61 : f32 to vector<16x32xf32>
    %136 = arith.mulf %135, %134 : vector<16x32xf32>
    %137 = arith.mulf %126, %97 : vector<16x32xf32>
    %138 = arith.mulf %118, %128 : vector<16x32xf32>
    %139 = arith.addf %137, %138 : vector<16x32xf32>
    %140 = math.tanh %139 : vector<16x32xf32>
    %141 = arith.mulf %136, %140 : vector<16x32xf32>
    %142 = arith.index_cast %106 : i32 to index
    %c0_62 = arith.constant 0 : index
    %143 = vector.load %arg12[%142, %c0_62] : memref<128x32xf32, #tpu.memory_space<vmem>>, vector<16x32xf32>
    %144 = arith.addf %141, %143 : vector<16x32xf32>
    %145 = arith.index_cast %106 : i32 to index
    %c0_63 = arith.constant 0 : index
    %146 = vector.load %arg10[%145, %c0_63] : memref<128x32xf32, #tpu.memory_space<vmem>>, vector<16x32xf32>
    tpu.vector_store %arg10[%145, %c0_63], %144 {strides = array<i32>} : memref<128x32xf32, #tpu.memory_space<vmem>>, vector<16x32xf32>,
    %c3_i32 = arith.constant 3 : i32
    %c16_i32_64 = arith.constant 16 : i32
    %147 = arith.muli %c3_i32, %c16_i32_64 : i32
    %148 = tpu.assume_multiple %147, 16 : i32
    %149 = arith.index_cast %148 : i32 to index
    %c0_65 = arith.constant 0 : index
    %150 = vector.load %arg11[%149, %c0_65] : memref<128x128xf32, #tpu.memory_space<vmem>>, vector<16x128xf32>
    %cst_66 = arith.constant dense<0.000000e+00> : vector<16x128xf32>
    %151 = tpu.matmul %141, %5, %cst_66 {dimension_numbers = #tpu.dot_dimension_numbers<[1], [0], [0], [1], [0, 0, 1, 1], [], []>} : vector<16x32xf32>, vector<32x128xf32>, vector<16x128xf32> -> vector<16x128xf32>
    %152 = arith.addf %150, %151 : vector<16x128xf32>
    %153 = vector.extract_strided_slice %152 {offsets = [0, 0], sizes = [16, 32], strides = [1, 1]} : vector<16x128xf32> to vector<16x32xf32>
    %cst_67 = arith.constant 5.000000e-01 : f32
    %154 = vector.broadcast %cst_67 : f32 to vector<16x32xf32>
    %155 = arith.mulf %154, %153 : vector<16x32xf32>
    %156 = math.tanh %155 : vector<16x32xf32>
    %cst_68 = arith.constant 1.000000e+00 : f32
    %157 = vector.broadcast %cst_68 : f32 to vector<16x32xf32>
    %158 = arith.addf %156, %157 : vector<16x32xf32>
    %cst_69 = arith.constant 5.000000e-01 : f32
    %159 = vector.broadcast %cst_69 : f32 to vector<16x32xf32>
    %160 = arith.mulf %159, %158 : vector<16x32xf32>
    %161 = vector.extract_strided_slice %152 {offsets = [0, 32], sizes = [16, 32], strides = [1, 1]} : vector<16x128xf32> to vector<16x32xf32>
    %cst_70 = arith.constant 5.000000e-01 : f32
    %162 = vector.broadcast %cst_70 : f32 to vector<16x32xf32>
    %163 = arith.mulf %162, %161 : vector<16x32xf32>
    %164 = math.tanh %163 : vector<16x32xf32>
    %cst_71 = arith.constant 1.000000e+00 : f32
    %165 = vector.broadcast %cst_71 : f32 to vector<16x32xf32>
    %166 = arith.addf %164, %165 : vector<16x32xf32>
    %cst_72 = arith.constant 5.000000e-01 : f32
    %167 = vector.broadcast %cst_72 : f32 to vector<16x32xf32>
    %168 = arith.mulf %167, %166 : vector<16x32xf32>
    %169 = vector.extract_strided_slice %152 {offsets = [0, 64], sizes = [16, 32], strides = [1, 1]} : vector<16x128xf32> to vector<16x32xf32>
    %170 = math.tanh %169 : vector<16x32xf32>
    %171 = vector.extract_strided_slice %152 {offsets = [0, 96], sizes = [16, 32], strides = [1, 1]} : vector<16x128xf32> to vector<16x32xf32>
    %cst_73 = arith.constant 5.000000e-01 : f32
    %172 = vector.broadcast %cst_73 : f32 to vector<16x32xf32>
    %173 = arith.mulf %172, %171 : vector<16x32xf32>
    %174 = math.tanh %173 : vector<16x32xf32>
    %cst_74 = arith.constant 1.000000e+00 : f32
    %175 = vector.broadcast %cst_74 : f32 to vector<16x32xf32>
    %176 = arith.addf %174, %175 : vector<16x32xf32>
    %cst_75 = arith.constant 5.000000e-01 : f32
    %177 = vector.broadcast %cst_75 : f32 to vector<16x32xf32>
    %178 = arith.mulf %177, %176 : vector<16x32xf32>
    %179 = arith.mulf %168, %139 : vector<16x32xf32>
    %180 = arith.mulf %160, %170 : vector<16x32xf32>
    %181 = arith.addf %179, %180 : vector<16x32xf32>
    %182 = math.tanh %181 : vector<16x32xf32>
    %183 = arith.mulf %178, %182 : vector<16x32xf32>
    %184 = arith.index_cast %148 : i32 to index
    %c0_76 = arith.constant 0 : index
    %185 = vector.load %arg12[%184, %c0_76] : memref<128x32xf32, #tpu.memory_space<vmem>>, vector<16x32xf32>
    %186 = arith.addf %183, %185 : vector<16x32xf32>
    %187 = arith.index_cast %148 : i32 to index
    %c0_77 = arith.constant 0 : index
    %188 = vector.load %arg10[%187, %c0_77] : memref<128x32xf32, #tpu.memory_space<vmem>>, vector<16x32xf32>
    tpu.vector_store %arg10[%187, %c0_77], %186 {strides = array<i32>} : memref<128x32xf32, #tpu.memory_space<vmem>>, vector<16x32xf32>,
    %c4_i32 = arith.constant 4 : i32
    %c16_i32_78 = arith.constant 16 : i32
    %189 = arith.muli %c4_i32, %c16_i32_78 : i32
    %190 = tpu.assume_multiple %189, 16 : i32
    %191 = arith.index_cast %190 : i32 to index
    %c0_79 = arith.constant 0 : index
    %192 = vector.load %arg11[%191, %c0_79] : memref<128x128xf32, #tpu.memory_space<vmem>>, vector<16x128xf32>
    %cst_80 = arith.constant dense<0.000000e+00> : vector<16x128xf32>
    %193 = tpu.matmul %183, %5, %cst_80 {dimension_numbers = #tpu.dot_dimension_numbers<[1], [0], [0], [1], [0, 0, 1, 1], [], []>} : vector<16x32xf32>, vector<32x128xf32>, vector<16x128xf32> -> vector<16x128xf32>
    %194 = arith.addf %192, %193 : vector<16x128xf32>
    %195 = vector.extract_strided_slice %194 {offsets = [0, 0], sizes = [16, 32], strides = [1, 1]} : vector<16x128xf32> to vector<16x32xf32>
    %cst_81 = arith.constant 5.000000e-01 : f32
    %196 = vector.broadcast %cst_81 : f32 to vector<16x32xf32>
    %197 = arith.mulf %196, %195 : vector<16x32xf32>
    %198 = math.tanh %197 : vector<16x32xf32>
    %cst_82 = arith.constant 1.000000e+00 : f32
    %199 = vector.broadcast %cst_82 : f32 to vector<16x32xf32>
    %200 = arith.addf %198, %199 : vector<16x32xf32>
    %cst_83 = arith.constant 5.000000e-01 : f32
    %201 = vector.broadcast %cst_83 : f32 to vector<16x32xf32>
    %202 = arith.mulf %201, %200 : vector<16x32xf32>
    %203 = vector.extract_strided_slice %194 {offsets = [0, 32], sizes = [16, 32], strides = [1, 1]} : vector<16x128xf32> to vector<16x32xf32>
    %cst_84 = arith.constant 5.000000e-01 : f32
    %204 = vector.broadcast %cst_84 : f32 to vector<16x32xf32>
    %205 = arith.mulf %204, %203 : vector<16x32xf32>
    %206 = math.tanh %205 : vector<16x32xf32>
    %cst_85 = arith.constant 1.000000e+00 : f32
    %207 = vector.broadcast %cst_85 : f32 to vector<16x32xf32>
    %208 = arith.addf %206, %207 : vector<16x32xf32>
    %cst_86 = arith.constant 5.000000e-01 : f32
    %209 = vector.broadcast %cst_86 : f32 to vector<16x32xf32>
    %210 = arith.mulf %209, %208 : vector<16x32xf32>
    %211 = vector.extract_strided_slice %194 {offsets = [0, 64], sizes = [16, 32], strides = [1, 1]} : vector<16x128xf32> to vector<16x32xf32>
    %212 = math.tanh %211 : vector<16x32xf32>
    %213 = vector.extract_strided_slice %194 {offsets = [0, 96], sizes = [16, 32], strides = [1, 1]} : vector<16x128xf32> to vector<16x32xf32>
    %cst_87 = arith.constant 5.000000e-01 : f32
    %214 = vector.broadcast %cst_87 : f32 to vector<16x32xf32>
    %215 = arith.mulf %214, %213 : vector<16x32xf32>
    %216 = math.tanh %215 : vector<16x32xf32>
    %cst_88 = arith.constant 1.000000e+00 : f32
    %217 = vector.broadcast %cst_88 : f32 to vector<16x32xf32>
    %218 = arith.addf %216, %217 : vector<16x32xf32>
    %cst_89 = arith.constant 5.000000e-01 : f32
    %219 = vector.broadcast %cst_89 : f32 to vector<16x32xf32>
    %220 = arith.mulf %219, %218 : vector<16x32xf32>
    %221 = arith.mulf %210, %181 : vector<16x32xf32>
    %222 = arith.mulf %202, %212 : vector<16x32xf32>
    %223 = arith.addf %221, %222 : vector<16x32xf32>
    %224 = math.tanh %223 : vector<16x32xf32>
    %225 = arith.mulf %220, %224 : vector<16x32xf32>
    %226 = arith.index_cast %190 : i32 to index
    %c0_90 = arith.constant 0 : index
    %227 = vector.load %arg12[%226, %c0_90] : memref<128x32xf32, #tpu.memory_space<vmem>>, vector<16x32xf32>
    %228 = arith.addf %225, %227 : vector<16x32xf32>
    %229 = arith.index_cast %190 : i32 to index
    %c0_91 = arith.constant 0 : index
    %230 = vector.load %arg10[%229, %c0_91] : memref<128x32xf32, #tpu.memory_space<vmem>>, vector<16x32xf32>
    tpu.vector_store %arg10[%229, %c0_91], %228 {strides = array<i32>} : memref<128x32xf32, #tpu.memory_space<vmem>>, vector<16x32xf32>,
    %c5_i32 = arith.constant 5 : i32
    %c16_i32_92 = arith.constant 16 : i32
    %231 = arith.muli %c5_i32, %c16_i32_92 : i32
    %232 = tpu.assume_multiple %231, 16 : i32
    %233 = arith.index_cast %232 : i32 to index
    %c0_93 = arith.constant 0 : index
    %234 = vector.load %arg11[%233, %c0_93] : memref<128x128xf32, #tpu.memory_space<vmem>>, vector<16x128xf32>
    %cst_94 = arith.constant dense<0.000000e+00> : vector<16x128xf32>
    %235 = tpu.matmul %225, %5, %cst_94 {dimension_numbers = #tpu.dot_dimension_numbers<[1], [0], [0], [1], [0, 0, 1, 1], [], []>} : vector<16x32xf32>, vector<32x128xf32>, vector<16x128xf32> -> vector<16x128xf32>
    %236 = arith.addf %234, %235 : vector<16x128xf32>
    %237 = vector.extract_strided_slice %236 {offsets = [0, 0], sizes = [16, 32], strides = [1, 1]} : vector<16x128xf32> to vector<16x32xf32>
    %cst_95 = arith.constant 5.000000e-01 : f32
    %238 = vector.broadcast %cst_95 : f32 to vector<16x32xf32>
    %239 = arith.mulf %238, %237 : vector<16x32xf32>
    %240 = math.tanh %239 : vector<16x32xf32>
    %cst_96 = arith.constant 1.000000e+00 : f32
    %241 = vector.broadcast %cst_96 : f32 to vector<16x32xf32>
    %242 = arith.addf %240, %241 : vector<16x32xf32>
    %cst_97 = arith.constant 5.000000e-01 : f32
    %243 = vector.broadcast %cst_97 : f32 to vector<16x32xf32>
    %244 = arith.mulf %243, %242 : vector<16x32xf32>
    %245 = vector.extract_strided_slice %236 {offsets = [0, 32], sizes = [16, 32], strides = [1, 1]} : vector<16x128xf32> to vector<16x32xf32>
    %cst_98 = arith.constant 5.000000e-01 : f32
    %246 = vector.broadcast %cst_98 : f32 to vector<16x32xf32>
    %247 = arith.mulf %246, %245 : vector<16x32xf32>
    %248 = math.tanh %247 : vector<16x32xf32>
    %cst_99 = arith.constant 1.000000e+00 : f32
    %249 = vector.broadcast %cst_99 : f32 to vector<16x32xf32>
    %250 = arith.addf %248, %249 : vector<16x32xf32>
    %cst_100 = arith.constant 5.000000e-01 : f32
    %251 = vector.broadcast %cst_100 : f32 to vector<16x32xf32>
    %252 = arith.mulf %251, %250 : vector<16x32xf32>
    %253 = vector.extract_strided_slice %236 {offsets = [0, 64], sizes = [16, 32], strides = [1, 1]} : vector<16x128xf32> to vector<16x32xf32>
    %254 = math.tanh %253 : vector<16x32xf32>
    %255 = vector.extract_strided_slice %236 {offsets = [0, 96], sizes = [16, 32], strides = [1, 1]} : vector<16x128xf32> to vector<16x32xf32>
    %cst_101 = arith.constant 5.000000e-01 : f32
    %256 = vector.broadcast %cst_101 : f32 to vector<16x32xf32>
    %257 = arith.mulf %256, %255 : vector<16x32xf32>
    %258 = math.tanh %257 : vector<16x32xf32>
    %cst_102 = arith.constant 1.000000e+00 : f32
    %259 = vector.broadcast %cst_102 : f32 to vector<16x32xf32>
    %260 = arith.addf %258, %259 : vector<16x32xf32>
    %cst_103 = arith.constant 5.000000e-01 : f32
    %261 = vector.broadcast %cst_103 : f32 to vector<16x32xf32>
    %262 = arith.mulf %261, %260 : vector<16x32xf32>
    %263 = arith.mulf %252, %223 : vector<16x32xf32>
    %264 = arith.mulf %244, %254 : vector<16x32xf32>
    %265 = arith.addf %263, %264 : vector<16x32xf32>
    %266 = math.tanh %265 : vector<16x32xf32>
    %267 = arith.mulf %262, %266 : vector<16x32xf32>
    %268 = arith.index_cast %232 : i32 to index
    %c0_104 = arith.constant 0 : index
    %269 = vector.load %arg12[%268, %c0_104] : memref<128x32xf32, #tpu.memory_space<vmem>>, vector<16x32xf32>
    %270 = arith.addf %267, %269 : vector<16x32xf32>
    %271 = arith.index_cast %232 : i32 to index
    %c0_105 = arith.constant 0 : index
    %272 = vector.load %arg10[%271, %c0_105] : memref<128x32xf32, #tpu.memory_space<vmem>>, vector<16x32xf32>
    tpu.vector_store %arg10[%271, %c0_105], %270 {strides = array<i32>} : memref<128x32xf32, #tpu.memory_space<vmem>>, vector<16x32xf32>,
    %c6_i32 = arith.constant 6 : i32
    %c16_i32_106 = arith.constant 16 : i32
    %273 = arith.muli %c6_i32, %c16_i32_106 : i32
    %274 = tpu.assume_multiple %273, 16 : i32
    %275 = arith.index_cast %274 : i32 to index
    %c0_107 = arith.constant 0 : index
    %276 = vector.load %arg11[%275, %c0_107] : memref<128x128xf32, #tpu.memory_space<vmem>>, vector<16x128xf32>
    %cst_108 = arith.constant dense<0.000000e+00> : vector<16x128xf32>
    %277 = tpu.matmul %267, %5, %cst_108 {dimension_numbers = #tpu.dot_dimension_numbers<[1], [0], [0], [1], [0, 0, 1, 1], [], []>} : vector<16x32xf32>, vector<32x128xf32>, vector<16x128xf32> -> vector<16x128xf32>
    %278 = arith.addf %276, %277 : vector<16x128xf32>
    %279 = vector.extract_strided_slice %278 {offsets = [0, 0], sizes = [16, 32], strides = [1, 1]} : vector<16x128xf32> to vector<16x32xf32>
    %cst_109 = arith.constant 5.000000e-01 : f32
    %280 = vector.broadcast %cst_109 : f32 to vector<16x32xf32>
    %281 = arith.mulf %280, %279 : vector<16x32xf32>
    %282 = math.tanh %281 : vector<16x32xf32>
    %cst_110 = arith.constant 1.000000e+00 : f32
    %283 = vector.broadcast %cst_110 : f32 to vector<16x32xf32>
    %284 = arith.addf %282, %283 : vector<16x32xf32>
    %cst_111 = arith.constant 5.000000e-01 : f32
    %285 = vector.broadcast %cst_111 : f32 to vector<16x32xf32>
    %286 = arith.mulf %285, %284 : vector<16x32xf32>
    %287 = vector.extract_strided_slice %278 {offsets = [0, 32], sizes = [16, 32], strides = [1, 1]} : vector<16x128xf32> to vector<16x32xf32>
    %cst_112 = arith.constant 5.000000e-01 : f32
    %288 = vector.broadcast %cst_112 : f32 to vector<16x32xf32>
    %289 = arith.mulf %288, %287 : vector<16x32xf32>
    %290 = math.tanh %289 : vector<16x32xf32>
    %cst_113 = arith.constant 1.000000e+00 : f32
    %291 = vector.broadcast %cst_113 : f32 to vector<16x32xf32>
    %292 = arith.addf %290, %291 : vector<16x32xf32>
    %cst_114 = arith.constant 5.000000e-01 : f32
    %293 = vector.broadcast %cst_114 : f32 to vector<16x32xf32>
    %294 = arith.mulf %293, %292 : vector<16x32xf32>
    %295 = vector.extract_strided_slice %278 {offsets = [0, 64], sizes = [16, 32], strides = [1, 1]} : vector<16x128xf32> to vector<16x32xf32>
    %296 = math.tanh %295 : vector<16x32xf32>
    %297 = vector.extract_strided_slice %278 {offsets = [0, 96], sizes = [16, 32], strides = [1, 1]} : vector<16x128xf32> to vector<16x32xf32>
    %cst_115 = arith.constant 5.000000e-01 : f32
    %298 = vector.broadcast %cst_115 : f32 to vector<16x32xf32>
    %299 = arith.mulf %298, %297 : vector<16x32xf32>
    %300 = math.tanh %299 : vector<16x32xf32>
    %cst_116 = arith.constant 1.000000e+00 : f32
    %301 = vector.broadcast %cst_116 : f32 to vector<16x32xf32>
    %302 = arith.addf %300, %301 : vector<16x32xf32>
    %cst_117 = arith.constant 5.000000e-01 : f32
    %303 = vector.broadcast %cst_117 : f32 to vector<16x32xf32>
    %304 = arith.mulf %303, %302 : vector<16x32xf32>
    %305 = arith.mulf %294, %265 : vector<16x32xf32>
    %306 = arith.mulf %286, %296 : vector<16x32xf32>
    %307 = arith.addf %305, %306 : vector<16x32xf32>
    %308 = math.tanh %307 : vector<16x32xf32>
    %309 = arith.mulf %304, %308 : vector<16x32xf32>
    %310 = arith.index_cast %274 : i32 to index
    %c0_118 = arith.constant 0 : index
    %311 = vector.load %arg12[%310, %c0_118] : memref<128x32xf32, #tpu.memory_space<vmem>>, vector<16x32xf32>
    %312 = arith.addf %309, %311 : vector<16x32xf32>
    %313 = arith.index_cast %274 : i32 to index
    %c0_119 = arith.constant 0 : index
    %314 = vector.load %arg10[%313, %c0_119] : memref<128x32xf32, #tpu.memory_space<vmem>>, vector<16x32xf32>
    tpu.vector_store %arg10[%313, %c0_119], %312 {strides = array<i32>} : memref<128x32xf32, #tpu.memory_space<vmem>>, vector<16x32xf32>,
    %c7_i32 = arith.constant 7 : i32
    %c16_i32_120 = arith.constant 16 : i32
    %315 = arith.muli %c7_i32, %c16_i32_120 : i32
    %316 = tpu.assume_multiple %315, 16 : i32
    %317 = arith.index_cast %316 : i32 to index
    %c0_121 = arith.constant 0 : index
    %318 = vector.load %arg11[%317, %c0_121] : memref<128x128xf32, #tpu.memory_space<vmem>>, vector<16x128xf32>
    %cst_122 = arith.constant dense<0.000000e+00> : vector<16x128xf32>
    %319 = tpu.matmul %309, %5, %cst_122 {dimension_numbers = #tpu.dot_dimension_numbers<[1], [0], [0], [1], [0, 0, 1, 1], [], []>} : vector<16x32xf32>, vector<32x128xf32>, vector<16x128xf32> -> vector<16x128xf32>
    %320 = arith.addf %318, %319 : vector<16x128xf32>
    %321 = vector.extract_strided_slice %320 {offsets = [0, 0], sizes = [16, 32], strides = [1, 1]} : vector<16x128xf32> to vector<16x32xf32>
    %cst_123 = arith.constant 5.000000e-01 : f32
    %322 = vector.broadcast %cst_123 : f32 to vector<16x32xf32>
    %323 = arith.mulf %322, %321 : vector<16x32xf32>
    %324 = math.tanh %323 : vector<16x32xf32>
    %cst_124 = arith.constant 1.000000e+00 : f32
    %325 = vector.broadcast %cst_124 : f32 to vector<16x32xf32>
    %326 = arith.addf %324, %325 : vector<16x32xf32>
    %cst_125 = arith.constant 5.000000e-01 : f32
    %327 = vector.broadcast %cst_125 : f32 to vector<16x32xf32>
    %328 = arith.mulf %327, %326 : vector<16x32xf32>
    %329 = vector.extract_strided_slice %320 {offsets = [0, 32], sizes = [16, 32], strides = [1, 1]} : vector<16x128xf32> to vector<16x32xf32>
    %cst_126 = arith.constant 5.000000e-01 : f32
    %330 = vector.broadcast %cst_126 : f32 to vector<16x32xf32>
    %331 = arith.mulf %330, %329 : vector<16x32xf32>
    %332 = math.tanh %331 : vector<16x32xf32>
    %cst_127 = arith.constant 1.000000e+00 : f32
    %333 = vector.broadcast %cst_127 : f32 to vector<16x32xf32>
    %334 = arith.addf %332, %333 : vector<16x32xf32>
    %cst_128 = arith.constant 5.000000e-01 : f32
    %335 = vector.broadcast %cst_128 : f32 to vector<16x32xf32>
    %336 = arith.mulf %335, %334 : vector<16x32xf32>
    %337 = vector.extract_strided_slice %320 {offsets = [0, 64], sizes = [16, 32], strides = [1, 1]} : vector<16x128xf32> to vector<16x32xf32>
    %338 = math.tanh %337 : vector<16x32xf32>
    %339 = vector.extract_strided_slice %320 {offsets = [0, 96], sizes = [16, 32], strides = [1, 1]} : vector<16x128xf32> to vector<16x32xf32>
    %cst_129 = arith.constant 5.000000e-01 : f32
    %340 = vector.broadcast %cst_129 : f32 to vector<16x32xf32>
    %341 = arith.mulf %340, %339 : vector<16x32xf32>
    %342 = math.tanh %341 : vector<16x32xf32>
    %cst_130 = arith.constant 1.000000e+00 : f32
    %343 = vector.broadcast %cst_130 : f32 to vector<16x32xf32>
    %344 = arith.addf %342, %343 : vector<16x32xf32>
    %cst_131 = arith.constant 5.000000e-01 : f32
    %345 = vector.broadcast %cst_131 : f32 to vector<16x32xf32>
    %346 = arith.mulf %345, %344 : vector<16x32xf32>
    %347 = arith.mulf %336, %307 : vector<16x32xf32>
    %348 = arith.mulf %328, %338 : vector<16x32xf32>
    %349 = arith.addf %347, %348 : vector<16x32xf32>
    %350 = math.tanh %349 : vector<16x32xf32>
    %351 = arith.mulf %346, %350 : vector<16x32xf32>
    %352 = arith.index_cast %316 : i32 to index
    %c0_132 = arith.constant 0 : index
    %353 = vector.load %arg12[%352, %c0_132] : memref<128x32xf32, #tpu.memory_space<vmem>>, vector<16x32xf32>
    %354 = arith.addf %351, %353 : vector<16x32xf32>
    %355 = arith.index_cast %316 : i32 to index
    %c0_133 = arith.constant 0 : index
    %356 = vector.load %arg10[%355, %c0_133] : memref<128x32xf32, #tpu.memory_space<vmem>>, vector<16x32xf32>
    tpu.vector_store %arg10[%355, %c0_133], %354 {strides = array<i32>} : memref<128x32xf32, #tpu.memory_space<vmem>>, vector<16x32xf32>,
    %c8_i32 = arith.constant 8 : i32
    %c1 = arith.constant 1 : index
    %c0_134 = arith.constant 0 : index
    %c0_135 = arith.constant 0 : index
    %357 = vector.load %arg2[%c1, %c0_134, %c0_135] : memref<2x32x128xf32, #tpu.memory_space<vmem>>, vector<1x32x128xf32>
    %358 = vector.shape_cast %357 : vector<1x32x128xf32> to vector<32x128xf32>
    %c1_136 = arith.constant 1 : index
    %c0_137 = arith.constant 0 : index
    %c0_138 = arith.constant 0 : index
    %359 = vector.load %arg3[%c1_136, %c0_137, %c0_138] : memref<2x32x32xf32, #tpu.memory_space<vmem>>, vector<1x32x32xf32>
    %360 = vector.shape_cast %359 : vector<1x32x32xf32> to vector<32x32xf32>
    %c1_139 = arith.constant 1 : index
    %c0_140 = arith.constant 0 : index
    %c0_141 = arith.constant 0 : index
    %361 = vector.load %arg4[%c1_139, %c0_140, %c0_141] : memref<2x32x128xf32, #tpu.memory_space<vmem>>, vector<1x32x128xf32>
    %362 = vector.shape_cast %361 : vector<1x32x128xf32> to vector<32x128xf32>
    %c0_142 = arith.constant 0 : index
    %c0_143 = arith.constant 0 : index
    %363 = vector.load %arg10[%c0_142, %c0_143] : memref<128x32xf32, #tpu.memory_space<vmem>>, vector<128x32xf32>
    %cst_144 = arith.constant dense<0.000000e+00> : vector<128x128xf32>
    %364 = tpu.matmul %363, %358, %cst_144 {dimension_numbers = #tpu.dot_dimension_numbers<[1], [0], [0], [1], [0, 0, 1, 1], [], []>} : vector<128x32xf32>, vector<32x128xf32>, vector<128x128xf32> -> vector<128x128xf32>
    %c1_145 = arith.constant 1 : index
    %c0_146 = arith.constant 0 : index
    %c0_147 = arith.constant 0 : index
    %365 = vector.load %arg5[%c1_145, %c0_146, %c0_147] : memref<2x1x128xf32, #tpu.memory_space<vmem>>, vector<1x1x128xf32>
    %366 = vector.shape_cast %365 : vector<1x1x128xf32> to vector<1x128xf32>
    %367 = vector.broadcast %366 : vector<1x128xf32> to vector<128x128xf32>
    %368 = arith.addf %364, %367 : vector<128x128xf32>
    %c0_148 = arith.constant 0 : index
    %c0_149 = arith.constant 0 : index
    %369 = vector.load %arg11[%c0_148, %c0_149] : memref<128x128xf32, #tpu.memory_space<vmem>>, vector<128x128xf32>
    tpu.vector_store %arg11[%c0_148, %c0_149], %368 {strides = array<i32>} : memref<128x128xf32, #tpu.memory_space<vmem>>, vector<128x128xf32>,
    %cst_150 = arith.constant dense<0.000000e+00> : vector<128x32xf32>
    %370 = tpu.matmul %363, %360, %cst_150 {dimension_numbers = #tpu.dot_dimension_numbers<[1], [0], [0], [1], [0, 0, 1, 1], [], []>} : vector<128x32xf32>, vector<32x32xf32>, vector<128x32xf32> -> vector<128x32xf32>
    %c1_151 = arith.constant 1 : index
    %c0_152 = arith.constant 0 : index
    %c0_153 = arith.constant 0 : index
    %371 = vector.load %arg6[%c1_151, %c0_152, %c0_153] : memref<2x1x32xf32, #tpu.memory_space<vmem>>, vector<1x1x32xf32>
    %372 = vector.shape_cast %371 : vector<1x1x32xf32> to vector<1x32xf32>
    %373 = vector.broadcast %372 : vector<1x32xf32> to vector<128x32xf32>
    %374 = arith.addf %370, %373 : vector<128x32xf32>
    %c0_154 = arith.constant 0 : index
    %c0_155 = arith.constant 0 : index
    %375 = vector.load %arg12[%c0_154, %c0_155] : memref<128x32xf32, #tpu.memory_space<vmem>>, vector<128x32xf32>
    tpu.vector_store %arg12[%c0_154, %c0_155], %374 {strides = array<i32>} : memref<128x32xf32, #tpu.memory_space<vmem>>, vector<128x32xf32>,
    %cst_156 = arith.constant 0.000000e+00 : f32
    %376 = vector.broadcast %cst_156 : f32 to vector<16x32xf32>
    %c0_i32_157 = arith.constant 0 : i32
    %c16_i32_158 = arith.constant 16 : i32
    %377 = arith.muli %c0_i32_157, %c16_i32_158 : i32
    %378 = tpu.assume_multiple %377, 16 : i32
    %379 = arith.index_cast %378 : i32 to index
    %c0_159 = arith.constant 0 : index
    %380 = vector.load %arg11[%379, %c0_159] : memref<128x128xf32, #tpu.memory_space<vmem>>, vector<16x128xf32>
    %cst_160 = arith.constant dense<0.000000e+00> : vector<16x128xf32>
    %381 = tpu.matmul %376, %362, %cst_160 {dimension_numbers = #tpu.dot_dimension_numbers<[1], [0], [0], [1], [0, 0, 1, 1], [], []>} : vector<16x32xf32>, vector<32x128xf32>, vector<16x128xf32> -> vector<16x128xf32>
    %382 = arith.addf %380, %381 : vector<16x128xf32>
    %383 = vector.extract_strided_slice %382 {offsets = [0, 0], sizes = [16, 32], strides = [1, 1]} : vector<16x128xf32> to vector<16x32xf32>
    %cst_161 = arith.constant 5.000000e-01 : f32
    %384 = vector.broadcast %cst_161 : f32 to vector<16x32xf32>
    %385 = arith.mulf %384, %383 : vector<16x32xf32>
    %386 = math.tanh %385 : vector<16x32xf32>
    %cst_162 = arith.constant 1.000000e+00 : f32
    %387 = vector.broadcast %cst_162 : f32 to vector<16x32xf32>
    %388 = arith.addf %386, %387 : vector<16x32xf32>
    %cst_163 = arith.constant 5.000000e-01 : f32
    %389 = vector.broadcast %cst_163 : f32 to vector<16x32xf32>
    %390 = arith.mulf %389, %388 : vector<16x32xf32>
    %391 = vector.extract_strided_slice %382 {offsets = [0, 32], sizes = [16, 32], strides = [1, 1]} : vector<16x128xf32> to vector<16x32xf32>
    %cst_164 = arith.constant 5.000000e-01 : f32
    %392 = vector.broadcast %cst_164 : f32 to vector<16x32xf32>
    %393 = arith.mulf %392, %391 : vector<16x32xf32>
    %394 = math.tanh %393 : vector<16x32xf32>
    %cst_165 = arith.constant 1.000000e+00 : f32
    %395 = vector.broadcast %cst_165 : f32 to vector<16x32xf32>
    %396 = arith.addf %394, %395 : vector<16x32xf32>
    %cst_166 = arith.constant 5.000000e-01 : f32
    %397 = vector.broadcast %cst_166 : f32 to vector<16x32xf32>
    %398 = arith.mulf %397, %396 : vector<16x32xf32>
    %399 = vector.extract_strided_slice %382 {offsets = [0, 64], sizes = [16, 32], strides = [1, 1]} : vector<16x128xf32> to vector<16x32xf32>
    %400 = math.tanh %399 : vector<16x32xf32>
    %401 = vector.extract_strided_slice %382 {offsets = [0, 96], sizes = [16, 32], strides = [1, 1]} : vector<16x128xf32> to vector<16x32xf32>
    %cst_167 = arith.constant 5.000000e-01 : f32
    %402 = vector.broadcast %cst_167 : f32 to vector<16x32xf32>
    %403 = arith.mulf %402, %401 : vector<16x32xf32>
    %404 = math.tanh %403 : vector<16x32xf32>
    %cst_168 = arith.constant 1.000000e+00 : f32
    %405 = vector.broadcast %cst_168 : f32 to vector<16x32xf32>
    %406 = arith.addf %404, %405 : vector<16x32xf32>
    %cst_169 = arith.constant 5.000000e-01 : f32
    %407 = vector.broadcast %cst_169 : f32 to vector<16x32xf32>
    %408 = arith.mulf %407, %406 : vector<16x32xf32>
    %409 = arith.mulf %398, %376 : vector<16x32xf32>
    %410 = arith.mulf %390, %400 : vector<16x32xf32>
    %411 = arith.addf %409, %410 : vector<16x32xf32>
    %412 = math.tanh %411 : vector<16x32xf32>
    %413 = arith.mulf %408, %412 : vector<16x32xf32>
    %414 = arith.index_cast %378 : i32 to index
    %c0_170 = arith.constant 0 : index
    %415 = vector.load %arg12[%414, %c0_170] : memref<128x32xf32, #tpu.memory_space<vmem>>, vector<16x32xf32>
    %416 = arith.addf %413, %415 : vector<16x32xf32>
    %417 = arith.index_cast %378 : i32 to index
    %c0_171 = arith.constant 0 : index
    %418 = vector.load %arg10[%417, %c0_171] : memref<128x32xf32, #tpu.memory_space<vmem>>, vector<16x32xf32>
    tpu.vector_store %arg10[%417, %c0_171], %416 {strides = array<i32>} : memref<128x32xf32, #tpu.memory_space<vmem>>, vector<16x32xf32>,
    %c1_i32_172 = arith.constant 1 : i32
    %c16_i32_173 = arith.constant 16 : i32
    %419 = arith.muli %c1_i32_172, %c16_i32_173 : i32
    %420 = tpu.assume_multiple %419, 16 : i32
    %421 = arith.index_cast %420 : i32 to index
    %c0_174 = arith.constant 0 : index
    %422 = vector.load %arg11[%421, %c0_174] : memref<128x128xf32, #tpu.memory_space<vmem>>, vector<16x128xf32>
    %cst_175 = arith.constant dense<0.000000e+00> : vector<16x128xf32>
    %423 = tpu.matmul %413, %362, %cst_175 {dimension_numbers = #tpu.dot_dimension_numbers<[1], [0], [0], [1], [0, 0, 1, 1], [], []>} : vector<16x32xf32>, vector<32x128xf32>, vector<16x128xf32> -> vector<16x128xf32>
    %424 = arith.addf %422, %423 : vector<16x128xf32>
    %425 = vector.extract_strided_slice %424 {offsets = [0, 0], sizes = [16, 32], strides = [1, 1]} : vector<16x128xf32> to vector<16x32xf32>
    %cst_176 = arith.constant 5.000000e-01 : f32
    %426 = vector.broadcast %cst_176 : f32 to vector<16x32xf32>
    %427 = arith.mulf %426, %425 : vector<16x32xf32>
    %428 = math.tanh %427 : vector<16x32xf32>
    %cst_177 = arith.constant 1.000000e+00 : f32
    %429 = vector.broadcast %cst_177 : f32 to vector<16x32xf32>
    %430 = arith.addf %428, %429 : vector<16x32xf32>
    %cst_178 = arith.constant 5.000000e-01 : f32
    %431 = vector.broadcast %cst_178 : f32 to vector<16x32xf32>
    %432 = arith.mulf %431, %430 : vector<16x32xf32>
    %433 = vector.extract_strided_slice %424 {offsets = [0, 32], sizes = [16, 32], strides = [1, 1]} : vector<16x128xf32> to vector<16x32xf32>
    %cst_179 = arith.constant 5.000000e-01 : f32
    %434 = vector.broadcast %cst_179 : f32 to vector<16x32xf32>
    %435 = arith.mulf %434, %433 : vector<16x32xf32>
    %436 = math.tanh %435 : vector<16x32xf32>
    %cst_180 = arith.constant 1.000000e+00 : f32
    %437 = vector.broadcast %cst_180 : f32 to vector<16x32xf32>
    %438 = arith.addf %436, %437 : vector<16x32xf32>
    %cst_181 = arith.constant 5.000000e-01 : f32
    %439 = vector.broadcast %cst_181 : f32 to vector<16x32xf32>
    %440 = arith.mulf %439, %438 : vector<16x32xf32>
    %441 = vector.extract_strided_slice %424 {offsets = [0, 64], sizes = [16, 32], strides = [1, 1]} : vector<16x128xf32> to vector<16x32xf32>
    %442 = math.tanh %441 : vector<16x32xf32>
    %443 = vector.extract_strided_slice %424 {offsets = [0, 96], sizes = [16, 32], strides = [1, 1]} : vector<16x128xf32> to vector<16x32xf32>
    %cst_182 = arith.constant 5.000000e-01 : f32
    %444 = vector.broadcast %cst_182 : f32 to vector<16x32xf32>
    %445 = arith.mulf %444, %443 : vector<16x32xf32>
    %446 = math.tanh %445 : vector<16x32xf32>
    %cst_183 = arith.constant 1.000000e+00 : f32
    %447 = vector.broadcast %cst_183 : f32 to vector<16x32xf32>
    %448 = arith.addf %446, %447 : vector<16x32xf32>
    %cst_184 = arith.constant 5.000000e-01 : f32
    %449 = vector.broadcast %cst_184 : f32 to vector<16x32xf32>
    %450 = arith.mulf %449, %448 : vector<16x32xf32>
    %451 = arith.mulf %440, %411 : vector<16x32xf32>
    %452 = arith.mulf %432, %442 : vector<16x32xf32>
    %453 = arith.addf %451, %452 : vector<16x32xf32>
    %454 = math.tanh %453 : vector<16x32xf32>
    %455 = arith.mulf %450, %454 : vector<16x32xf32>
    %456 = arith.index_cast %420 : i32 to index
    %c0_185 = arith.constant 0 : index
    %457 = vector.load %arg12[%456, %c0_185] : memref<128x32xf32, #tpu.memory_space<vmem>>, vector<16x32xf32>
    %458 = arith.addf %455, %457 : vector<16x32xf32>
    %459 = arith.index_cast %420 : i32 to index
    %c0_186 = arith.constant 0 : index
    %460 = vector.load %arg10[%459, %c0_186] : memref<128x32xf32, #tpu.memory_space<vmem>>, vector<16x32xf32>
    tpu.vector_store %arg10[%459, %c0_186], %458 {strides = array<i32>} : memref<128x32xf32, #tpu.memory_space<vmem>>, vector<16x32xf32>,
    %c2_i32_187 = arith.constant 2 : i32
    %c16_i32_188 = arith.constant 16 : i32
    %461 = arith.muli %c2_i32_187, %c16_i32_188 : i32
    %462 = tpu.assume_multiple %461, 16 : i32
    %463 = arith.index_cast %462 : i32 to index
    %c0_189 = arith.constant 0 : index
    %464 = vector.load %arg11[%463, %c0_189] : memref<128x128xf32, #tpu.memory_space<vmem>>, vector<16x128xf32>
    %cst_190 = arith.constant dense<0.000000e+00> : vector<16x128xf32>
    %465 = tpu.matmul %455, %362, %cst_190 {dimension_numbers = #tpu.dot_dimension_numbers<[1], [0], [0], [1], [0, 0, 1, 1], [], []>} : vector<16x32xf32>, vector<32x128xf32>, vector<16x128xf32> -> vector<16x128xf32>
    %466 = arith.addf %464, %465 : vector<16x128xf32>
    %467 = vector.extract_strided_slice %466 {offsets = [0, 0], sizes = [16, 32], strides = [1, 1]} : vector<16x128xf32> to vector<16x32xf32>
    %cst_191 = arith.constant 5.000000e-01 : f32
    %468 = vector.broadcast %cst_191 : f32 to vector<16x32xf32>
    %469 = arith.mulf %468, %467 : vector<16x32xf32>
    %470 = math.tanh %469 : vector<16x32xf32>
    %cst_192 = arith.constant 1.000000e+00 : f32
    %471 = vector.broadcast %cst_192 : f32 to vector<16x32xf32>
    %472 = arith.addf %470, %471 : vector<16x32xf32>
    %cst_193 = arith.constant 5.000000e-01 : f32
    %473 = vector.broadcast %cst_193 : f32 to vector<16x32xf32>
    %474 = arith.mulf %473, %472 : vector<16x32xf32>
    %475 = vector.extract_strided_slice %466 {offsets = [0, 32], sizes = [16, 32], strides = [1, 1]} : vector<16x128xf32> to vector<16x32xf32>
    %cst_194 = arith.constant 5.000000e-01 : f32
    %476 = vector.broadcast %cst_194 : f32 to vector<16x32xf32>
    %477 = arith.mulf %476, %475 : vector<16x32xf32>
    %478 = math.tanh %477 : vector<16x32xf32>
    %cst_195 = arith.constant 1.000000e+00 : f32
    %479 = vector.broadcast %cst_195 : f32 to vector<16x32xf32>
    %480 = arith.addf %478, %479 : vector<16x32xf32>
    %cst_196 = arith.constant 5.000000e-01 : f32
    %481 = vector.broadcast %cst_196 : f32 to vector<16x32xf32>
    %482 = arith.mulf %481, %480 : vector<16x32xf32>
    %483 = vector.extract_strided_slice %466 {offsets = [0, 64], sizes = [16, 32], strides = [1, 1]} : vector<16x128xf32> to vector<16x32xf32>
    %484 = math.tanh %483 : vector<16x32xf32>
    %485 = vector.extract_strided_slice %466 {offsets = [0, 96], sizes = [16, 32], strides = [1, 1]} : vector<16x128xf32> to vector<16x32xf32>
    %cst_197 = arith.constant 5.000000e-01 : f32
    %486 = vector.broadcast %cst_197 : f32 to vector<16x32xf32>
    %487 = arith.mulf %486, %485 : vector<16x32xf32>
    %488 = math.tanh %487 : vector<16x32xf32>
    %cst_198 = arith.constant 1.000000e+00 : f32
    %489 = vector.broadcast %cst_198 : f32 to vector<16x32xf32>
    %490 = arith.addf %488, %489 : vector<16x32xf32>
    %cst_199 = arith.constant 5.000000e-01 : f32
    %491 = vector.broadcast %cst_199 : f32 to vector<16x32xf32>
    %492 = arith.mulf %491, %490 : vector<16x32xf32>
    %493 = arith.mulf %482, %453 : vector<16x32xf32>
    %494 = arith.mulf %474, %484 : vector<16x32xf32>
    %495 = arith.addf %493, %494 : vector<16x32xf32>
    %496 = math.tanh %495 : vector<16x32xf32>
    %497 = arith.mulf %492, %496 : vector<16x32xf32>
    %498 = arith.index_cast %462 : i32 to index
    %c0_200 = arith.constant 0 : index
    %499 = vector.load %arg12[%498, %c0_200] : memref<128x32xf32, #tpu.memory_space<vmem>>, vector<16x32xf32>
    %500 = arith.addf %497, %499 : vector<16x32xf32>
    %501 = arith.index_cast %462 : i32 to index
    %c0_201 = arith.constant 0 : index
    %502 = vector.load %arg10[%501, %c0_201] : memref<128x32xf32, #tpu.memory_space<vmem>>, vector<16x32xf32>
    tpu.vector_store %arg10[%501, %c0_201], %500 {strides = array<i32>} : memref<128x32xf32, #tpu.memory_space<vmem>>, vector<16x32xf32>,
    %c3_i32_202 = arith.constant 3 : i32
    %c16_i32_203 = arith.constant 16 : i32
    %503 = arith.muli %c3_i32_202, %c16_i32_203 : i32
    %504 = tpu.assume_multiple %503, 16 : i32
    %505 = arith.index_cast %504 : i32 to index
    %c0_204 = arith.constant 0 : index
    %506 = vector.load %arg11[%505, %c0_204] : memref<128x128xf32, #tpu.memory_space<vmem>>, vector<16x128xf32>
    %cst_205 = arith.constant dense<0.000000e+00> : vector<16x128xf32>
    %507 = tpu.matmul %497, %362, %cst_205 {dimension_numbers = #tpu.dot_dimension_numbers<[1], [0], [0], [1], [0, 0, 1, 1], [], []>} : vector<16x32xf32>, vector<32x128xf32>, vector<16x128xf32> -> vector<16x128xf32>
    %508 = arith.addf %506, %507 : vector<16x128xf32>
    %509 = vector.extract_strided_slice %508 {offsets = [0, 0], sizes = [16, 32], strides = [1, 1]} : vector<16x128xf32> to vector<16x32xf32>
    %cst_206 = arith.constant 5.000000e-01 : f32
    %510 = vector.broadcast %cst_206 : f32 to vector<16x32xf32>
    %511 = arith.mulf %510, %509 : vector<16x32xf32>
    %512 = math.tanh %511 : vector<16x32xf32>
    %cst_207 = arith.constant 1.000000e+00 : f32
    %513 = vector.broadcast %cst_207 : f32 to vector<16x32xf32>
    %514 = arith.addf %512, %513 : vector<16x32xf32>
    %cst_208 = arith.constant 5.000000e-01 : f32
    %515 = vector.broadcast %cst_208 : f32 to vector<16x32xf32>
    %516 = arith.mulf %515, %514 : vector<16x32xf32>
    %517 = vector.extract_strided_slice %508 {offsets = [0, 32], sizes = [16, 32], strides = [1, 1]} : vector<16x128xf32> to vector<16x32xf32>
    %cst_209 = arith.constant 5.000000e-01 : f32
    %518 = vector.broadcast %cst_209 : f32 to vector<16x32xf32>
    %519 = arith.mulf %518, %517 : vector<16x32xf32>
    %520 = math.tanh %519 : vector<16x32xf32>
    %cst_210 = arith.constant 1.000000e+00 : f32
    %521 = vector.broadcast %cst_210 : f32 to vector<16x32xf32>
    %522 = arith.addf %520, %521 : vector<16x32xf32>
    %cst_211 = arith.constant 5.000000e-01 : f32
    %523 = vector.broadcast %cst_211 : f32 to vector<16x32xf32>
    %524 = arith.mulf %523, %522 : vector<16x32xf32>
    %525 = vector.extract_strided_slice %508 {offsets = [0, 64], sizes = [16, 32], strides = [1, 1]} : vector<16x128xf32> to vector<16x32xf32>
    %526 = math.tanh %525 : vector<16x32xf32>
    %527 = vector.extract_strided_slice %508 {offsets = [0, 96], sizes = [16, 32], strides = [1, 1]} : vector<16x128xf32> to vector<16x32xf32>
    %cst_212 = arith.constant 5.000000e-01 : f32
    %528 = vector.broadcast %cst_212 : f32 to vector<16x32xf32>
    %529 = arith.mulf %528, %527 : vector<16x32xf32>
    %530 = math.tanh %529 : vector<16x32xf32>
    %cst_213 = arith.constant 1.000000e+00 : f32
    %531 = vector.broadcast %cst_213 : f32 to vector<16x32xf32>
    %532 = arith.addf %530, %531 : vector<16x32xf32>
    %cst_214 = arith.constant 5.000000e-01 : f32
    %533 = vector.broadcast %cst_214 : f32 to vector<16x32xf32>
    %534 = arith.mulf %533, %532 : vector<16x32xf32>
    %535 = arith.mulf %524, %495 : vector<16x32xf32>
    %536 = arith.mulf %516, %526 : vector<16x32xf32>
    %537 = arith.addf %535, %536 : vector<16x32xf32>
    %538 = math.tanh %537 : vector<16x32xf32>
    %539 = arith.mulf %534, %538 : vector<16x32xf32>
    %540 = arith.index_cast %504 : i32 to index
    %c0_215 = arith.constant 0 : index
    %541 = vector.load %arg12[%540, %c0_215] : memref<128x32xf32, #tpu.memory_space<vmem>>, vector<16x32xf32>
    %542 = arith.addf %539, %541 : vector<16x32xf32>
    %543 = arith.index_cast %504 : i32 to index
    %c0_216 = arith.constant 0 : index
    %544 = vector.load %arg10[%543, %c0_216] : memref<128x32xf32, #tpu.memory_space<vmem>>, vector<16x32xf32>
    tpu.vector_store %arg10[%543, %c0_216], %542 {strides = array<i32>} : memref<128x32xf32, #tpu.memory_space<vmem>>, vector<16x32xf32>,
    %c4_i32_217 = arith.constant 4 : i32
    %c16_i32_218 = arith.constant 16 : i32
    %545 = arith.muli %c4_i32_217, %c16_i32_218 : i32
    %546 = tpu.assume_multiple %545, 16 : i32
    %547 = arith.index_cast %546 : i32 to index
    %c0_219 = arith.constant 0 : index
    %548 = vector.load %arg11[%547, %c0_219] : memref<128x128xf32, #tpu.memory_space<vmem>>, vector<16x128xf32>
    %cst_220 = arith.constant dense<0.000000e+00> : vector<16x128xf32>
    %549 = tpu.matmul %539, %362, %cst_220 {dimension_numbers = #tpu.dot_dimension_numbers<[1], [0], [0], [1], [0, 0, 1, 1], [], []>} : vector<16x32xf32>, vector<32x128xf32>, vector<16x128xf32> -> vector<16x128xf32>
    %550 = arith.addf %548, %549 : vector<16x128xf32>
    %551 = vector.extract_strided_slice %550 {offsets = [0, 0], sizes = [16, 32], strides = [1, 1]} : vector<16x128xf32> to vector<16x32xf32>
    %cst_221 = arith.constant 5.000000e-01 : f32
    %552 = vector.broadcast %cst_221 : f32 to vector<16x32xf32>
    %553 = arith.mulf %552, %551 : vector<16x32xf32>
    %554 = math.tanh %553 : vector<16x32xf32>
    %cst_222 = arith.constant 1.000000e+00 : f32
    %555 = vector.broadcast %cst_222 : f32 to vector<16x32xf32>
    %556 = arith.addf %554, %555 : vector<16x32xf32>
    %cst_223 = arith.constant 5.000000e-01 : f32
    %557 = vector.broadcast %cst_223 : f32 to vector<16x32xf32>
    %558 = arith.mulf %557, %556 : vector<16x32xf32>
    %559 = vector.extract_strided_slice %550 {offsets = [0, 32], sizes = [16, 32], strides = [1, 1]} : vector<16x128xf32> to vector<16x32xf32>
    %cst_224 = arith.constant 5.000000e-01 : f32
    %560 = vector.broadcast %cst_224 : f32 to vector<16x32xf32>
    %561 = arith.mulf %560, %559 : vector<16x32xf32>
    %562 = math.tanh %561 : vector<16x32xf32>
    %cst_225 = arith.constant 1.000000e+00 : f32
    %563 = vector.broadcast %cst_225 : f32 to vector<16x32xf32>
    %564 = arith.addf %562, %563 : vector<16x32xf32>
    %cst_226 = arith.constant 5.000000e-01 : f32
    %565 = vector.broadcast %cst_226 : f32 to vector<16x32xf32>
    %566 = arith.mulf %565, %564 : vector<16x32xf32>
    %567 = vector.extract_strided_slice %550 {offsets = [0, 64], sizes = [16, 32], strides = [1, 1]} : vector<16x128xf32> to vector<16x32xf32>
    %568 = math.tanh %567 : vector<16x32xf32>
    %569 = vector.extract_strided_slice %550 {offsets = [0, 96], sizes = [16, 32], strides = [1, 1]} : vector<16x128xf32> to vector<16x32xf32>
    %cst_227 = arith.constant 5.000000e-01 : f32
    %570 = vector.broadcast %cst_227 : f32 to vector<16x32xf32>
    %571 = arith.mulf %570, %569 : vector<16x32xf32>
    %572 = math.tanh %571 : vector<16x32xf32>
    %cst_228 = arith.constant 1.000000e+00 : f32
    %573 = vector.broadcast %cst_228 : f32 to vector<16x32xf32>
    %574 = arith.addf %572, %573 : vector<16x32xf32>
    %cst_229 = arith.constant 5.000000e-01 : f32
    %575 = vector.broadcast %cst_229 : f32 to vector<16x32xf32>
    %576 = arith.mulf %575, %574 : vector<16x32xf32>
    %577 = arith.mulf %566, %537 : vector<16x32xf32>
    %578 = arith.mulf %558, %568 : vector<16x32xf32>
    %579 = arith.addf %577, %578 : vector<16x32xf32>
    %580 = math.tanh %579 : vector<16x32xf32>
    %581 = arith.mulf %576, %580 : vector<16x32xf32>
    %582 = arith.index_cast %546 : i32 to index
    %c0_230 = arith.constant 0 : index
    %583 = vector.load %arg12[%582, %c0_230] : memref<128x32xf32, #tpu.memory_space<vmem>>, vector<16x32xf32>
    %584 = arith.addf %581, %583 : vector<16x32xf32>
    %585 = arith.index_cast %546 : i32 to index
    %c0_231 = arith.constant 0 : index
    %586 = vector.load %arg10[%585, %c0_231] : memref<128x32xf32, #tpu.memory_space<vmem>>, vector<16x32xf32>
    tpu.vector_store %arg10[%585, %c0_231], %584 {strides = array<i32>} : memref<128x32xf32, #tpu.memory_space<vmem>>, vector<16x32xf32>,
    %c5_i32_232 = arith.constant 5 : i32
    %c16_i32_233 = arith.constant 16 : i32
    %587 = arith.muli %c5_i32_232, %c16_i32_233 : i32
    %588 = tpu.assume_multiple %587, 16 : i32
    %589 = arith.index_cast %588 : i32 to index
    %c0_234 = arith.constant 0 : index
    %590 = vector.load %arg11[%589, %c0_234] : memref<128x128xf32, #tpu.memory_space<vmem>>, vector<16x128xf32>
    %cst_235 = arith.constant dense<0.000000e+00> : vector<16x128xf32>
    %591 = tpu.matmul %581, %362, %cst_235 {dimension_numbers = #tpu.dot_dimension_numbers<[1], [0], [0], [1], [0, 0, 1, 1], [], []>} : vector<16x32xf32>, vector<32x128xf32>, vector<16x128xf32> -> vector<16x128xf32>
    %592 = arith.addf %590, %591 : vector<16x128xf32>
    %593 = vector.extract_strided_slice %592 {offsets = [0, 0], sizes = [16, 32], strides = [1, 1]} : vector<16x128xf32> to vector<16x32xf32>
    %cst_236 = arith.constant 5.000000e-01 : f32
    %594 = vector.broadcast %cst_236 : f32 to vector<16x32xf32>
    %595 = arith.mulf %594, %593 : vector<16x32xf32>
    %596 = math.tanh %595 : vector<16x32xf32>
    %cst_237 = arith.constant 1.000000e+00 : f32
    %597 = vector.broadcast %cst_237 : f32 to vector<16x32xf32>
    %598 = arith.addf %596, %597 : vector<16x32xf32>
    %cst_238 = arith.constant 5.000000e-01 : f32
    %599 = vector.broadcast %cst_238 : f32 to vector<16x32xf32>
    %600 = arith.mulf %599, %598 : vector<16x32xf32>
    %601 = vector.extract_strided_slice %592 {offsets = [0, 32], sizes = [16, 32], strides = [1, 1]} : vector<16x128xf32> to vector<16x32xf32>
    %cst_239 = arith.constant 5.000000e-01 : f32
    %602 = vector.broadcast %cst_239 : f32 to vector<16x32xf32>
    %603 = arith.mulf %602, %601 : vector<16x32xf32>
    %604 = math.tanh %603 : vector<16x32xf32>
    %cst_240 = arith.constant 1.000000e+00 : f32
    %605 = vector.broadcast %cst_240 : f32 to vector<16x32xf32>
    %606 = arith.addf %604, %605 : vector<16x32xf32>
    %cst_241 = arith.constant 5.000000e-01 : f32
    %607 = vector.broadcast %cst_241 : f32 to vector<16x32xf32>
    %608 = arith.mulf %607, %606 : vector<16x32xf32>
    %609 = vector.extract_strided_slice %592 {offsets = [0, 64], sizes = [16, 32], strides = [1, 1]} : vector<16x128xf32> to vector<16x32xf32>
    %610 = math.tanh %609 : vector<16x32xf32>
    %611 = vector.extract_strided_slice %592 {offsets = [0, 96], sizes = [16, 32], strides = [1, 1]} : vector<16x128xf32> to vector<16x32xf32>
    %cst_242 = arith.constant 5.000000e-01 : f32
    %612 = vector.broadcast %cst_242 : f32 to vector<16x32xf32>
    %613 = arith.mulf %612, %611 : vector<16x32xf32>
    %614 = math.tanh %613 : vector<16x32xf32>
    %cst_243 = arith.constant 1.000000e+00 : f32
    %615 = vector.broadcast %cst_243 : f32 to vector<16x32xf32>
    %616 = arith.addf %614, %615 : vector<16x32xf32>
    %cst_244 = arith.constant 5.000000e-01 : f32
    %617 = vector.broadcast %cst_244 : f32 to vector<16x32xf32>
    %618 = arith.mulf %617, %616 : vector<16x32xf32>
    %619 = arith.mulf %608, %579 : vector<16x32xf32>
    %620 = arith.mulf %600, %610 : vector<16x32xf32>
    %621 = arith.addf %619, %620 : vector<16x32xf32>
    %622 = math.tanh %621 : vector<16x32xf32>
    %623 = arith.mulf %618, %622 : vector<16x32xf32>
    %624 = arith.index_cast %588 : i32 to index
    %c0_245 = arith.constant 0 : index
    %625 = vector.load %arg12[%624, %c0_245] : memref<128x32xf32, #tpu.memory_space<vmem>>, vector<16x32xf32>
    %626 = arith.addf %623, %625 : vector<16x32xf32>
    %627 = arith.index_cast %588 : i32 to index
    %c0_246 = arith.constant 0 : index
    %628 = vector.load %arg10[%627, %c0_246] : memref<128x32xf32, #tpu.memory_space<vmem>>, vector<16x32xf32>
    tpu.vector_store %arg10[%627, %c0_246], %626 {strides = array<i32>} : memref<128x32xf32, #tpu.memory_space<vmem>>, vector<16x32xf32>,
    %c6_i32_247 = arith.constant 6 : i32
    %c16_i32_248 = arith.constant 16 : i32
    %629 = arith.muli %c6_i32_247, %c16_i32_248 : i32
    %630 = tpu.assume_multiple %629, 16 : i32
    %631 = arith.index_cast %630 : i32 to index
    %c0_249 = arith.constant 0 : index
    %632 = vector.load %arg11[%631, %c0_249] : memref<128x128xf32, #tpu.memory_space<vmem>>, vector<16x128xf32>
    %cst_250 = arith.constant dense<0.000000e+00> : vector<16x128xf32>
    %633 = tpu.matmul %623, %362, %cst_250 {dimension_numbers = #tpu.dot_dimension_numbers<[1], [0], [0], [1], [0, 0, 1, 1], [], []>} : vector<16x32xf32>, vector<32x128xf32>, vector<16x128xf32> -> vector<16x128xf32>
    %634 = arith.addf %632, %633 : vector<16x128xf32>
    %635 = vector.extract_strided_slice %634 {offsets = [0, 0], sizes = [16, 32], strides = [1, 1]} : vector<16x128xf32> to vector<16x32xf32>
    %cst_251 = arith.constant 5.000000e-01 : f32
    %636 = vector.broadcast %cst_251 : f32 to vector<16x32xf32>
    %637 = arith.mulf %636, %635 : vector<16x32xf32>
    %638 = math.tanh %637 : vector<16x32xf32>
    %cst_252 = arith.constant 1.000000e+00 : f32
    %639 = vector.broadcast %cst_252 : f32 to vector<16x32xf32>
    %640 = arith.addf %638, %639 : vector<16x32xf32>
    %cst_253 = arith.constant 5.000000e-01 : f32
    %641 = vector.broadcast %cst_253 : f32 to vector<16x32xf32>
    %642 = arith.mulf %641, %640 : vector<16x32xf32>
    %643 = vector.extract_strided_slice %634 {offsets = [0, 32], sizes = [16, 32], strides = [1, 1]} : vector<16x128xf32> to vector<16x32xf32>
    %cst_254 = arith.constant 5.000000e-01 : f32
    %644 = vector.broadcast %cst_254 : f32 to vector<16x32xf32>
    %645 = arith.mulf %644, %643 : vector<16x32xf32>
    %646 = math.tanh %645 : vector<16x32xf32>
    %cst_255 = arith.constant 1.000000e+00 : f32
    %647 = vector.broadcast %cst_255 : f32 to vector<16x32xf32>
    %648 = arith.addf %646, %647 : vector<16x32xf32>
    %cst_256 = arith.constant 5.000000e-01 : f32
    %649 = vector.broadcast %cst_256 : f32 to vector<16x32xf32>
    %650 = arith.mulf %649, %648 : vector<16x32xf32>
    %651 = vector.extract_strided_slice %634 {offsets = [0, 64], sizes = [16, 32], strides = [1, 1]} : vector<16x128xf32> to vector<16x32xf32>
    %652 = math.tanh %651 : vector<16x32xf32>
    %653 = vector.extract_strided_slice %634 {offsets = [0, 96], sizes = [16, 32], strides = [1, 1]} : vector<16x128xf32> to vector<16x32xf32>
    %cst_257 = arith.constant 5.000000e-01 : f32
    %654 = vector.broadcast %cst_257 : f32 to vector<16x32xf32>
    %655 = arith.mulf %654, %653 : vector<16x32xf32>
    %656 = math.tanh %655 : vector<16x32xf32>
    %cst_258 = arith.constant 1.000000e+00 : f32
    %657 = vector.broadcast %cst_258 : f32 to vector<16x32xf32>
    %658 = arith.addf %656, %657 : vector<16x32xf32>
    %cst_259 = arith.constant 5.000000e-01 : f32
    %659 = vector.broadcast %cst_259 : f32 to vector<16x32xf32>
    %660 = arith.mulf %659, %658 : vector<16x32xf32>
    %661 = arith.mulf %650, %621 : vector<16x32xf32>
    %662 = arith.mulf %642, %652 : vector<16x32xf32>
    %663 = arith.addf %661, %662 : vector<16x32xf32>
    %664 = math.tanh %663 : vector<16x32xf32>
    %665 = arith.mulf %660, %664 : vector<16x32xf32>
    %666 = arith.index_cast %630 : i32 to index
    %c0_260 = arith.constant 0 : index
    %667 = vector.load %arg12[%666, %c0_260] : memref<128x32xf32, #tpu.memory_space<vmem>>, vector<16x32xf32>
    %668 = arith.addf %665, %667 : vector<16x32xf32>
    %669 = arith.index_cast %630 : i32 to index
    %c0_261 = arith.constant 0 : index
    %670 = vector.load %arg10[%669, %c0_261] : memref<128x32xf32, #tpu.memory_space<vmem>>, vector<16x32xf32>
    tpu.vector_store %arg10[%669, %c0_261], %668 {strides = array<i32>} : memref<128x32xf32, #tpu.memory_space<vmem>>, vector<16x32xf32>,
    %c7_i32_262 = arith.constant 7 : i32
    %c16_i32_263 = arith.constant 16 : i32
    %671 = arith.muli %c7_i32_262, %c16_i32_263 : i32
    %672 = tpu.assume_multiple %671, 16 : i32
    %673 = arith.index_cast %672 : i32 to index
    %c0_264 = arith.constant 0 : index
    %674 = vector.load %arg11[%673, %c0_264] : memref<128x128xf32, #tpu.memory_space<vmem>>, vector<16x128xf32>
    %cst_265 = arith.constant dense<0.000000e+00> : vector<16x128xf32>
    %675 = tpu.matmul %665, %362, %cst_265 {dimension_numbers = #tpu.dot_dimension_numbers<[1], [0], [0], [1], [0, 0, 1, 1], [], []>} : vector<16x32xf32>, vector<32x128xf32>, vector<16x128xf32> -> vector<16x128xf32>
    %676 = arith.addf %674, %675 : vector<16x128xf32>
    %677 = vector.extract_strided_slice %676 {offsets = [0, 0], sizes = [16, 32], strides = [1, 1]} : vector<16x128xf32> to vector<16x32xf32>
    %cst_266 = arith.constant 5.000000e-01 : f32
    %678 = vector.broadcast %cst_266 : f32 to vector<16x32xf32>
    %679 = arith.mulf %678, %677 : vector<16x32xf32>
    %680 = math.tanh %679 : vector<16x32xf32>
    %cst_267 = arith.constant 1.000000e+00 : f32
    %681 = vector.broadcast %cst_267 : f32 to vector<16x32xf32>
    %682 = arith.addf %680, %681 : vector<16x32xf32>
    %cst_268 = arith.constant 5.000000e-01 : f32
    %683 = vector.broadcast %cst_268 : f32 to vector<16x32xf32>
    %684 = arith.mulf %683, %682 : vector<16x32xf32>
    %685 = vector.extract_strided_slice %676 {offsets = [0, 32], sizes = [16, 32], strides = [1, 1]} : vector<16x128xf32> to vector<16x32xf32>
    %cst_269 = arith.constant 5.000000e-01 : f32
    %686 = vector.broadcast %cst_269 : f32 to vector<16x32xf32>
    %687 = arith.mulf %686, %685 : vector<16x32xf32>
    %688 = math.tanh %687 : vector<16x32xf32>
    %cst_270 = arith.constant 1.000000e+00 : f32
    %689 = vector.broadcast %cst_270 : f32 to vector<16x32xf32>
    %690 = arith.addf %688, %689 : vector<16x32xf32>
    %cst_271 = arith.constant 5.000000e-01 : f32
    %691 = vector.broadcast %cst_271 : f32 to vector<16x32xf32>
    %692 = arith.mulf %691, %690 : vector<16x32xf32>
    %693 = vector.extract_strided_slice %676 {offsets = [0, 64], sizes = [16, 32], strides = [1, 1]} : vector<16x128xf32> to vector<16x32xf32>
    %694 = math.tanh %693 : vector<16x32xf32>
    %695 = vector.extract_strided_slice %676 {offsets = [0, 96], sizes = [16, 32], strides = [1, 1]} : vector<16x128xf32> to vector<16x32xf32>
    %cst_272 = arith.constant 5.000000e-01 : f32
    %696 = vector.broadcast %cst_272 : f32 to vector<16x32xf32>
    %697 = arith.mulf %696, %695 : vector<16x32xf32>
    %698 = math.tanh %697 : vector<16x32xf32>
    %cst_273 = arith.constant 1.000000e+00 : f32
    %699 = vector.broadcast %cst_273 : f32 to vector<16x32xf32>
    %700 = arith.addf %698, %699 : vector<16x32xf32>
    %cst_274 = arith.constant 5.000000e-01 : f32
    %701 = vector.broadcast %cst_274 : f32 to vector<16x32xf32>
    %702 = arith.mulf %701, %700 : vector<16x32xf32>
    %703 = arith.mulf %692, %663 : vector<16x32xf32>
    %704 = arith.mulf %684, %694 : vector<16x32xf32>
    %705 = arith.addf %703, %704 : vector<16x32xf32>
    %706 = math.tanh %705 : vector<16x32xf32>
    %707 = arith.mulf %702, %706 : vector<16x32xf32>
    %708 = arith.index_cast %672 : i32 to index
    %c0_275 = arith.constant 0 : index
    %709 = vector.load %arg12[%708, %c0_275] : memref<128x32xf32, #tpu.memory_space<vmem>>, vector<16x32xf32>
    %710 = arith.addf %707, %709 : vector<16x32xf32>
    %711 = arith.index_cast %672 : i32 to index
    %c0_276 = arith.constant 0 : index
    %712 = vector.load %arg10[%711, %c0_276] : memref<128x32xf32, #tpu.memory_space<vmem>>, vector<16x32xf32>
    tpu.vector_store %arg10[%711, %c0_276], %710 {strides = array<i32>} : memref<128x32xf32, #tpu.memory_space<vmem>>, vector<16x32xf32>,
    %c8_i32_277 = arith.constant 8 : i32
    %c112 = arith.constant 112 : index
    %c0_278 = arith.constant 0 : index
    %713 = vector.load %arg10[%c112, %c0_278] : memref<128x32xf32, #tpu.memory_space<vmem>>, vector<16x32xf32>
    %c0_279 = arith.constant 0 : index
    %c0_280 = arith.constant 0 : index
    %714 = vector.load %arg7[%c0_279, %c0_280] : memref<32x4xf32, #tpu.memory_space<vmem>>, vector<32x4xf32>
    %cst_281 = arith.constant dense<0.000000e+00> : vector<16x4xf32>
    %715 = tpu.matmul %713, %714, %cst_281 {dimension_numbers = #tpu.dot_dimension_numbers<[1], [0], [0], [1], [0, 0, 1, 1], [], []>} : vector<16x32xf32>, vector<32x4xf32>, vector<16x4xf32> -> vector<16x4xf32>
    %c0_282 = arith.constant 0 : index
    %c0_283 = arith.constant 0 : index
    %716 = vector.load %arg8[%c0_282, %c0_283] : memref<1x4xf32, #tpu.memory_space<vmem>>, vector<1x4xf32>
    %717 = vector.broadcast %716 : vector<1x4xf32> to vector<16x4xf32>
    %718 = arith.addf %715, %717 : vector<16x4xf32>
    %c0_284 = arith.constant 0 : index
    %c0_285 = arith.constant 0 : index
    %719 = vector.load %arg9[%c0_284, %c0_285] : memref<16x4xf32, #tpu.memory_space<vmem>>, vector<16x4xf32>
    tpu.vector_store %arg9[%c0_284, %c0_285], %718 {strides = array<i32>} : memref<16x4xf32, #tpu.memory_space<vmem>>, vector<16x4xf32>,
    return
  }
  func.func @transform_0(%arg0: i32) -> (i32, i32, i32) {
    %c0_i32 = arith.constant 0 : i32
    %c0_i32_0 = arith.constant 0 : i32
    %c0_i32_1 = arith.constant 0 : i32
    return %arg0, %c0_i32, %c0_i32_0 : i32, i32, i32
  }
  func.func @transform_1(%arg0: i32) -> (i32, i32, i32) {
    %c0_i32 = arith.constant 0 : i32
    %c0_i32_0 = arith.constant 0 : i32
    %c0_i32_1 = arith.constant 0 : i32
    %c0_i32_2 = arith.constant 0 : i32
    return %c0_i32, %c0_i32_0, %c0_i32_1 : i32, i32, i32
  }
  func.func @transform_2(%arg0: i32) -> (i32, i32, i32) {
    %c0_i32 = arith.constant 0 : i32
    %c0_i32_0 = arith.constant 0 : i32
    %c0_i32_1 = arith.constant 0 : i32
    %c0_i32_2 = arith.constant 0 : i32
    return %c0_i32, %c0_i32_0, %c0_i32_1 : i32, i32, i32
  }
  func.func @transform_3(%arg0: i32) -> (i32, i32, i32) {
    %c0_i32 = arith.constant 0 : i32
    %c0_i32_0 = arith.constant 0 : i32
    %c0_i32_1 = arith.constant 0 : i32
    %c0_i32_2 = arith.constant 0 : i32
    return %c0_i32, %c0_i32_0, %c0_i32_1 : i32, i32, i32
  }
  func.func @transform_4(%arg0: i32) -> (i32, i32, i32) {
    %c0_i32 = arith.constant 0 : i32
    %c0_i32_0 = arith.constant 0 : i32
    %c0_i32_1 = arith.constant 0 : i32
    %c0_i32_2 = arith.constant 0 : i32
    return %c0_i32, %c0_i32_0, %c0_i32_1 : i32, i32, i32
  }
  func.func @transform_5(%arg0: i32) -> (i32, i32, i32) {
    %c0_i32 = arith.constant 0 : i32
    %c0_i32_0 = arith.constant 0 : i32
    %c0_i32_1 = arith.constant 0 : i32
    %c0_i32_2 = arith.constant 0 : i32
    return %c0_i32, %c0_i32_0, %c0_i32_1 : i32, i32, i32
  }
  func.func @transform_6(%arg0: i32) -> (i32, i32) {
    %c0_i32 = arith.constant 0 : i32
    %c0_i32_0 = arith.constant 0 : i32
    %c0_i32_1 = arith.constant 0 : i32
    return %c0_i32, %c0_i32_0 : i32, i32
  }
  func.func @transform_7(%arg0: i32) -> (i32, i32) {
    %c0_i32 = arith.constant 0 : i32
    %c0_i32_0 = arith.constant 0 : i32
    %c0_i32_1 = arith.constant 0 : i32
    return %c0_i32, %c0_i32_0 : i32, i32
  }
  func.func @transform_8(%arg0: i32) -> (i32, i32) {
    %c0_i32 = arith.constant 0 : i32
    %c0_i32_0 = arith.constant 0 : i32
    return %arg0, %c0_i32 : i32, i32
  }
}

</mosaic_0001>

<llo_original>
// kernel: lstm_decoder_forward.1
$region0: #{lstm_decoder_forward.1}
  #allocation0 [shape = 'u32[]', space=smem, size = 0x4, offset = 0x4, fixed_abs, tag = 'smem constant byte address 0x4 - core index']
  #allocation1 [shape = 'u32[72,128]{1,0:T(1,128)}', space=vmem, size = 0x9000, scoped, tag = 'internal scratch']
  #allocation2 [shape = 'f32[128,32]{1,0:T(8,128)}', space=vmem, size = 0x10000, scoped, tag = 'scratch operand']
  #allocation3 [shape = 'f32[128,128]{1,0:T(8,128)}', space=vmem, size = 0x10000, scoped, tag = 'scratch operand']
  #allocation4 [shape = 'f32[128,32]{1,0:T(8,128)}', space=vmem, size = 0x10000, scoped, tag = 'scratch operand']
  %s0 = inlined_call_operand.vmem [shape: f32[1,128,32], index: 0, kind: input, shape index: {}]
  %s1 = inlined_call_operand.vmem [shape: f32[2,32,128], index: 1, kind: input, shape index: {}]
  %s2 = inlined_call_operand.vmem [shape: f32[2,32,32], index: 2, kind: input, shape index: {}]
  %s3 = inlined_call_operand.vmem [shape: f32[2,32,128], index: 3, kind: input, shape index: {}]
  %s4 = inlined_call_operand.vmem [shape: f32[2,1,128], index: 4, kind: input, shape index: {}]
  %s5 = inlined_call_operand.vmem [shape: f32[2,1,32], index: 5, kind: input, shape index: {}]
  %s6 = inlined_call_operand.vmem [shape: f32[32,4], index: 6, kind: input, shape index: {}]
  %s7 = inlined_call_operand.vmem [shape: f32[1,4], index: 7, kind: input, shape index: {}]
  %s8 = inlined_call_operand.vmem [shape: f32[16,4], index: 8, kind: output, shape index: {}]
  %s9 = sld [smem:[#allocation0]]
  $region42: #{lstm_decoder_forward.1} parent=0
    _
  %s11 = ssub.s32 1, %s9
  %s12 = scalar_select 0, %s11, %s9
  // Predicated region
  $region2: #{lstm_decoder_forward.1} parent=0 // pred_check
    _
  $region3: #{lstm_decoder_forward.1} parent=0 // pred_check_branch
    %14 = sbr.rel (0) target = $region5
  $region4: #{lstm_decoder_forward.1} parent=0 // pred_region
    _
  $region5: #{lstm_decoder_forward.1} parent=0 // pred_fallthru
    _
  // Predicated region
  $region6: #{lstm_decoder_forward.1} parent=0 // pred_check
    _
  $region7: #{lstm_decoder_forward.1} parent=0 // pred_check_branch
    %16 = sbr.rel (0) target = $region9
  $region8: #{lstm_decoder_forward.1} parent=0 // pred_region
    _
  $region9: #{lstm_decoder_forward.1} parent=0 // pred_fallthru
    _
  // Predicated region
  $region10: #{lstm_decoder_forward.1} parent=0 // pred_check
    _
  $region11: #{lstm_decoder_forward.1} parent=0 // pred_check_branch
    %18 = sbr.rel (0) target = $region13
  $region12: #{lstm_decoder_forward.1} parent=0 // pred_region
    _
  $region13: #{lstm_decoder_forward.1} parent=0 // pred_fallthru
    _
  // Predicated region
  $region14: #{lstm_decoder_forward.1} parent=0 // pred_check
    _
  $region15: #{lstm_decoder_forward.1} parent=0 // pred_check_branch
    %20 = sbr.rel (0) target = $region17
  $region16: #{lstm_decoder_forward.1} parent=0 // pred_region
    _
  $region17: #{lstm_decoder_forward.1} parent=0 // pred_fallthru
    _
  // Predicated region
  $region18: #{lstm_decoder_forward.1} parent=0 // pred_check
    _
  $region19: #{lstm_decoder_forward.1} parent=0 // pred_check_branch
    %22 = sbr.rel (0) target = $region21
  $region20: #{lstm_decoder_forward.1} parent=0 // pred_region
    _
  $region21: #{lstm_decoder_forward.1} parent=0 // pred_fallthru
    _
  // Predicated region
  $region22: #{lstm_decoder_forward.1} parent=0 // pred_check
    _
  $region23: #{lstm_decoder_forward.1} parent=0 // pred_check_branch
    %24 = sbr.rel (0) target = $region25
  $region24: #{lstm_decoder_forward.1} parent=0 // pred_region
    _
  $region25: #{lstm_decoder_forward.1} parent=0 // pred_fallthru
    _
  // Predicated region
  $region26: #{lstm_decoder_forward.1} parent=0 // pred_check
    _
  $region27: #{lstm_decoder_forward.1} parent=0 // pred_check_branch
    %26 = sbr.rel (0) target = $region29
  $region28: #{lstm_decoder_forward.1} parent=0 // pred_region
    _
  $region29: #{lstm_decoder_forward.1} parent=0 // pred_fallthru
    _
  // Predicated region
  $region30: #{lstm_decoder_forward.1} parent=0 // pred_check
    _
  $region31: #{lstm_decoder_forward.1} parent=0 // pred_check_branch
    %28 = sbr.rel (0) target = $region33
  $region32: #{lstm_decoder_forward.1} parent=0 // pred_region
    _
  $region33: #{lstm_decoder_forward.1} parent=0 // pred_fallthru
    _
  %v29 = vld [vmem:[%s1] sm:$0xff]
  %v30 = vld [vmem:[%s1 + $0x8] sm:$0xff]
  %v31 = vld [vmem:[%s1 + $0x10] sm:$0xff]
  %v32 = vld [vmem:[%s1 + $0x18] sm:$0xff]
  %v33 = vld [vmem:[%s2] sm:$0xff]
  %v34 = vld [vmem:[%s2 + $0x8] sm:$0xff]
  %v35 = vld [vmem:[%s2 + $0x10] sm:$0xff]
  %v36 = vld [vmem:[%s2 + $0x18] sm:$0xff]
  %v37 = vld [vmem:[%s3] sm:$0xff]
  %v38 = vld [vmem:[%s3 + $0x8] sm:$0xff]
  %v39 = vld [vmem:[%s3 + $0x10] sm:$0xff]
  %v40 = vld [vmem:[%s3 + $0x18] sm:$0xff]
  %v41 = vld [vmem:[%s0] sm:$0xff]
  %v42 = vld [vmem:[%s0 + $0x8] sm:$0xff]
  %v43 = vld [vmem:[%s0 + $0x10] sm:$0xff]
  %v44 = vld [vmem:[%s0 + $0x18] sm:$0xff]
  %v45 = vld [vmem:[%s0 + $0x20] sm:$0xff]
  %v46 = vld [vmem:[%s0 + $0x28] sm:$0xff]
  %v47 = vld [vmem:[%s0 + $0x30] sm:$0xff]
  %v48 = vld [vmem:[%s0 + $0x38] sm:$0xff]
  %v49 = vld [vmem:[%s0 + $0x40] sm:$0xff]
  %v50 = vld [vmem:[%s0 + $0x48] sm:$0xff]
  %v51 = vld [vmem:[%s0 + $0x50] sm:$0xff]
  %v52 = vld [vmem:[%s0 + $0x58] sm:$0xff]
  %v53 = vld [vmem:[%s0 + $0x60] sm:$0xff]
  %v54 = vld [vmem:[%s0 + $0x68] sm:$0xff]
  %v55 = vld [vmem:[%s0 + $0x70] sm:$0xff]
  %v56 = vld [vmem:[%s0 + $0x78] sm:$0xff]
  %v57 = vld [vmem:[%s4] sm:$0x1]
  %v59 = vperm.slane %v57, 0
  %vm61 = vcmask 261120
  %v63 = vsel %vm61, %v41, 0
  %v66 = vsel %vm61, %v42, 0
  %v69 = vsel %vm61, %v43, 0
  %v72 = vsel %vm61, %v44, 0
  %v75 = vsel %vm61, %v45, 0
  %v78 = vsel %vm61, %v46, 0
  %v81 = vsel %vm61, %v47, 0
  %v84 = vsel %vm61, %v48, 0
  %v87 = vsel %vm61, %v49, 0
  %v90 = vsel %vm61, %v50, 0
  %v93 = vsel %vm61, %v51, 0
  %v96 = vsel %vm61, %v52, 0
  %v99 = vsel %vm61, %v53, 0
  %v102 = vsel %vm61, %v54, 0
  %v105 = vsel %vm61, %v55, 0
  %v108 = vsel %vm61, %v56, 0
  %110 = vmatpush.msra.mxu0 0.0
  %111 = vmatpush.msra.mxu0 0.0
  %112 = vmatpush.msra.mxu0 0.0
  %113 = vmatpush.msra.mxu0 0.0
  %114 = vmatpush.msra.mxu0 0.0
  %115 = vmatpush.msra.mxu0 0.0
  %116 = vmatpush.msra.mxu0 0.0
  %117 = vmatpush.msra.mxu0 0.0
  %118 = vmatpush.msra.mxu0 0.0
  %119 = vmatpush.msra.mxu0 0.0
  %120 = vmatpush.msra.mxu0 0.0
  %121 = vmatpush.msra.mxu0 0.0
  %122 = vmatpush.msra.mxu0 %v32
  %123 = vmatpush.msra.mxu0 %v31
  %124 = vmatpush.msra.mxu0 %v30
  %125 = vmatpush.msra.mxu0 %v29
  %126 = vmatmul.f32.gmra.mxu0 %v63
  %v127 = vpop.f32.mrf.mxu0
  %v128 = vadd.f32 %v59, %v127
  %129 = vmatmul.f32.gmra.mxu0 %v66
  %v130 = vpop.f32.mrf.mxu0
  %v131 = vadd.f32 %v59, %v130
  %132 = vmatmul.f32.gmra.mxu0 %v69
  %v133 = vpop.f32.mrf.mxu0
  %v134 = vadd.f32 %v59, %v133
  %135 = vmatmul.f32.gmra.mxu0 %v72
  %v136 = vpop.f32.mrf.mxu0
  %v137 = vadd.f32 %v59, %v136
  %138 = vmatmul.f32.gmra.mxu0 %v75
  %v139 = vpop.f32.mrf.mxu0
  %v140 = vadd.f32 %v59, %v139
  %141 = vmatmul.f32.gmra.mxu0 %v78
  %v142 = vpop.f32.mrf.mxu0
  %v143 = vadd.f32 %v59, %v142
  %144 = vmatmul.f32.gmra.mxu0 %v81
  %v145 = vpop.f32.mrf.mxu0
  %v146 = vadd.f32 %v59, %v145
  %147 = vmatmul.f32.gmra.mxu0 %v84
  %v148 = vpop.f32.mrf.mxu0
  %v149 = vadd.f32 %v59, %v148
  %150 = vmatmul.f32.gmra.mxu0 %v87
  %v151 = vpop.f32.mrf.mxu0
  %v152 = vadd.f32 %v59, %v151
  %153 = vmatmul.f32.gmra.mxu0 %v90
  %v154 = vpop.f32.mrf.mxu0
  %v155 = vadd.f32 %v59, %v154
  %156 = vmatmul.f32.gmra.mxu0 %v93
  %v157 = vpop.f32.mrf.mxu0
  %v158 = vadd.f32 %v59, %v157
  %159 = vmatmul.f32.gmra.mxu0 %v96
  %v160 = vpop.f32.mrf.mxu0
  %v161 = vadd.f32 %v59, %v160
  %162 = vmatmul.f32.gmra.mxu0 %v99
  %v163 = vpop.f32.mrf.mxu0
  %v164 = vadd.f32 %v59, %v163
  %165 = vmatmul.f32.gmra.mxu0 %v102
  %v166 = vpop.f32.mrf.mxu0
  %v167 = vadd.f32 %v59, %v166
  %168 = vmatmul.f32.gmra.mxu0 %v105
  %v169 = vpop.f32.mrf.mxu0
  %v170 = vadd.f32 %v59, %v169
  %171 = vmatmul.f32.gmra.mxu0 %v108
  %v172 = vpop.f32.mrf.mxu0
  %v173 = vadd.f32 %v59, %v172
  %174 = vdwg.mxu0
  %175 = vst [vmem:[#allocation3] sm:$0xff] %v128
  %176 = vst [vmem:[#allocation3 + $0x8] sm:$0xff] %v131
  %177 = vst [vmem:[#allocation3 + $0x10] sm:$0xff] %v134
  %178 = vst [vmem:[#allocation3 + $0x18] sm:$0xff] %v137
  %179 = vst [vmem:[#allocation3 + $0x20] sm:$0xff] %v140
  %180 = vst [vmem:[#allocation3 + $0x28] sm:$0xff] %v143
  %181 = vst [vmem:[#allocation3 + $0x30] sm:$0xff] %v146
  %182 = vst [vmem:[#allocation3 + $0x38] sm:$0xff] %v149
  %183 = vst [vmem:[#allocation3 + $0x40] sm:$0xff] %v152
  %184 = vst [vmem:[#allocation3 + $0x48] sm:$0xff] %v155
  %185 = vst [vmem:[#allocation3 + $0x50] sm:$0xff] %v158
  %186 = vst [vmem:[#allocation3 + $0x58] sm:$0xff] %v161
  %187 = vst [vmem:[#allocation3 + $0x60] sm:$0xff] %v164
  %188 = vst [vmem:[#allocation3 + $0x68] sm:$0xff] %v167
  %189 = vst [vmem:[#allocation3 + $0x70] sm:$0xff] %v170
  %190 = vst [vmem:[#allocation3 + $0x78] sm:$0xff] %v173
  %v191 = vld [vmem:[%s5] sm:$0x1]
  %v193 = vperm.slane %v191, 0
  %195 = vmatpush.msra.mxu0 0.0
  %196 = vmatpush.msra.mxu0 0.0
  %197 = vmatpush.msra.mxu0 0.0
  %198 = vmatpush.msra.mxu0 0.0
  %199 = vmatpush.msra.mxu0 0.0
  %200 = vmatpush.msra.mxu0 0.0
  %201 = vmatpush.msra.mxu0 0.0
  %202 = vmatpush.msra.mxu0 0.0
  %203 = vmatpush.msra.mxu0 0.0
  %204 = vmatpush.msra.mxu0 0.0
  %205 = vmatpush.msra.mxu0 0.0
  %206 = vmatpush.msra.mxu0 0.0
  %207 = vmatpush.msra.mxu0 %v36
  %208 = vmatpush.msra.mxu0 %v35
  %209 = vmatpush.msra.mxu0 %v34
  %210 = vmatpush.msra.mxu0 %v33
  %211 = vmatmul.f32.gmra.mxu0 %v63
  %v212 = vpop.f32.mrf.mxu0
  %v213 = vadd.f32 %v193, %v212
  %214 = vmatmul.f32.gmra.mxu0 %v66
  %v215 = vpop.f32.mrf.mxu0
  %v216 = vadd.f32 %v193, %v215
  %217 = vmatmul.f32.gmra.mxu0 %v69
  %v218 = vpop.f32.mrf.mxu0
  %v219 = vadd.f32 %v193, %v218
  %220 = vmatmul.f32.gmra.mxu0 %v72
  %v221 = vpop.f32.mrf.mxu0
  %v222 = vadd.f32 %v193, %v221
  %223 = vmatmul.f32.gmra.mxu0 %v75
  %v224 = vpop.f32.mrf.mxu0
  %v225 = vadd.f32 %v193, %v224
  %226 = vmatmul.f32.gmra.mxu0 %v78
  %v227 = vpop.f32.mrf.mxu0
  %v228 = vadd.f32 %v193, %v227
  %229 = vmatmul.f32.gmra.mxu0 %v81
  %v230 = vpop.f32.mrf.mxu0
  %v231 = vadd.f32 %v193, %v230
  %232 = vmatmul.f32.gmra.mxu0 %v84
  %v233 = vpop.f32.mrf.mxu0
  %v234 = vadd.f32 %v193, %v233
  %235 = vmatmul.f32.gmra.mxu0 %v87
  %v236 = vpop.f32.mrf.mxu0
  %v237 = vadd.f32 %v193, %v236
  %238 = vmatmul.f32.gmra.mxu0 %v90
  %v239 = vpop.f32.mrf.mxu0
  %v240 = vadd.f32 %v193, %v239
  %241 = vmatmul.f32.gmra.mxu0 %v93
  %v242 = vpop.f32.mrf.mxu0
  %v243 = vadd.f32 %v193, %v242
  %244 = vmatmul.f32.gmra.mxu0 %v96
  %v245 = vpop.f32.mrf.mxu0
  %v246 = vadd.f32 %v193, %v245
  %247 = vmatmul.f32.gmra.mxu0 %v99
  %v248 = vpop.f32.mrf.mxu0
  %v249 = vadd.f32 %v193, %v248
  %250 = vmatmul.f32.gmra.mxu0 %v102
  %v251 = vpop.f32.mrf.mxu0
  %v252 = vadd.f32 %v193, %v251
  %253 = vmatmul.f32.gmra.mxu0 %v105
  %v254 = vpop.f32.mrf.mxu0
  %v255 = vadd.f32 %v193, %v254
  %256 = vmatmul.f32.gmra.mxu0 %v108
  %v257 = vpop.f32.mrf.mxu0
  %v258 = vadd.f32 %v193, %v257
  %259 = vdwg.mxu0
  %260 = vst.msk [vmem:[#allocation4] sm:$0xff] %vm61, %v213
  %261 = vst.msk [vmem:[#allocation4 + $0x8] sm:$0xff] %vm61, %v216
  %262 = vst.msk [vmem:[#allocation4 + $0x10] sm:$0xff] %vm61, %v219
  %263 = vst.msk [vmem:[#allocation4 + $0x18] sm:$0xff] %vm61, %v222
  %264 = vst.msk [vmem:[#allocation4 + $0x20] sm:$0xff] %vm61, %v225
  %265 = vst.msk [vmem:[#allocation4 + $0x28] sm:$0xff] %vm61, %v228
  %266 = vst.msk [vmem:[#allocation4 + $0x30] sm:$0xff] %vm61, %v231
  %267 = vst.msk [vmem:[#allocation4 + $0x38] sm:$0xff] %vm61, %v234
  %268 = vst.msk [vmem:[#allocation4 + $0x40] sm:$0xff] %vm61, %v237
  %269 = vst.msk [vmem:[#allocation4 + $0x48] sm:$0xff] %vm61, %v240
  %270 = vst.msk [vmem:[#allocation4 + $0x50] sm:$0xff] %vm61, %v243
  %271 = vst.msk [vmem:[#allocation4 + $0x58] sm:$0xff] %vm61, %v246
  %272 = vst.msk [vmem:[#allocation4 + $0x60] sm:$0xff] %vm61, %v249
  %273 = vst.msk [vmem:[#allocation4 + $0x68] sm:$0xff] %vm61, %v252
  %274 = vst.msk [vmem:[#allocation4 + $0x70] sm:$0xff] %vm61, %v255
  %275 = vst.msk [vmem:[#allocation4 + $0x78] sm:$0xff] %vm61, %v258
  %v276 = vld [vmem:[#allocation3] sm:$0xff]
  %v277 = vld [vmem:[#allocation3 + $0x8] sm:$0xff]
  %v279 = vsel %vm61, 0.0, 0
  %281 = vmatpush.msra.mxu0 0.0
  %282 = vmatpush.msra.mxu0 0.0
  %283 = vmatpush.msra.mxu0 0.0
  %284 = vmatpush.msra.mxu0 0.0
  %285 = vmatpush.msra.mxu0 0.0
  %286 = vmatpush.msra.mxu0 0.0
  %287 = vmatpush.msra.mxu0 0.0
  %288 = vmatpush.msra.mxu0 0.0
  %289 = vmatpush.msra.mxu0 0.0
  %290 = vmatpush.msra.mxu0 0.0
  %291 = vmatpush.msra.mxu0 0.0
  %292 = vmatpush.msra.mxu0 0.0
  %293 = vmatpush.msra.mxu0 %v40
  %294 = vmatpush.msra.mxu0 %v39
  %295 = vmatpush.msra.mxu0 %v38
  %296 = vmatpush.msra.mxu0 %v37
  %297 = vmatmul.f32.gmra.mxu0 %v279
  %v298 = vpop.f32.mrf.mxu0
  %v299 = vadd.f32 0.0, %v298
  %300 = vmatmul.f32.gmra.mxu0 %v279
  %v301 = vpop.f32.mrf.mxu0
  %v302 = vadd.f32 0.0, %v301
  %303 = vdwg.mxu0
  %v304 = vadd.f32 %v276, %v299
  %v305 = vadd.f32 %v277, %v302
  %v306 = vmul.f32 %v304, 0.5
  %v307 = vmul.f32 %v305, 0.5
  %v308 = vtanh.pop %v306
  %v309 = vtanh.pop %v307
  %v310 = vadd.f32 %v308, 1.0
  %v311 = vadd.f32 %v309, 1.0
  %v312 = vmul.f32 %v310, 0.5
  %v313 = vmul.f32 %v311, 0.5
  %v314 = vtanh.pop %v304
  %v315 = vtanh.pop %v305
  %v316 = vmul.f32 %v312, 0.0
  %v317 = vmul.f32 %v313, 0.0
  %320 = vrot.lane.b32.xlu0 %v314, 64
  %v321 = vpop.permute.xlu0 %320
  %322 = vrot.lane.b32.xlu0 %v315, 64
  %v323 = vpop.permute.xlu0 %322
  %v326 = vmul.f32 %v312, %v321
  %v327 = vmul.f32 %v313, %v323
  %330 = vrot.lane.b32.xlu0 %v326, 32
  %v331 = vpop.permute.xlu0 %330
  %332 = vrot.lane.b32.xlu0 %v327, 32
  %v333 = vpop.permute.xlu0 %332
  %v336 = vadd.f32 %v316, %v331
  %v337 = vadd.f32 %v317, %v333
  %v338 = vtanh.pop %v336
  %v339 = vtanh.pop %v337
  %342 = vrot.lane.b32.xlu0 %v338, 64
  %v343 = vpop.permute.xlu0 %342
  %344 = vrot.lane.b32.xlu0 %v339, 64
  %v345 = vpop.permute.xlu0 %344
  %v348 = vmul.f32 %v312, %v343
  %v349 = vmul.f32 %v313, %v345
  %v350 = vld [vmem:[#allocation4] sm:$0xff]
  %v351 = vld [vmem:[#allocation4 + $0x8] sm:$0xff]
  %354 = vrot.lane.b32.xlu0 %v350, 96
  %v355 = vpop.permute.xlu0 %354
  %356 = vrot.lane.b32.xlu0 %v351, 96
  %v357 = vpop.permute.xlu0 %356
  %v360 = vadd.f32 %v348, %v355
  %v361 = vadd.f32 %v349, %v357
  %364 = vrot.lane.b32.xlu0 %v360, 32
  %v365 = vpop.permute.xlu0 %364
  %366 = vrot.lane.b32.xlu0 %v361, 32
  %v367 = vpop.permute.xlu0 %366
  %370 = vst.msk [vmem:[#allocation2] sm:$0xff] %vm61, %v365
  %371 = vst.msk [vmem:[#allocation2 + $0x8] sm:$0xff] %vm61, %v367
  %s372 = scalar_lea.vmem [#allocation3], 16
  %v373 = vld [vmem:[%s372] sm:$0xff]
  %v374 = vld [vmem:[%s372 + $0x8] sm:$0xff]
  %377 = vrot.lane.b32.xlu0 %v348, 32
  %v378 = vpop.permute.xlu0 %377
  %379 = vrot.lane.b32.xlu0 %v349, 32
  %v380 = vpop.permute.xlu0 %379
  %v381 = vsel %vm61, %v378, 0
  %v383 = vsel %vm61, %v380, 0
  %385 = vmatpush.msra.mxu0 0.0
  %386 = vmatpush.msra.mxu0 0.0
  %387 = vmatpush.msra.mxu0 0.0
  %388 = vmatpush.msra.mxu0 0.0
  %389 = vmatpush.msra.mxu0 0.0
  %390 = vmatpush.msra.mxu0 0.0
  %391 = vmatpush.msra.mxu0 0.0
  %392 = vmatpush.msra.mxu0 0.0
  %393 = vmatpush.msra.mxu0 0.0
  %394 = vmatpush.msra.mxu0 0.0
  %395 = vmatpush.msra.mxu0 0.0
  %396 = vmatpush.msra.mxu0 0.0
  %397 = vmatpush.msra.mxu0 %v40
  %398 = vmatpush.msra.mxu0 %v39
  %399 = vmatpush.msra.mxu0 %v38
  %400 = vmatpush.msra.mxu0 %v37
  %401 = vmatmul.f32.gmra.mxu0 %v381
  %v402 = vpop.f32.mrf.mxu0
  %v403 = vadd.f32 0.0, %v402
  %404 = vmatmul.f32.gmra.mxu0 %v383
  %v405 = vpop.f32.mrf.mxu0
  %v406 = vadd.f32 0.0, %v405
  %407 = vdwg.mxu0
  %v408 = vadd.f32 %v373, %v403
  %v409 = vadd.f32 %v374, %v406
  %v410 = vmul.f32 %v408, 0.5
  %v411 = vmul.f32 %v409, 0.5
  %v412 = vtanh.pop %v410
  %v413 = vtanh.pop %v411
  %v414 = vadd.f32 %v412, 1.0
  %v415 = vadd.f32 %v413, 1.0
  %v416 = vmul.f32 %v414, 0.5
  %v417 = vmul.f32 %v415, 0.5
  %v418 = vtanh.pop %v408
  %v419 = vtanh.pop %v409
  %v420 = vmul.f32 %v416, %v336
  %v421 = vmul.f32 %v417, %v337
  %424 = vrot.lane.b32.xlu0 %v418, 64
  %v425 = vpop.permute.xlu0 %424
  %426 = vrot.lane.b32.xlu0 %v419, 64
  %v427 = vpop.permute.xlu0 %426
  %v430 = vmul.f32 %v416, %v425
  %v431 = vmul.f32 %v417, %v427
  %434 = vrot.lane.b32.xlu0 %v430, 32
  %v435 = vpop.permute.xlu0 %434
  %436 = vrot.lane.b32.xlu0 %v431, 32
  %v437 = vpop.permute.xlu0 %436
  %v440 = vadd.f32 %v420, %v435
  %v441 = vadd.f32 %v421, %v437
  %v442 = vtanh.pop %v440
  %v443 = vtanh.pop %v441
  %446 = vrot.lane.b32.xlu0 %v442, 64
  %v447 = vpop.permute.xlu0 %446
  %448 = vrot.lane.b32.xlu0 %v443, 64
  %v449 = vpop.permute.xlu0 %448
  %v452 = vmul.f32 %v416, %v447
  %v453 = vmul.f32 %v417, %v449
  %s454 = scalar_lea.vmem [#allocation4], 16
  %v455 = vld [vmem:[%s454] sm:$0xff]
  %v456 = vld [vmem:[%s454 + $0x8] sm:$0xff]
  %459 = vrot.lane.b32.xlu0 %v455, 96
  %v460 = vpop.permute.xlu0 %459
  %461 = vrot.lane.b32.xlu0 %v456, 96
  %v462 = vpop.permute.xlu0 %461
  %v465 = vadd.f32 %v452, %v460
  %v466 = vadd.f32 %v453, %v462
  %469 = vrot.lane.b32.xlu0 %v465, 32
  %v470 = vpop.permute.xlu0 %469
  %471 = vrot.lane.b32.xlu0 %v466, 32
  %v472 = vpop.permute.xlu0 %471
  %s475 = scalar_lea.vmem [#allocation2], 16
  %476 = vst.msk [vmem:[%s475] sm:$0xff] %vm61, %v470
  %477 = vst.msk [vmem:[%s475 + $0x8] sm:$0xff] %vm61, %v472
  %s478 = scalar_lea.vmem [#allocation3], 32
  %v479 = vld [vmem:[%s478] sm:$0xff]
  %v480 = vld [vmem:[%s478 + $0x8] sm:$0xff]
  %483 = vrot.lane.b32.xlu0 %v452, 32
  %v484 = vpop.permute.xlu0 %483
  %485 = vrot.lane.b32.xlu0 %v453, 32
  %v486 = vpop.permute.xlu0 %485
  %v487 = vsel %vm61, %v484, 0
  %v489 = vsel %vm61, %v486, 0
  %491 = vmatpush.msra.mxu0 0.0
  %492 = vmatpush.msra.mxu0 0.0
  %493 = vmatpush.msra.mxu0 0.0
  %494 = vmatpush.msra.mxu0 0.0
  %495 = vmatpush.msra.mxu0 0.0
  %496 = vmatpush.msra.mxu0 0.0
  %497 = vmatpush.msra.mxu0 0.0
  %498 = vmatpush.msra.mxu0 0.0
  %499 = vmatpush.msra.mxu0 0.0
  %500 = vmatpush.msra.mxu0 0.0
  %501 = vmatpush.msra.mxu0 0.0
  %502 = vmatpush.msra.mxu0 0.0
  %503 = vmatpush.msra.mxu0 %v40
  %504 = vmatpush.msra.mxu0 %v39
  %505 = vmatpush.msra.mxu0 %v38
  %506 = vmatpush.msra.mxu0 %v37
  %507 = vmatmul.f32.gmra.mxu0 %v487
  %v508 = vpop.f32.mrf.mxu0
  %v509 = vadd.f32 0.0, %v508
  %510 = vmatmul.f32.gmra.mxu0 %v489
  %v511 = vpop.f32.mrf.mxu0
  %v512 = vadd.f32 0.0, %v511
  %513 = vdwg.mxu0
  %v514 = vadd.f32 %v479, %v509
  %v515 = vadd.f32 %v480, %v512
  %v516 = vmul.f32 %v514, 0.5
  %v517 = vmul.f32 %v515, 0.5
  %v518 = vtanh.pop %v516
  %v519 = vtanh.pop %v517
  %v520 = vadd.f32 %v518, 1.0
  %v521 = vadd.f32 %v519, 1.0
  %v522 = vmul.f32 %v520, 0.5
  %v523 = vmul.f32 %v521, 0.5
  %v524 = vtanh.pop %v514
  %v525 = vtanh.pop %v515
  %v526 = vmul.f32 %v522, %v440
  %v527 = vmul.f32 %v523, %v441
  %530 = vrot.lane.b32.xlu0 %v524, 64
  %v531 = vpop.permute.xlu0 %530
  %532 = vrot.lane.b32.xlu0 %v525, 64
  %v533 = vpop.permute.xlu0 %532
  %v536 = vmul.f32 %v522, %v531
  %v537 = vmul.f32 %v523, %v533
  %540 = vrot.lane.b32.xlu0 %v536, 32
  %v541 = vpop.permute.xlu0 %540
  %542 = vrot.lane.b32.xlu0 %v537, 32
  %v543 = vpop.permute.xlu0 %542
  %v546 = vadd.f32 %v526, %v541
  %v547 = vadd.f32 %v527, %v543
  %v548 = vtanh.pop %v546
  %v549 = vtanh.pop %v547
  %552 = vrot.lane.b32.xlu0 %v548, 64
  %v553 = vpop.permute.xlu0 %552
  %554 = vrot.lane.b32.xlu0 %v549, 64
  %v555 = vpop.permute.xlu0 %554
  %v558 = vmul.f32 %v522, %v553
  %v559 = vmul.f32 %v523, %v555
  %s560 = scalar_lea.vmem [#allocation4], 32
  %v561 = vld [vmem:[%s560] sm:$0xff]
  %v562 = vld [vmem:[%s560 + $0x8] sm:$0xff]
  %565 = vrot.lane.b32.xlu0 %v561, 96
  %v566 = vpop.permute.xlu0 %565
  %567 = vrot.lane.b32.xlu0 %v562, 96
  %v568 = vpop.permute.xlu0 %567
  %v571 = vadd.f32 %v558, %v566
  %v572 = vadd.f32 %v559, %v568
  %575 = vrot.lane.b32.xlu0 %v571, 32
  %v576 = vpop.permute.xlu0 %575
  %577 = vrot.lane.b32.xlu0 %v572, 32
  %v578 = vpop.permute.xlu0 %577
  %s581 = scalar_lea.vmem [#allocation2], 32
  %582 = vst.msk [vmem:[%s581] sm:$0xff] %vm61, %v576
  %583 = vst.msk [vmem:[%s581 + $0x8] sm:$0xff] %vm61, %v578
  %s584 = scalar_lea.vmem [#allocation3], 48
  %v585 = vld [vmem:[%s584] sm:$0xff]
  %v586 = vld [vmem:[%s584 + $0x8] sm:$0xff]
  %589 = vrot.lane.b32.xlu0 %v558, 32
  %v590 = vpop.permute.xlu0 %589
  %591 = vrot.lane.b32.xlu0 %v559, 32
  %v592 = vpop.permute.xlu0 %591
  %v593 = vsel %vm61, %v590, 0
  %v595 = vsel %vm61, %v592, 0
  %597 = vmatpush.msra.mxu0 0.0
  %598 = vmatpush.msra.mxu0 0.0
  %599 = vmatpush.msra.mxu0 0.0
  %600 = vmatpush.msra.mxu0 0.0
  %601 = vmatpush.msra.mxu0 0.0
  %602 = vmatpush.msra.mxu0 0.0
  %603 = vmatpush.msra.mxu0 0.0
  %604 = vmatpush.msra.mxu0 0.0
  %605 = vmatpush.msra.mxu0 0.0
  %606 = vmatpush.msra.mxu0 0.0
  %607 = vmatpush.msra.mxu0 0.0
  %608 = vmatpush.msra.mxu0 0.0
  %609 = vmatpush.msra.mxu0 %v40
  %610 = vmatpush.msra.mxu0 %v39
  %611 = vmatpush.msra.mxu0 %v38
  %612 = vmatpush.msra.mxu0 %v37
  %613 = vmatmul.f32.gmra.mxu0 %v593
  %v614 = vpop.f32.mrf.mxu0
  %v615 = vadd.f32 0.0, %v614
  %616 = vmatmul.f32.gmra.mxu0 %v595
  %v617 = vpop.f32.mrf.mxu0
  %v618 = vadd.f32 0.0, %v617
  %619 = vdwg.mxu0
  %v620 = vadd.f32 %v585, %v615
  %v621 = vadd.f32 %v586, %v618
  %v622 = vmul.f32 %v620, 0.5
  %v623 = vmul.f32 %v621, 0.5
  %v624 = vtanh.pop %v622
  %v625 = vtanh.pop %v623
  %v626 = vadd.f32 %v624, 1.0
  %v627 = vadd.f32 %v625, 1.0
  %v628 = vmul.f32 %v626, 0.5
  %v629 = vmul.f32 %v627, 0.5
  %v630 = vtanh.pop %v620
  %v631 = vtanh.pop %v621
  %v632 = vmul.f32 %v628, %v546
  %v633 = vmul.f32 %v629, %v547
  %636 = vrot.lane.b32.xlu0 %v630, 64
  %v637 = vpop.permute.xlu0 %636
  %638 = vrot.lane.b32.xlu0 %v631, 64
  %v639 = vpop.permute.xlu0 %638
  %v642 = vmul.f32 %v628, %v637
  %v643 = vmul.f32 %v629, %v639
  %646 = vrot.lane.b32.xlu0 %v642, 32
  %v647 = vpop.permute.xlu0 %646
  %648 = vrot.lane.b32.xlu0 %v643, 32
  %v649 = vpop.permute.xlu0 %648
  %v652 = vadd.f32 %v632, %v647
  %v653 = vadd.f32 %v633, %v649
  %v654 = vtanh.pop %v652
  %v655 = vtanh.pop %v653
  %658 = vrot.lane.b32.xlu0 %v654, 64
  %v659 = vpop.permute.xlu0 %658
  %660 = vrot.lane.b32.xlu0 %v655, 64
  %v661 = vpop.permute.xlu0 %660
  %v664 = vmul.f32 %v628, %v659
  %v665 = vmul.f32 %v629, %v661
  %s666 = scalar_lea.vmem [#allocation4], 48
  %v667 = vld [vmem:[%s666] sm:$0xff]
  %v668 = vld [vmem:[%s666 + $0x8] sm:$0xff]
  %671 = vrot.lane.b32.xlu0 %v667, 96
  %v672 = vpop.permute.xlu0 %671
  %673 = vrot.lane.b32.xlu0 %v668, 96
  %v674 = vpop.permute.xlu0 %673
  %v677 = vadd.f32 %v664, %v672
  %v678 = vadd.f32 %v665, %v674
  %681 = vrot.lane.b32.xlu0 %v677, 32
  %v682 = vpop.permute.xlu0 %681
  %683 = vrot.lane.b32.xlu0 %v678, 32
  %v684 = vpop.permute.xlu0 %683
  %s687 = scalar_lea.vmem [#allocation2], 48
  %688 = vst.msk [vmem:[%s687] sm:$0xff] %vm61, %v682
  %689 = vst.msk [vmem:[%s687 + $0x8] sm:$0xff] %vm61, %v684
  %s690 = scalar_lea.vmem [#allocation3], 64
  %v691 = vld [vmem:[%s690] sm:$0xff]
  %v692 = vld [vmem:[%s690 + $0x8] sm:$0xff]
  %695 = vrot.lane.b32.xlu0 %v664, 32
  %v696 = vpop.permute.xlu0 %695
  %697 = vrot.lane.b32.xlu0 %v665, 32
  %v698 = vpop.permute.xlu0 %697
  %v699 = vsel %vm61, %v696, 0
  %v701 = vsel %vm61, %v698, 0
  %703 = vmatpush.msra.mxu0 0.0
  %704 = vmatpush.msra.mxu0 0.0
  %705 = vmatpush.msra.mxu0 0.0
  %706 = vmatpush.msra.mxu0 0.0
  %707 = vmatpush.msra.mxu0 0.0
  %708 = vmatpush.msra.mxu0 0.0
  %709 = vmatpush.msra.mxu0 0.0
  %710 = vmatpush.msra.mxu0 0.0
  %711 = vmatpush.msra.mxu0 0.0
  %712 = vmatpush.msra.mxu0 0.0
  %713 = vmatpush.msra.mxu0 0.0
  %714 = vmatpush.msra.mxu0 0.0
  %715 = vmatpush.msra.mxu0 %v40
  %716 = vmatpush.msra.mxu0 %v39
  %717 = vmatpush.msra.mxu0 %v38
  %718 = vmatpush.msra.mxu0 %v37
  %719 = vmatmul.f32.gmra.mxu0 %v699
  %v720 = vpop.f32.mrf.mxu0
  %v721 = vadd.f32 0.0, %v720
  %722 = vmatmul.f32.gmra.mxu0 %v701
  %v723 = vpop.f32.mrf.mxu0
  %v724 = vadd.f32 0.0, %v723
  %725 = vdwg.mxu0
  %v726 = vadd.f32 %v691, %v721
  %v727 = vadd.f32 %v692, %v724
  %v728 = vmul.f32 %v726, 0.5
  %v729 = vmul.f32 %v727, 0.5
  %v730 = vtanh.pop %v728
  %v731 = vtanh.pop %v729
  %v732 = vadd.f32 %v730, 1.0
  %v733 = vadd.f32 %v731, 1.0
  %v734 = vmul.f32 %v732, 0.5
  %v735 = vmul.f32 %v733, 0.5
  %v736 = vtanh.pop %v726
  %v737 = vtanh.pop %v727
  %v738 = vmul.f32 %v734, %v652
  %v739 = vmul.f32 %v735, %v653
  %742 = vrot.lane.b32.xlu0 %v736, 64
  %v743 = vpop.permute.xlu0 %742
  %744 = vrot.lane.b32.xlu0 %v737, 64
  %v745 = vpop.permute.xlu0 %744
  %v748 = vmul.f32 %v734, %v743
  %v749 = vmul.f32 %v735, %v745
  %752 = vrot.lane.b32.xlu0 %v748, 32
  %v753 = vpop.permute.xlu0 %752
  %754 = vrot.lane.b32.xlu0 %v749, 32
  %v755 = vpop.permute.xlu0 %754
  %v758 = vadd.f32 %v738, %v753
  %v759 = vadd.f32 %v739, %v755
  %v760 = vtanh.pop %v758
  %v761 = vtanh.pop %v759
  %764 = vrot.lane.b32.xlu0 %v760, 64
  %v765 = vpop.permute.xlu0 %764
  %766 = vrot.lane.b32.xlu0 %v761, 64
  %v767 = vpop.permute.xlu0 %766
  %v770 = vmul.f32 %v734, %v765
  %v771 = vmul.f32 %v735, %v767
  %s772 = scalar_lea.vmem [#allocation4], 64
  %v773 = vld [vmem:[%s772] sm:$0xff]
  %v774 = vld [vmem:[%s772 + $0x8] sm:$0xff]
  %777 = vrot.lane.b32.xlu0 %v773, 96
  %v778 = vpop.permute.xlu0 %777
  %779 = vrot.lane.b32.xlu0 %v774, 96
  %v780 = vpop.permute.xlu0 %779
  %v783 = vadd.f32 %v770, %v778
  %v784 = vadd.f32 %v771, %v780
  %787 = vrot.lane.b32.xlu0 %v783, 32
  %v788 = vpop.permute.xlu0 %787
  %789 = vrot.lane.b32.xlu0 %v784, 32
  %v790 = vpop.permute.xlu0 %789
  %s793 = scalar_lea.vmem [#allocation2], 64
  %794 = vst.msk [vmem:[%s793] sm:$0xff] %vm61, %v788
  %795 = vst.msk [vmem:[%s793 + $0x8] sm:$0xff] %vm61, %v790
  %s796 = scalar_lea.vmem [#allocation3], 80
  %v797 = vld [vmem:[%s796] sm:$0xff]
  %v798 = vld [vmem:[%s796 + $0x8] sm:$0xff]
  %801 = vrot.lane.b32.xlu0 %v770, 32
  %v802 = vpop.permute.xlu0 %801
  %803 = vrot.lane.b32.xlu0 %v771, 32
  %v804 = vpop.permute.xlu0 %803
  %v805 = vsel %vm61, %v802, 0
  %v807 = vsel %vm61, %v804, 0
  %809 = vmatpush.msra.mxu0 0.0
  %810 = vmatpush.msra.mxu0 0.0
  %811 = vmatpush.msra.mxu0 0.0
  %812 = vmatpush.msra.mxu0 0.0
  %813 = vmatpush.msra.mxu0 0.0
  %814 = vmatpush.msra.mxu0 0.0
  %815 = vmatpush.msra.mxu0 0.0
  %816 = vmatpush.msra.mxu0 0.0
  %817 = vmatpush.msra.mxu0 0.0
  %818 = vmatpush.msra.mxu0 0.0
  %819 = vmatpush.msra.mxu0 0.0
  %820 = vmatpush.msra.mxu0 0.0
  %821 = vmatpush.msra.mxu0 %v40
  %822 = vmatpush.msra.mxu0 %v39
  %823 = vmatpush.msra.mxu0 %v38
  %824 = vmatpush.msra.mxu0 %v37
  %825 = vmatmul.f32.gmra.mxu0 %v805
  %v826 = vpop.f32.mrf.mxu0
  %v827 = vadd.f32 0.0, %v826
  %828 = vmatmul.f32.gmra.mxu0 %v807
  %v829 = vpop.f32.mrf.mxu0
  %v830 = vadd.f32 0.0, %v829
  %831 = vdwg.mxu0
  %v832 = vadd.f32 %v797, %v827
  %v833 = vadd.f32 %v798, %v830
  %v834 = vmul.f32 %v832, 0.5
  %v835 = vmul.f32 %v833, 0.5
  %v836 = vtanh.pop %v834
  %v837 = vtanh.pop %v835
  %v838 = vadd.f32 %v836, 1.0
  %v839 = vadd.f32 %v837, 1.0
  %v840 = vmul.f32 %v838, 0.5
  %v841 = vmul.f32 %v839, 0.5
  %v842 = vtanh.pop %v832
  %v843 = vtanh.pop %v833
  %v844 = vmul.f32 %v840, %v758
  %v845 = vmul.f32 %v841, %v759
  %848 = vrot.lane.b32.xlu0 %v842, 64
  %v849 = vpop.permute.xlu0 %848
  %850 = vrot.lane.b32.xlu0 %v843, 64
  %v851 = vpop.permute.xlu0 %850
  %v854 = vmul.f32 %v840, %v849
  %v855 = vmul.f32 %v841, %v851
  %858 = vrot.lane.b32.xlu0 %v854, 32
  %v859 = vpop.permute.xlu0 %858
  %860 = vrot.lane.b32.xlu0 %v855, 32
  %v861 = vpop.permute.xlu0 %860
  %v864 = vadd.f32 %v844, %v859
  %v865 = vadd.f32 %v845, %v861
  %v866 = vtanh.pop %v864
  %v867 = vtanh.pop %v865
  %870 = vrot.lane.b32.xlu0 %v866, 64
  %v871 = vpop.permute.xlu0 %870
  %872 = vrot.lane.b32.xlu0 %v867, 64
  %v873 = vpop.permute.xlu0 %872
  %v876 = vmul.f32 %v840, %v871
  %v877 = vmul.f32 %v841, %v873
  %s878 = scalar_lea.vmem [#allocation4], 80
  %v879 = vld [vmem:[%s878] sm:$0xff]
  %v880 = vld [vmem:[%s878 + $0x8] sm:$0xff]
  %883 = vrot.lane.b32.xlu0 %v879, 96
  %v884 = vpop.permute.xlu0 %883
  %885 = vrot.lane.b32.xlu0 %v880, 96
  %v886 = vpop.permute.xlu0 %885
  %v889 = vadd.f32 %v876, %v884
  %v890 = vadd.f32 %v877, %v886
  %893 = vrot.lane.b32.xlu0 %v889, 32
  %v894 = vpop.permute.xlu0 %893
  %895 = vrot.lane.b32.xlu0 %v890, 32
  %v896 = vpop.permute.xlu0 %895
  %s899 = scalar_lea.vmem [#allocation2], 80
  %900 = vst.msk [vmem:[%s899] sm:$0xff] %vm61, %v894
  %901 = vst.msk [vmem:[%s899 + $0x8] sm:$0xff] %vm61, %v896
  %s902 = scalar_lea.vmem [#allocation3], 96
  %v903 = vld [vmem:[%s902] sm:$0xff]
  %v904 = vld [vmem:[%s902 + $0x8] sm:$0xff]
  %907 = vrot.lane.b32.xlu0 %v876, 32
  %v908 = vpop.permute.xlu0 %907
  %909 = vrot.lane.b32.xlu0 %v877, 32
  %v910 = vpop.permute.xlu0 %909
  %v911 = vsel %vm61, %v908, 0
  %v913 = vsel %vm61, %v910, 0
  %915 = vmatpush.msra.mxu0 0.0
  %916 = vmatpush.msra.mxu0 0.0
  %917 = vmatpush.msra.mxu0 0.0
  %918 = vmatpush.msra.mxu0 0.0
  %919 = vmatpush.msra.mxu0 0.0
  %920 = vmatpush.msra.mxu0 0.0
  %921 = vmatpush.msra.mxu0 0.0
  %922 = vmatpush.msra.mxu0 0.0
  %923 = vmatpush.msra.mxu0 0.0
  %924 = vmatpush.msra.mxu0 0.0
  %925 = vmatpush.msra.mxu0 0.0
  %926 = vmatpush.msra.mxu0 0.0
  %927 = vmatpush.msra.mxu0 %v40
  %928 = vmatpush.msra.mxu0 %v39
  %929 = vmatpush.msra.mxu0 %v38
  %930 = vmatpush.msra.mxu0 %v37
  %931 = vmatmul.f32.gmra.mxu0 %v911
  %v932 = vpop.f32.mrf.mxu0
  %v933 = vadd.f32 0.0, %v932
  %934 = vmatmul.f32.gmra.mxu0 %v913
  %v935 = vpop.f32.mrf.mxu0
  %v936 = vadd.f32 0.0, %v935
  %937 = vdwg.mxu0
  %v938 = vadd.f32 %v903, %v933
  %v939 = vadd.f32 %v904, %v936
  %v940 = vmul.f32 %v938, 0.5
  %v941 = vmul.f32 %v939, 0.5
  %v942 = vtanh.pop %v940
  %v943 = vtanh.pop %v941
  %v944 = vadd.f32 %v942, 1.0
  %v945 = vadd.f32 %v943, 1.0
  %v946 = vmul.f32 %v944, 0.5
  %v947 = vmul.f32 %v945, 0.5
  %v948 = vtanh.pop %v938
  %v949 = vtanh.pop %v939
  %v950 = vmul.f32 %v946, %v864
  %v951 = vmul.f32 %v947, %v865
  %954 = vrot.lane.b32.xlu0 %v948, 64
  %v955 = vpop.permute.xlu0 %954
  %956 = vrot.lane.b32.xlu0 %v949, 64
  %v957 = vpop.permute.xlu0 %956
  %v960 = vmul.f32 %v946, %v955
  %v961 = vmul.f32 %v947, %v957
  %964 = vrot.lane.b32.xlu0 %v960, 32
  %v965 = vpop.permute.xlu0 %964
  %966 = vrot.lane.b32.xlu0 %v961, 32
  %v967 = vpop.permute.xlu0 %966
  %v970 = vadd.f32 %v950, %v965
  %v971 = vadd.f32 %v951, %v967
  %v972 = vtanh.pop %v970
  %v973 = vtanh.pop %v971
  %976 = vrot.lane.b32.xlu0 %v972, 64
  %v977 = vpop.permute.xlu0 %976
  %978 = vrot.lane.b32.xlu0 %v973, 64
  %v979 = vpop.permute.xlu0 %978
  %v982 = vmul.f32 %v946, %v977
  %v983 = vmul.f32 %v947, %v979
  %s984 = scalar_lea.vmem [#allocation4], 96
  %v985 = vld [vmem:[%s984] sm:$0xff]
  %v986 = vld [vmem:[%s984 + $0x8] sm:$0xff]
  %989 = vrot.lane.b32.xlu0 %v985, 96
  %v990 = vpop.permute.xlu0 %989
  %991 = vrot.lane.b32.xlu0 %v986, 96
  %v992 = vpop.permute.xlu0 %991
  %v995 = vadd.f32 %v982, %v990
  %v996 = vadd.f32 %v983, %v992
  %999 = vrot.lane.b32.xlu0 %v995, 32
  %v1000 = vpop.permute.xlu0 %999
  %1001 = vrot.lane.b32.xlu0 %v996, 32
  %v1002 = vpop.permute.xlu0 %1001
  %s1005 = scalar_lea.vmem [#allocation2], 96
  %1006 = vst.msk [vmem:[%s1005] sm:$0xff] %vm61, %v1000
  %1007 = vst.msk [vmem:[%s1005 + $0x8] sm:$0xff] %vm61, %v1002
  %s1008 = scalar_lea.vmem [#allocation3], 112
  %v1009 = vld [vmem:[%s1008] sm:$0xff]
  %v1010 = vld [vmem:[%s1008 + $0x8] sm:$0xff]
  %1013 = vrot.lane.b32.xlu0 %v982, 32
  %v1014 = vpop.permute.xlu0 %1013
  %1015 = vrot.lane.b32.xlu0 %v983, 32
  %v1016 = vpop.permute.xlu0 %1015
  %v1017 = vsel %vm61, %v1014, 0
  %v1019 = vsel %vm61, %v1016, 0
  %1021 = vmatpush.msra.mxu0 0.0
  %1022 = vmatpush.msra.mxu0 0.0
  %1023 = vmatpush.msra.mxu0 0.0
  %1024 = vmatpush.msra.mxu0 0.0
  %1025 = vmatpush.msra.mxu0 0.0
  %1026 = vmatpush.msra.mxu0 0.0
  %1027 = vmatpush.msra.mxu0 0.0
  %1028 = vmatpush.msra.mxu0 0.0
  %1029 = vmatpush.msra.mxu0 0.0
  %1030 = vmatpush.msra.mxu0 0.0
  %1031 = vmatpush.msra.mxu0 0.0
  %1032 = vmatpush.msra.mxu0 0.0
  %1033 = vmatpush.msra.mxu0 %v40
  %1034 = vmatpush.msra.mxu0 %v39
  %1035 = vmatpush.msra.mxu0 %v38
  %1036 = vmatpush.msra.mxu0 %v37
  %1037 = vmatmul.f32.gmra.mxu0 %v1017
  %v1038 = vpop.f32.mrf.mxu0
  %v1039 = vadd.f32 0.0, %v1038
  %1040 = vmatmul.f32.gmra.mxu0 %v1019
  %v1041 = vpop.f32.mrf.mxu0
  %v1042 = vadd.f32 0.0, %v1041
  %1043 = vdwg.mxu0
  %v1044 = vadd.f32 %v1009, %v1039
  %v1045 = vadd.f32 %v1010, %v1042
  %v1046 = vmul.f32 %v1044, 0.5
  %v1047 = vmul.f32 %v1045, 0.5
  %v1048 = vtanh.pop %v1046
  %v1049 = vtanh.pop %v1047
  %v1050 = vadd.f32 %v1048, 1.0
  %v1051 = vadd.f32 %v1049, 1.0
  %v1052 = vmul.f32 %v1050, 0.5
  %v1053 = vmul.f32 %v1051, 0.5
  %v1054 = vtanh.pop %v1044
  %v1055 = vtanh.pop %v1045
  %v1056 = vmul.f32 %v1052, %v970
  %v1057 = vmul.f32 %v1053, %v971
  %1060 = vrot.lane.b32.xlu0 %v1054, 64
  %v1061 = vpop.permute.xlu0 %1060
  %1062 = vrot.lane.b32.xlu0 %v1055, 64
  %v1063 = vpop.permute.xlu0 %1062
  %v1066 = vmul.f32 %v1052, %v1061
  %v1067 = vmul.f32 %v1053, %v1063
  %1070 = vrot.lane.b32.xlu0 %v1066, 32
  %v1071 = vpop.permute.xlu0 %1070
  %1072 = vrot.lane.b32.xlu0 %v1067, 32
  %v1073 = vpop.permute.xlu0 %1072
  %v1076 = vadd.f32 %v1056, %v1071
  %v1077 = vadd.f32 %v1057, %v1073
  %v1078 = vtanh.pop %v1076
  %v1079 = vtanh.pop %v1077
  %1082 = vrot.lane.b32.xlu0 %v1078, 64
  %v1083 = vpop.permute.xlu0 %1082
  %1084 = vrot.lane.b32.xlu0 %v1079, 64
  %v1085 = vpop.permute.xlu0 %1084
  %v1088 = vmul.f32 %v1052, %v1083
  %v1089 = vmul.f32 %v1053, %v1085
  %s1090 = scalar_lea.vmem [#allocation4], 112
  %v1091 = vld [vmem:[%s1090] sm:$0xff]
  %v1092 = vld [vmem:[%s1090 + $0x8] sm:$0xff]
  %1095 = vrot.lane.b32.xlu0 %v1091, 96
  %v1096 = vpop.permute.xlu0 %1095
  %1097 = vrot.lane.b32.xlu0 %v1092, 96
  %v1098 = vpop.permute.xlu0 %1097
  %v1101 = vadd.f32 %v1088, %v1096
  %v1102 = vadd.f32 %v1089, %v1098
  %1105 = vrot.lane.b32.xlu0 %v1101, 32
  %v1106 = vpop.permute.xlu0 %1105
  %1107 = vrot.lane.b32.xlu0 %v1102, 32
  %v1108 = vpop.permute.xlu0 %1107
  %s1111 = scalar_lea.vmem [#allocation2], 112
  %1112 = vst.msk [vmem:[%s1111] sm:$0xff] %vm61, %v1106
  %1113 = vst.msk [vmem:[%s1111 + $0x8] sm:$0xff] %vm61, %v1108
  %s1114 = scalar_lea.vmem %s1, 32
  %v1115 = vld [vmem:[%s1114] sm:$0xff]
  %v1116 = vld [vmem:[%s1114 + $0x8] sm:$0xff]
  %v1117 = vld [vmem:[%s1114 + $0x10] sm:$0xff]
  %v1118 = vld [vmem:[%s1114 + $0x18] sm:$0xff]
  %s1119 = scalar_lea.vmem %s2, 32
  %v1120 = vld [vmem:[%s1119] sm:$0xff]
  %v1121 = vld [vmem:[%s1119 + $0x8] sm:$0xff]
  %v1122 = vld [vmem:[%s1119 + $0x10] sm:$0xff]
  %v1123 = vld [vmem:[%s1119 + $0x18] sm:$0xff]
  %s1124 = scalar_lea.vmem %s3, 32
  %v1125 = vld [vmem:[%s1124] sm:$0xff]
  %v1126 = vld [vmem:[%s1124 + $0x8] sm:$0xff]
  %v1127 = vld [vmem:[%s1124 + $0x10] sm:$0xff]
  %v1128 = vld [vmem:[%s1124 + $0x18] sm:$0xff]
  %v1129 = vld [vmem:[#allocation2] sm:$0xff]
  %v1130 = vld [vmem:[#allocation2 + $0x8] sm:$0xff]
  %v1131 = vld [vmem:[#allocation2 + $0x10] sm:$0xff]
  %v1132 = vld [vmem:[#allocation2 + $0x18] sm:$0xff]
  %v1133 = vld [vmem:[#allocation2 + $0x20] sm:$0xff]
  %v1134 = vld [vmem:[#allocation2 + $0x28] sm:$0xff]
  %v1135 = vld [vmem:[#allocation2 + $0x30] sm:$0xff]
  %v1136 = vld [vmem:[#allocation2 + $0x38] sm:$0xff]
  %v1137 = vld [vmem:[#allocation2 + $0x40] sm:$0xff]
  %v1138 = vld [vmem:[#allocation2 + $0x48] sm:$0xff]
  %v1139 = vld [vmem:[#allocation2 + $0x50] sm:$0xff]
  %v1140 = vld [vmem:[#allocation2 + $0x58] sm:$0xff]
  %v1141 = vld [vmem:[#allocation2 + $0x60] sm:$0xff]
  %v1142 = vld [vmem:[#allocation2 + $0x68] sm:$0xff]
  %v1143 = vld [vmem:[#allocation2 + $0x70] sm:$0xff]
  %v1144 = vld [vmem:[#allocation2 + $0x78] sm:$0xff]
  %s1145 = scalar_lea.vmem %s4, 1
  %v1146 = vld [vmem:[%s1145] sm:$0x1]
  %v1148 = vperm.slane %v1146, 0
  %v1151 = vsel %vm61, %v1129, 0
  %v1154 = vsel %vm61, %v1130, 0
  %v1157 = vsel %vm61, %v1131, 0
  %v1160 = vsel %vm61, %v1132, 0
  %v1163 = vsel %vm61, %v1133, 0
  %v1166 = vsel %vm61, %v1134, 0
  %v1169 = vsel %vm61, %v1135, 0
  %v1172 = vsel %vm61, %v1136, 0
  %v1175 = vsel %vm61, %v1137, 0
  %v1178 = vsel %vm61, %v1138, 0
  %v1181 = vsel %vm61, %v1139, 0
  %v1184 = vsel %vm61, %v1140, 0
  %v1187 = vsel %vm61, %v1141, 0
  %v1190 = vsel %vm61, %v1142, 0
  %v1193 = vsel %vm61, %v1143, 0
  %v1196 = vsel %vm61, %v1144, 0
  %1198 = vmatpush.msra.mxu0 0.0
  %1199 = vmatpush.msra.mxu0 0.0
  %1200 = vmatpush.msra.mxu0 0.0
  %1201 = vmatpush.msra.mxu0 0.0
  %1202 = vmatpush.msra.mxu0 0.0
  %1203 = vmatpush.msra.mxu0 0.0
  %1204 = vmatpush.msra.mxu0 0.0
  %1205 = vmatpush.msra.mxu0 0.0
  %1206 = vmatpush.msra.mxu0 0.0
  %1207 = vmatpush.msra.mxu0 0.0
  %1208 = vmatpush.msra.mxu0 0.0
  %1209 = vmatpush.msra.mxu0 0.0
  %1210 = vmatpush.msra.mxu0 %v1118
  %1211 = vmatpush.msra.mxu0 %v1117
  %1212 = vmatpush.msra.mxu0 %v1116
  %1213 = vmatpush.msra.mxu0 %v1115
  %1214 = vmatmul.f32.gmra.mxu0 %v1151
  %v1215 = vpop.f32.mrf.mxu0
  %v1216 = vadd.f32 %v1148, %v1215
  %1217 = vmatmul.f32.gmra.mxu0 %v1154
  %v1218 = vpop.f32.mrf.mxu0
  %v1219 = vadd.f32 %v1148, %v1218
  %1220 = vmatmul.f32.gmra.mxu0 %v1157
  %v1221 = vpop.f32.mrf.mxu0
  %v1222 = vadd.f32 %v1148, %v1221
  %1223 = vmatmul.f32.gmra.mxu0 %v1160
  %v1224 = vpop.f32.mrf.mxu0
  %v1225 = vadd.f32 %v1148, %v1224
  %1226 = vmatmul.f32.gmra.mxu0 %v1163
  %v1227 = vpop.f32.mrf.mxu0
  %v1228 = vadd.f32 %v1148, %v1227
  %1229 = vmatmul.f32.gmra.mxu0 %v1166
  %v1230 = vpop.f32.mrf.mxu0
  %v1231 = vadd.f32 %v1148, %v1230
  %1232 = vmatmul.f32.gmra.mxu0 %v1169
  %v1233 = vpop.f32.mrf.mxu0
  %v1234 = vadd.f32 %v1148, %v1233
  %1235 = vmatmul.f32.gmra.mxu0 %v1172
  %v1236 = vpop.f32.mrf.mxu0
  %v1237 = vadd.f32 %v1148, %v1236
  %1238 = vmatmul.f32.gmra.mxu0 %v1175
  %v1239 = vpop.f32.mrf.mxu0
  %v1240 = vadd.f32 %v1148, %v1239
  %1241 = vmatmul.f32.gmra.mxu0 %v1178
  %v1242 = vpop.f32.mrf.mxu0
  %v1243 = vadd.f32 %v1148, %v1242
  %1244 = vmatmul.f32.gmra.mxu0 %v1181
  %v1245 = vpop.f32.mrf.mxu0
  %v1246 = vadd.f32 %v1148, %v1245
  %1247 = vmatmul.f32.gmra.mxu0 %v1184
  %v1248 = vpop.f32.mrf.mxu0
  %v1249 = vadd.f32 %v1148, %v1248
  %1250 = vmatmul.f32.gmra.mxu0 %v1187
  %v1251 = vpop.f32.mrf.mxu0
  %v1252 = vadd.f32 %v1148, %v1251
  %1253 = vmatmul.f32.gmra.mxu0 %v1190
  %v1254 = vpop.f32.mrf.mxu0
  %v1255 = vadd.f32 %v1148, %v1254
  %1256 = vmatmul.f32.gmra.mxu0 %v1193
  %v1257 = vpop.f32.mrf.mxu0
  %v1258 = vadd.f32 %v1148, %v1257
  %1259 = vmatmul.f32.gmra.mxu0 %v1196
  %v1260 = vpop.f32.mrf.mxu0
  %v1261 = vadd.f32 %v1148, %v1260
  %1262 = vdwg.mxu0
  %1263 = vst [vmem:[#allocation3] sm:$0xff] %v1216
  %1264 = vst [vmem:[#allocation3 + $0x8] sm:$0xff] %v1219
  %1265 = vst [vmem:[#allocation3 + $0x10] sm:$0xff] %v1222
  %1266 = vst [vmem:[#allocation3 + $0x18] sm:$0xff] %v1225
  %1267 = vst [vmem:[#allocation3 + $0x20] sm:$0xff] %v1228
  %1268 = vst [vmem:[#allocation3 + $0x28] sm:$0xff] %v1231
  %1269 = vst [vmem:[#allocation3 + $0x30] sm:$0xff] %v1234
  %1270 = vst [vmem:[#allocation3 + $0x38] sm:$0xff] %v1237
  %1271 = vst [vmem:[#allocation3 + $0x40] sm:$0xff] %v1240
  %1272 = vst [vmem:[#allocation3 + $0x48] sm:$0xff] %v1243
  %1273 = vst [vmem:[#allocation3 + $0x50] sm:$0xff] %v1246
  %1274 = vst [vmem:[#allocation3 + $0x58] sm:$0xff] %v1249
  %1275 = vst [vmem:[#allocation3 + $0x60] sm:$0xff] %v1252
  %1276 = vst [vmem:[#allocation3 + $0x68] sm:$0xff] %v1255
  %1277 = vst [vmem:[#allocation3 + $0x70] sm:$0xff] %v1258
  %1278 = vst [vmem:[#allocation3 + $0x78] sm:$0xff] %v1261
  %s1279 = scalar_lea.vmem %s5, 1
  %v1280 = vld [vmem:[%s1279] sm:$0x1]
  %v1282 = vperm.slane %v1280, 0
  %1284 = vmatpush.msra.mxu0 0.0
  %1285 = vmatpush.msra.mxu0 0.0
  %1286 = vmatpush.msra.mxu0 0.0
  %1287 = vmatpush.msra.mxu0 0.0
  %1288 = vmatpush.msra.mxu0 0.0
  %1289 = vmatpush.msra.mxu0 0.0
  %1290 = vmatpush.msra.mxu0 0.0
  %1291 = vmatpush.msra.mxu0 0.0
  %1292 = vmatpush.msra.mxu0 0.0
  %1293 = vmatpush.msra.mxu0 0.0
  %1294 = vmatpush.msra.mxu0 0.0
  %1295 = vmatpush.msra.mxu0 0.0
  %1296 = vmatpush.msra.mxu0 %v1123
  %1297 = vmatpush.msra.mxu0 %v1122
  %1298 = vmatpush.msra.mxu0 %v1121
  %1299 = vmatpush.msra.mxu0 %v1120
  %1300 = vmatmul.f32.gmra.mxu0 %v1151
  %v1301 = vpop.f32.mrf.mxu0
  %v1302 = vadd.f32 %v1282, %v1301
  %1303 = vmatmul.f32.gmra.mxu0 %v1154
  %v1304 = vpop.f32.mrf.mxu0
  %v1305 = vadd.f32 %v1282, %v1304
  %1306 = vmatmul.f32.gmra.mxu0 %v1157
  %v1307 = vpop.f32.mrf.mxu0
  %v1308 = vadd.f32 %v1282, %v1307
  %1309 = vmatmul.f32.gmra.mxu0 %v1160
  %v1310 = vpop.f32.mrf.mxu0
  %v1311 = vadd.f32 %v1282, %v1310
  %1312 = vmatmul.f32.gmra.mxu0 %v1163
  %v1313 = vpop.f32.mrf.mxu0
  %v1314 = vadd.f32 %v1282, %v1313
  %1315 = vmatmul.f32.gmra.mxu0 %v1166
  %v1316 = vpop.f32.mrf.mxu0
  %v1317 = vadd.f32 %v1282, %v1316
  %1318 = vmatmul.f32.gmra.mxu0 %v1169
  %v1319 = vpop.f32.mrf.mxu0
  %v1320 = vadd.f32 %v1282, %v1319
  %1321 = vmatmul.f32.gmra.mxu0 %v1172
  %v1322 = vpop.f32.mrf.mxu0
  %v1323 = vadd.f32 %v1282, %v1322
  %1324 = vmatmul.f32.gmra.mxu0 %v1175
  %v1325 = vpop.f32.mrf.mxu0
  %v1326 = vadd.f32 %v1282, %v1325
  %1327 = vmatmul.f32.gmra.mxu0 %v1178
  %v1328 = vpop.f32.mrf.mxu0
  %v1329 = vadd.f32 %v1282, %v1328
  %1330 = vmatmul.f32.gmra.mxu0 %v1181
  %v1331 = vpop.f32.mrf.mxu0
  %v1332 = vadd.f32 %v1282, %v1331
  %1333 = vmatmul.f32.gmra.mxu0 %v1184
  %v1334 = vpop.f32.mrf.mxu0
  %v1335 = vadd.f32 %v1282, %v1334
  %1336 = vmatmul.f32.gmra.mxu0 %v1187
  %v1337 = vpop.f32.mrf.mxu0
  %v1338 = vadd.f32 %v1282, %v1337
  %1339 = vmatmul.f32.gmra.mxu0 %v1190
  %v1340 = vpop.f32.mrf.mxu0
  %v1341 = vadd.f32 %v1282, %v1340
  %1342 = vmatmul.f32.gmra.mxu0 %v1193
  %v1343 = vpop.f32.mrf.mxu0
  %v1344 = vadd.f32 %v1282, %v1343
  %1345 = vmatmul.f32.gmra.mxu0 %v1196
  %v1346 = vpop.f32.mrf.mxu0
  %v1347 = vadd.f32 %v1282, %v1346
  %1348 = vdwg.mxu0
  %1349 = vst.msk [vmem:[#allocation4] sm:$0xff] %vm61, %v1302
  %1350 = vst.msk [vmem:[#allocation4 + $0x8] sm:$0xff] %vm61, %v1305
  %1351 = vst.msk [vmem:[#allocation4 + $0x10] sm:$0xff] %vm61, %v1308
  %1352 = vst.msk [vmem:[#allocation4 + $0x18] sm:$0xff] %vm61, %v1311
  %1353 = vst.msk [vmem:[#allocation4 + $0x20] sm:$0xff] %vm61, %v1314
  %1354 = vst.msk [vmem:[#allocation4 + $0x28] sm:$0xff] %vm61, %v1317
  %1355 = vst.msk [vmem:[#allocation4 + $0x30] sm:$0xff] %vm61, %v1320
  %1356 = vst.msk [vmem:[#allocation4 + $0x38] sm:$0xff] %vm61, %v1323
  %1357 = vst.msk [vmem:[#allocation4 + $0x40] sm:$0xff] %vm61, %v1326
  %1358 = vst.msk [vmem:[#allocation4 + $0x48] sm:$0xff] %vm61, %v1329
  %1359 = vst.msk [vmem:[#allocation4 + $0x50] sm:$0xff] %vm61, %v1332
  %1360 = vst.msk [vmem:[#allocation4 + $0x58] sm:$0xff] %vm61, %v1335
  %1361 = vst.msk [vmem:[#allocation4 + $0x60] sm:$0xff] %vm61, %v1338
  %1362 = vst.msk [vmem:[#allocation4 + $0x68] sm:$0xff] %vm61, %v1341
  %1363 = vst.msk [vmem:[#allocation4 + $0x70] sm:$0xff] %vm61, %v1344
  %1364 = vst.msk [vmem:[#allocation4 + $0x78] sm:$0xff] %vm61, %v1347
  %v1365 = vld [vmem:[#allocation3] sm:$0xff]
  %v1366 = vld [vmem:[#allocation3 + $0x8] sm:$0xff]
  %1367 = vmatpush.msra.mxu0 0.0
  %1368 = vmatpush.msra.mxu0 0.0
  %1369 = vmatpush.msra.mxu0 0.0
  %1370 = vmatpush.msra.mxu0 0.0
  %1371 = vmatpush.msra.mxu0 0.0
  %1372 = vmatpush.msra.mxu0 0.0
  %1373 = vmatpush.msra.mxu0 0.0
  %1374 = vmatpush.msra.mxu0 0.0
  %1375 = vmatpush.msra.mxu0 0.0
  %1376 = vmatpush.msra.mxu0 0.0
  %1377 = vmatpush.msra.mxu0 0.0
  %1378 = vmatpush.msra.mxu0 0.0
  %1379 = vmatpush.msra.mxu0 %v1128
  %1380 = vmatpush.msra.mxu0 %v1127
  %1381 = vmatpush.msra.mxu0 %v1126
  %1382 = vmatpush.msra.mxu0 %v1125
  %1383 = vmatmul.f32.gmra.mxu0 %v279
  %v1384 = vpop.f32.mrf.mxu0
  %v1385 = vadd.f32 0.0, %v1384
  %1386 = vmatmul.f32.gmra.mxu0 %v279
  %v1387 = vpop.f32.mrf.mxu0
  %v1388 = vadd.f32 0.0, %v1387
  %1389 = vdwg.mxu0
  %v1390 = vadd.f32 %v1365, %v1385
  %v1391 = vadd.f32 %v1366, %v1388
  %v1392 = vmul.f32 %v1390, 0.5
  %v1393 = vmul.f32 %v1391, 0.5
  %v1394 = vtanh.pop %v1392
  %v1395 = vtanh.pop %v1393
  %v1396 = vadd.f32 %v1394, 1.0
  %v1397 = vadd.f32 %v1395, 1.0
  %v1398 = vmul.f32 %v1396, 0.5
  %v1399 = vmul.f32 %v1397, 0.5
  %v1400 = vtanh.pop %v1390
  %v1401 = vtanh.pop %v1391
  %v1402 = vmul.f32 %v1398, 0.0
  %v1403 = vmul.f32 %v1399, 0.0
  %1406 = vrot.lane.b32.xlu0 %v1400, 64
  %v1407 = vpop.permute.xlu0 %1406
  %1408 = vrot.lane.b32.xlu0 %v1401, 64
  %v1409 = vpop.permute.xlu0 %1408
  %v1412 = vmul.f32 %v1398, %v1407
  %v1413 = vmul.f32 %v1399, %v1409
  %1416 = vrot.lane.b32.xlu0 %v1412, 32
  %v1417 = vpop.permute.xlu0 %1416
  %1418 = vrot.lane.b32.xlu0 %v1413, 32
  %v1419 = vpop.permute.xlu0 %1418
  %v1422 = vadd.f32 %v1402, %v1417
  %v1423 = vadd.f32 %v1403, %v1419
  %v1424 = vtanh.pop %v1422
  %v1425 = vtanh.pop %v1423
  %1428 = vrot.lane.b32.xlu0 %v1424, 64
  %v1429 = vpop.permute.xlu0 %1428
  %1430 = vrot.lane.b32.xlu0 %v1425, 64
  %v1431 = vpop.permute.xlu0 %1430
  %v1434 = vmul.f32 %v1398, %v1429
  %v1435 = vmul.f32 %v1399, %v1431
  %v1436 = vld [vmem:[#allocation4] sm:$0xff]
  %v1437 = vld [vmem:[#allocation4 + $0x8] sm:$0xff]
  %1440 = vrot.lane.b32.xlu0 %v1436, 96
  %v1441 = vpop.permute.xlu0 %1440
  %1442 = vrot.lane.b32.xlu0 %v1437, 96
  %v1443 = vpop.permute.xlu0 %1442
  %v1446 = vadd.f32 %v1434, %v1441
  %v1447 = vadd.f32 %v1435, %v1443
  %1450 = vrot.lane.b32.xlu0 %v1446, 32
  %v1451 = vpop.permute.xlu0 %1450
  %1452 = vrot.lane.b32.xlu0 %v1447, 32
  %v1453 = vpop.permute.xlu0 %1452
  %1456 = vst.msk [vmem:[#allocation2] sm:$0xff] %vm61, %v1451
  %1457 = vst.msk [vmem:[#allocation2 + $0x8] sm:$0xff] %vm61, %v1453
  %v1458 = vld [vmem:[%s372] sm:$0xff]
  %v1459 = vld [vmem:[%s372 + $0x8] sm:$0xff]
  %1462 = vrot.lane.b32.xlu0 %v1434, 32
  %v1463 = vpop.permute.xlu0 %1462
  %1464 = vrot.lane.b32.xlu0 %v1435, 32
  %v1465 = vpop.permute.xlu0 %1464
  %v1466 = vsel %vm61, %v1463, 0
  %v1468 = vsel %vm61, %v1465, 0
  %1470 = vmatpush.msra.mxu0 0.0
  %1471 = vmatpush.msra.mxu0 0.0
  %1472 = vmatpush.msra.mxu0 0.0
  %1473 = vmatpush.msra.mxu0 0.0
  %1474 = vmatpush.msra.mxu0 0.0
  %1475 = vmatpush.msra.mxu0 0.0
  %1476 = vmatpush.msra.mxu0 0.0
  %1477 = vmatpush.msra.mxu0 0.0
  %1478 = vmatpush.msra.mxu0 0.0
  %1479 = vmatpush.msra.mxu0 0.0
  %1480 = vmatpush.msra.mxu0 0.0
  %1481 = vmatpush.msra.mxu0 0.0
  %1482 = vmatpush.msra.mxu0 %v1128
  %1483 = vmatpush.msra.mxu0 %v1127
  %1484 = vmatpush.msra.mxu0 %v1126
  %1485 = vmatpush.msra.mxu0 %v1125
  %1486 = vmatmul.f32.gmra.mxu0 %v1466
  %v1487 = vpop.f32.mrf.mxu0
  %v1488 = vadd.f32 0.0, %v1487
  %1489 = vmatmul.f32.gmra.mxu0 %v1468
  %v1490 = vpop.f32.mrf.mxu0
  %v1491 = vadd.f32 0.0, %v1490
  %1492 = vdwg.mxu0
  %v1493 = vadd.f32 %v1458, %v1488
  %v1494 = vadd.f32 %v1459, %v1491
  %v1495 = vmul.f32 %v1493, 0.5
  %v1496 = vmul.f32 %v1494, 0.5
  %v1497 = vtanh.pop %v1495
  %v1498 = vtanh.pop %v1496
  %v1499 = vadd.f32 %v1497, 1.0
  %v1500 = vadd.f32 %v1498, 1.0
  %v1501 = vmul.f32 %v1499, 0.5
  %v1502 = vmul.f32 %v1500, 0.5
  %v1503 = vtanh.pop %v1493
  %v1504 = vtanh.pop %v1494
  %v1505 = vmul.f32 %v1501, %v1422
  %v1506 = vmul.f32 %v1502, %v1423
  %1509 = vrot.lane.b32.xlu0 %v1503, 64
  %v1510 = vpop.permute.xlu0 %1509
  %1511 = vrot.lane.b32.xlu0 %v1504, 64
  %v1512 = vpop.permute.xlu0 %1511
  %v1515 = vmul.f32 %v1501, %v1510
  %v1516 = vmul.f32 %v1502, %v1512
  %1519 = vrot.lane.b32.xlu0 %v1515, 32
  %v1520 = vpop.permute.xlu0 %1519
  %1521 = vrot.lane.b32.xlu0 %v1516, 32
  %v1522 = vpop.permute.xlu0 %1521
  %v1525 = vadd.f32 %v1505, %v1520
  %v1526 = vadd.f32 %v1506, %v1522
  %v1527 = vtanh.pop %v1525
  %v1528 = vtanh.pop %v1526
  %1531 = vrot.lane.b32.xlu0 %v1527, 64
  %v1532 = vpop.permute.xlu0 %1531
  %1533 = vrot.lane.b32.xlu0 %v1528, 64
  %v1534 = vpop.permute.xlu0 %1533
  %v1537 = vmul.f32 %v1501, %v1532
  %v1538 = vmul.f32 %v1502, %v1534
  %v1539 = vld [vmem:[%s454] sm:$0xff]
  %v1540 = vld [vmem:[%s454 + $0x8] sm:$0xff]
  %1543 = vrot.lane.b32.xlu0 %v1539, 96
  %v1544 = vpop.permute.xlu0 %1543
  %1545 = vrot.lane.b32.xlu0 %v1540, 96
  %v1546 = vpop.permute.xlu0 %1545
  %v1549 = vadd.f32 %v1537, %v1544
  %v1550 = vadd.f32 %v1538, %v1546
  %1553 = vrot.lane.b32.xlu0 %v1549, 32
  %v1554 = vpop.permute.xlu0 %1553
  %1555 = vrot.lane.b32.xlu0 %v1550, 32
  %v1556 = vpop.permute.xlu0 %1555
  %1559 = vst.msk [vmem:[%s475] sm:$0xff] %vm61, %v1554
  %1560 = vst.msk [vmem:[%s475 + $0x8] sm:$0xff] %vm61, %v1556
  %v1561 = vld [vmem:[%s478] sm:$0xff]
  %v1562 = vld [vmem:[%s478 + $0x8] sm:$0xff]
  %1565 = vrot.lane.b32.xlu0 %v1537, 32
  %v1566 = vpop.permute.xlu0 %1565
  %1567 = vrot.lane.b32.xlu0 %v1538, 32
  %v1568 = vpop.permute.xlu0 %1567
  %v1569 = vsel %vm61, %v1566, 0
  %v1571 = vsel %vm61, %v1568, 0
  %1573 = vmatpush.msra.mxu0 0.0
  %1574 = vmatpush.msra.mxu0 0.0
  %1575 = vmatpush.msra.mxu0 0.0
  %1576 = vmatpush.msra.mxu0 0.0
  %1577 = vmatpush.msra.mxu0 0.0
  %1578 = vmatpush.msra.mxu0 0.0
  %1579 = vmatpush.msra.mxu0 0.0
  %1580 = vmatpush.msra.mxu0 0.0
  %1581 = vmatpush.msra.mxu0 0.0
  %1582 = vmatpush.msra.mxu0 0.0
  %1583 = vmatpush.msra.mxu0 0.0
  %1584 = vmatpush.msra.mxu0 0.0
  %1585 = vmatpush.msra.mxu0 %v1128
  %1586 = vmatpush.msra.mxu0 %v1127
  %1587 = vmatpush.msra.mxu0 %v1126
  %1588 = vmatpush.msra.mxu0 %v1125
  %1589 = vmatmul.f32.gmra.mxu0 %v1569
  %v1590 = vpop.f32.mrf.mxu0
  %v1591 = vadd.f32 0.0, %v1590
  %1592 = vmatmul.f32.gmra.mxu0 %v1571
  %v1593 = vpop.f32.mrf.mxu0
  %v1594 = vadd.f32 0.0, %v1593
  %1595 = vdwg.mxu0
  %v1596 = vadd.f32 %v1561, %v1591
  %v1597 = vadd.f32 %v1562, %v1594
  %v1598 = vmul.f32 %v1596, 0.5
  %v1599 = vmul.f32 %v1597, 0.5
  %v1600 = vtanh.pop %v1598
  %v1601 = vtanh.pop %v1599
  %v1602 = vadd.f32 %v1600, 1.0
  %v1603 = vadd.f32 %v1601, 1.0
  %v1604 = vmul.f32 %v1602, 0.5
  %v1605 = vmul.f32 %v1603, 0.5
  %v1606 = vtanh.pop %v1596
  %v1607 = vtanh.pop %v1597
  %v1608 = vmul.f32 %v1604, %v1525
  %v1609 = vmul.f32 %v1605, %v1526
  %1612 = vrot.lane.b32.xlu0 %v1606, 64
  %v1613 = vpop.permute.xlu0 %1612
  %1614 = vrot.lane.b32.xlu0 %v1607, 64
  %v1615 = vpop.permute.xlu0 %1614
  %v1618 = vmul.f32 %v1604, %v1613
  %v1619 = vmul.f32 %v1605, %v1615
  %1622 = vrot.lane.b32.xlu0 %v1618, 32
  %v1623 = vpop.permute.xlu0 %1622
  %1624 = vrot.lane.b32.xlu0 %v1619, 32
  %v1625 = vpop.permute.xlu0 %1624
  %v1628 = vadd.f32 %v1608, %v1623
  %v1629 = vadd.f32 %v1609, %v1625
  %v1630 = vtanh.pop %v1628
  %v1631 = vtanh.pop %v1629
  %1634 = vrot.lane.b32.xlu0 %v1630, 64
  %v1635 = vpop.permute.xlu0 %1634
  %1636 = vrot.lane.b32.xlu0 %v1631, 64
  %v1637 = vpop.permute.xlu0 %1636
  %v1640 = vmul.f32 %v1604, %v1635
  %v1641 = vmul.f32 %v1605, %v1637
  %v1642 = vld [vmem:[%s560] sm:$0xff]
  %v1643 = vld [vmem:[%s560 + $0x8] sm:$0xff]
  %1646 = vrot.lane.b32.xlu0 %v1642, 96
  %v1647 = vpop.permute.xlu0 %1646
  %1648 = vrot.lane.b32.xlu0 %v1643, 96
  %v1649 = vpop.permute.xlu0 %1648
  %v1652 = vadd.f32 %v1640, %v1647
  %v1653 = vadd.f32 %v1641, %v1649
  %1656 = vrot.lane.b32.xlu0 %v1652, 32
  %v1657 = vpop.permute.xlu0 %1656
  %1658 = vrot.lane.b32.xlu0 %v1653, 32
  %v1659 = vpop.permute.xlu0 %1658
  %1662 = vst.msk [vmem:[%s581] sm:$0xff] %vm61, %v1657
  %1663 = vst.msk [vmem:[%s581 + $0x8] sm:$0xff] %vm61, %v1659
  %v1664 = vld [vmem:[%s584] sm:$0xff]
  %v1665 = vld [vmem:[%s584 + $0x8] sm:$0xff]
  %1668 = vrot.lane.b32.xlu0 %v1640, 32
  %v1669 = vpop.permute.xlu0 %1668
  %1670 = vrot.lane.b32.xlu0 %v1641, 32
  %v1671 = vpop.permute.xlu0 %1670
  %v1672 = vsel %vm61, %v1669, 0
  %v1674 = vsel %vm61, %v1671, 0
  %1676 = vmatpush.msra.mxu0 0.0
  %1677 = vmatpush.msra.mxu0 0.0
  %1678 = vmatpush.msra.mxu0 0.0
  %1679 = vmatpush.msra.mxu0 0.0
  %1680 = vmatpush.msra.mxu0 0.0
  %1681 = vmatpush.msra.mxu0 0.0
  %1682 = vmatpush.msra.mxu0 0.0
  %1683 = vmatpush.msra.mxu0 0.0
  %1684 = vmatpush.msra.mxu0 0.0
  %1685 = vmatpush.msra.mxu0 0.0
  %1686 = vmatpush.msra.mxu0 0.0
  %1687 = vmatpush.msra.mxu0 0.0
  %1688 = vmatpush.msra.mxu0 %v1128
  %1689 = vmatpush.msra.mxu0 %v1127
  %1690 = vmatpush.msra.mxu0 %v1126
  %1691 = vmatpush.msra.mxu0 %v1125
  %1692 = vmatmul.f32.gmra.mxu0 %v1672
  %v1693 = vpop.f32.mrf.mxu0
  %v1694 = vadd.f32 0.0, %v1693
  %1695 = vmatmul.f32.gmra.mxu0 %v1674
  %v1696 = vpop.f32.mrf.mxu0
  %v1697 = vadd.f32 0.0, %v1696
  %1698 = vdwg.mxu0
  %v1699 = vadd.f32 %v1664, %v1694
  %v1700 = vadd.f32 %v1665, %v1697
  %v1701 = vmul.f32 %v1699, 0.5
  %v1702 = vmul.f32 %v1700, 0.5
  %v1703 = vtanh.pop %v1701
  %v1704 = vtanh.pop %v1702
  %v1705 = vadd.f32 %v1703, 1.0
  %v1706 = vadd.f32 %v1704, 1.0
  %v1707 = vmul.f32 %v1705, 0.5
  %v1708 = vmul.f32 %v1706, 0.5
  %v1709 = vtanh.pop %v1699
  %v1710 = vtanh.pop %v1700
  %v1711 = vmul.f32 %v1707, %v1628
  %v1712 = vmul.f32 %v1708, %v1629
  %1715 = vrot.lane.b32.xlu0 %v1709, 64
  %v1716 = vpop.permute.xlu0 %1715
  %1717 = vrot.lane.b32.xlu0 %v1710, 64
  %v1718 = vpop.permute.xlu0 %1717
  %v1721 = vmul.f32 %v1707, %v1716
  %v1722 = vmul.f32 %v1708, %v1718
  %1725 = vrot.lane.b32.xlu0 %v1721, 32
  %v1726 = vpop.permute.xlu0 %1725
  %1727 = vrot.lane.b32.xlu0 %v1722, 32
  %v1728 = vpop.permute.xlu0 %1727
  %v1731 = vadd.f32 %v1711, %v1726
  %v1732 = vadd.f32 %v1712, %v1728
  %v1733 = vtanh.pop %v1731
  %v1734 = vtanh.pop %v1732
  %1737 = vrot.lane.b32.xlu0 %v1733, 64
  %v1738 = vpop.permute.xlu0 %1737
  %1739 = vrot.lane.b32.xlu0 %v1734, 64
  %v1740 = vpop.permute.xlu0 %1739
  %v1743 = vmul.f32 %v1707, %v1738
  %v1744 = vmul.f32 %v1708, %v1740
  %v1745 = vld [vmem:[%s666] sm:$0xff]
  %v1746 = vld [vmem:[%s666 + $0x8] sm:$0xff]
  %1749 = vrot.lane.b32.xlu0 %v1745, 96
  %v1750 = vpop.permute.xlu0 %1749
  %1751 = vrot.lane.b32.xlu0 %v1746, 96
  %v1752 = vpop.permute.xlu0 %1751
  %v1755 = vadd.f32 %v1743, %v1750
  %v1756 = vadd.f32 %v1744, %v1752
  %1759 = vrot.lane.b32.xlu0 %v1755, 32
  %v1760 = vpop.permute.xlu0 %1759
  %1761 = vrot.lane.b32.xlu0 %v1756, 32
  %v1762 = vpop.permute.xlu0 %1761
  %1765 = vst.msk [vmem:[%s687] sm:$0xff] %vm61, %v1760
  %1766 = vst.msk [vmem:[%s687 + $0x8] sm:$0xff] %vm61, %v1762
  %v1767 = vld [vmem:[%s690] sm:$0xff]
  %v1768 = vld [vmem:[%s690 + $0x8] sm:$0xff]
  %1771 = vrot.lane.b32.xlu0 %v1743, 32
  %v1772 = vpop.permute.xlu0 %1771
  %1773 = vrot.lane.b32.xlu0 %v1744, 32
  %v1774 = vpop.permute.xlu0 %1773
  %v1775 = vsel %vm61, %v1772, 0
  %v1777 = vsel %vm61, %v1774, 0
  %1779 = vmatpush.msra.mxu0 0.0
  %1780 = vmatpush.msra.mxu0 0.0
  %1781 = vmatpush.msra.mxu0 0.0
  %1782 = vmatpush.msra.mxu0 0.0
  %1783 = vmatpush.msra.mxu0 0.0
  %1784 = vmatpush.msra.mxu0 0.0
  %1785 = vmatpush.msra.mxu0 0.0
  %1786 = vmatpush.msra.mxu0 0.0
  %1787 = vmatpush.msra.mxu0 0.0
  %1788 = vmatpush.msra.mxu0 0.0
  %1789 = vmatpush.msra.mxu0 0.0
  %1790 = vmatpush.msra.mxu0 0.0
  %1791 = vmatpush.msra.mxu0 %v1128
  %1792 = vmatpush.msra.mxu0 %v1127
  %1793 = vmatpush.msra.mxu0 %v1126
  %1794 = vmatpush.msra.mxu0 %v1125
  %1795 = vmatmul.f32.gmra.mxu0 %v1775
  %v1796 = vpop.f32.mrf.mxu0
  %v1797 = vadd.f32 0.0, %v1796
  %1798 = vmatmul.f32.gmra.mxu0 %v1777
  %v1799 = vpop.f32.mrf.mxu0
  %v1800 = vadd.f32 0.0, %v1799
  %1801 = vdwg.mxu0
  %v1802 = vadd.f32 %v1767, %v1797
  %v1803 = vadd.f32 %v1768, %v1800
  %v1804 = vmul.f32 %v1802, 0.5
  %v1805 = vmul.f32 %v1803, 0.5
  %v1806 = vtanh.pop %v1804
  %v1807 = vtanh.pop %v1805
  %v1808 = vadd.f32 %v1806, 1.0
  %v1809 = vadd.f32 %v1807, 1.0
  %v1810 = vmul.f32 %v1808, 0.5
  %v1811 = vmul.f32 %v1809, 0.5
  %v1812 = vtanh.pop %v1802
  %v1813 = vtanh.pop %v1803
  %v1814 = vmul.f32 %v1810, %v1731
  %v1815 = vmul.f32 %v1811, %v1732
  %1818 = vrot.lane.b32.xlu0 %v1812, 64
  %v1819 = vpop.permute.xlu0 %1818
  %1820 = vrot.lane.b32.xlu0 %v1813, 64
  %v1821 = vpop.permute.xlu0 %1820
  %v1824 = vmul.f32 %v1810, %v1819
  %v1825 = vmul.f32 %v1811, %v1821
  %1828 = vrot.lane.b32.xlu0 %v1824, 32
  %v1829 = vpop.permute.xlu0 %1828
  %1830 = vrot.lane.b32.xlu0 %v1825, 32
  %v1831 = vpop.permute.xlu0 %1830
  %v1834 = vadd.f32 %v1814, %v1829
  %v1835 = vadd.f32 %v1815, %v1831
  %v1836 = vtanh.pop %v1834
  %v1837 = vtanh.pop %v1835
  %1840 = vrot.lane.b32.xlu0 %v1836, 64
  %v1841 = vpop.permute.xlu0 %1840
  %1842 = vrot.lane.b32.xlu0 %v1837, 64
  %v1843 = vpop.permute.xlu0 %1842
  %v1846 = vmul.f32 %v1810, %v1841
  %v1847 = vmul.f32 %v1811, %v1843
  %v1848 = vld [vmem:[%s772] sm:$0xff]
  %v1849 = vld [vmem:[%s772 + $0x8] sm:$0xff]
  %1852 = vrot.lane.b32.xlu0 %v1848, 96
  %v1853 = vpop.permute.xlu0 %1852
  %1854 = vrot.lane.b32.xlu0 %v1849, 96
  %v1855 = vpop.permute.xlu0 %1854
  %v1858 = vadd.f32 %v1846, %v1853
  %v1859 = vadd.f32 %v1847, %v1855
  %1862 = vrot.lane.b32.xlu0 %v1858, 32
  %v1863 = vpop.permute.xlu0 %1862
  %1864 = vrot.lane.b32.xlu0 %v1859, 32
  %v1865 = vpop.permute.xlu0 %1864
  %1868 = vst.msk [vmem:[%s793] sm:$0xff] %vm61, %v1863
  %1869 = vst.msk [vmem:[%s793 + $0x8] sm:$0xff] %vm61, %v1865
  %v1870 = vld [vmem:[%s796] sm:$0xff]
  %v1871 = vld [vmem:[%s796 + $0x8] sm:$0xff]
  %1874 = vrot.lane.b32.xlu0 %v1846, 32
  %v1875 = vpop.permute.xlu0 %1874
  %1876 = vrot.lane.b32.xlu0 %v1847, 32
  %v1877 = vpop.permute.xlu0 %1876
  %v1878 = vsel %vm61, %v1875, 0
  %v1880 = vsel %vm61, %v1877, 0
  %1882 = vmatpush.msra.mxu0 0.0
  %1883 = vmatpush.msra.mxu0 0.0
  %1884 = vmatpush.msra.mxu0 0.0
  %1885 = vmatpush.msra.mxu0 0.0
  %1886 = vmatpush.msra.mxu0 0.0
  %1887 = vmatpush.msra.mxu0 0.0
  %1888 = vmatpush.msra.mxu0 0.0
  %1889 = vmatpush.msra.mxu0 0.0
  %1890 = vmatpush.msra.mxu0 0.0
  %1891 = vmatpush.msra.mxu0 0.0
  %1892 = vmatpush.msra.mxu0 0.0
  %1893 = vmatpush.msra.mxu0 0.0
  %1894 = vmatpush.msra.mxu0 %v1128
  %1895 = vmatpush.msra.mxu0 %v1127
  %1896 = vmatpush.msra.mxu0 %v1126
  %1897 = vmatpush.msra.mxu0 %v1125
  %1898 = vmatmul.f32.gmra.mxu0 %v1878
  %v1899 = vpop.f32.mrf.mxu0
  %v1900 = vadd.f32 0.0, %v1899
  %1901 = vmatmul.f32.gmra.mxu0 %v1880
  %v1902 = vpop.f32.mrf.mxu0
  %v1903 = vadd.f32 0.0, %v1902
  %1904 = vdwg.mxu0
  %v1905 = vadd.f32 %v1870, %v1900
  %v1906 = vadd.f32 %v1871, %v1903
  %v1907 = vmul.f32 %v1905, 0.5
  %v1908 = vmul.f32 %v1906, 0.5
  %v1909 = vtanh.pop %v1907
  %v1910 = vtanh.pop %v1908
  %v1911 = vadd.f32 %v1909, 1.0
  %v1912 = vadd.f32 %v1910, 1.0
  %v1913 = vmul.f32 %v1911, 0.5
  %v1914 = vmul.f32 %v1912, 0.5
  %v1915 = vtanh.pop %v1905
  %v1916 = vtanh.pop %v1906
  %v1917 = vmul.f32 %v1913, %v1834
  %v1918 = vmul.f32 %v1914, %v1835
  %1921 = vrot.lane.b32.xlu0 %v1915, 64
  %v1922 = vpop.permute.xlu0 %1921
  %1923 = vrot.lane.b32.xlu0 %v1916, 64
  %v1924 = vpop.permute.xlu0 %1923
  %v1927 = vmul.f32 %v1913, %v1922
  %v1928 = vmul.f32 %v1914, %v1924
  %1931 = vrot.lane.b32.xlu0 %v1927, 32
  %v1932 = vpop.permute.xlu0 %1931
  %1933 = vrot.lane.b32.xlu0 %v1928, 32
  %v1934 = vpop.permute.xlu0 %1933
  %v1937 = vadd.f32 %v1917, %v1932
  %v1938 = vadd.f32 %v1918, %v1934
  %v1939 = vtanh.pop %v1937
  %v1940 = vtanh.pop %v1938
  %1943 = vrot.lane.b32.xlu0 %v1939, 64
  %v1944 = vpop.permute.xlu0 %1943
  %1945 = vrot.lane.b32.xlu0 %v1940, 64
  %v1946 = vpop.permute.xlu0 %1945
  %v1949 = vmul.f32 %v1913, %v1944
  %v1950 = vmul.f32 %v1914, %v1946
  %v1951 = vld [vmem:[%s878] sm:$0xff]
  %v1952 = vld [vmem:[%s878 + $0x8] sm:$0xff]
  %1955 = vrot.lane.b32.xlu0 %v1951, 96
  %v1956 = vpop.permute.xlu0 %1955
  %1957 = vrot.lane.b32.xlu0 %v1952, 96
  %v1958 = vpop.permute.xlu0 %1957
  %v1961 = vadd.f32 %v1949, %v1956
  %v1962 = vadd.f32 %v1950, %v1958
  %1965 = vrot.lane.b32.xlu0 %v1961, 32
  %v1966 = vpop.permute.xlu0 %1965
  %1967 = vrot.lane.b32.xlu0 %v1962, 32
  %v1968 = vpop.permute.xlu0 %1967
  %1971 = vst.msk [vmem:[%s899] sm:$0xff] %vm61, %v1966
  %1972 = vst.msk [vmem:[%s899 + $0x8] sm:$0xff] %vm61, %v1968
  %v1973 = vld [vmem:[%s902] sm:$0xff]
  %v1974 = vld [vmem:[%s902 + $0x8] sm:$0xff]
  %1977 = vrot.lane.b32.xlu0 %v1949, 32
  %v1978 = vpop.permute.xlu0 %1977
  %1979 = vrot.lane.b32.xlu0 %v1950, 32
  %v1980 = vpop.permute.xlu0 %1979
  %v1981 = vsel %vm61, %v1978, 0
  %v1983 = vsel %vm61, %v1980, 0
  %1985 = vmatpush.msra.mxu0 0.0
  %1986 = vmatpush.msra.mxu0 0.0
  %1987 = vmatpush.msra.mxu0 0.0
  %1988 = vmatpush.msra.mxu0 0.0
  %1989 = vmatpush.msra.mxu0 0.0
  %1990 = vmatpush.msra.mxu0 0.0
  %1991 = vmatpush.msra.mxu0 0.0
  %1992 = vmatpush.msra.mxu0 0.0
  %1993 = vmatpush.msra.mxu0 0.0
  %1994 = vmatpush.msra.mxu0 0.0
  %1995 = vmatpush.msra.mxu0 0.0
  %1996 = vmatpush.msra.mxu0 0.0
  %1997 = vmatpush.msra.mxu0 %v1128
  %1998 = vmatpush.msra.mxu0 %v1127
  %1999 = vmatpush.msra.mxu0 %v1126
  %2000 = vmatpush.msra.mxu0 %v1125
  %2001 = vmatmul.f32.gmra.mxu0 %v1981
  %v2002 = vpop.f32.mrf.mxu0
  %v2003 = vadd.f32 0.0, %v2002
  %2004 = vmatmul.f32.gmra.mxu0 %v1983
  %v2005 = vpop.f32.mrf.mxu0
  %v2006 = vadd.f32 0.0, %v2005
  %2007 = vdwg.mxu0
  %v2008 = vadd.f32 %v1973, %v2003
  %v2009 = vadd.f32 %v1974, %v2006
  %v2010 = vmul.f32 %v2008, 0.5
  %v2011 = vmul.f32 %v2009, 0.5
  %v2012 = vtanh.pop %v2010
  %v2013 = vtanh.pop %v2011
  %v2014 = vadd.f32 %v2012, 1.0
  %v2015 = vadd.f32 %v2013, 1.0
  %v2016 = vmul.f32 %v2014, 0.5
  %v2017 = vmul.f32 %v2015, 0.5
  %v2018 = vtanh.pop %v2008
  %v2019 = vtanh.pop %v2009
  %v2020 = vmul.f32 %v2016, %v1937
  %v2021 = vmul.f32 %v2017, %v1938
  %2024 = vrot.lane.b32.xlu0 %v2018, 64
  %v2025 = vpop.permute.xlu0 %2024
  %2026 = vrot.lane.b32.xlu0 %v2019, 64
  %v2027 = vpop.permute.xlu0 %2026
  %v2030 = vmul.f32 %v2016, %v2025
  %v2031 = vmul.f32 %v2017, %v2027
  %2034 = vrot.lane.b32.xlu0 %v2030, 32
  %v2035 = vpop.permute.xlu0 %2034
  %2036 = vrot.lane.b32.xlu0 %v2031, 32
  %v2037 = vpop.permute.xlu0 %2036
  %v2040 = vadd.f32 %v2020, %v2035
  %v2041 = vadd.f32 %v2021, %v2037
  %v2042 = vtanh.pop %v2040
  %v2043 = vtanh.pop %v2041
  %2046 = vrot.lane.b32.xlu0 %v2042, 64
  %v2047 = vpop.permute.xlu0 %2046
  %2048 = vrot.lane.b32.xlu0 %v2043, 64
  %v2049 = vpop.permute.xlu0 %2048
  %v2052 = vmul.f32 %v2016, %v2047
  %v2053 = vmul.f32 %v2017, %v2049
  %v2054 = vld [vmem:[%s984] sm:$0xff]
  %v2055 = vld [vmem:[%s984 + $0x8] sm:$0xff]
  %2058 = vrot.lane.b32.xlu0 %v2054, 96
  %v2059 = vpop.permute.xlu0 %2058
  %2060 = vrot.lane.b32.xlu0 %v2055, 96
  %v2061 = vpop.permute.xlu0 %2060
  %v2064 = vadd.f32 %v2052, %v2059
  %v2065 = vadd.f32 %v2053, %v2061
  %2068 = vrot.lane.b32.xlu0 %v2064, 32
  %v2069 = vpop.permute.xlu0 %2068
  %2070 = vrot.lane.b32.xlu0 %v2065, 32
  %v2071 = vpop.permute.xlu0 %2070
  %2074 = vst.msk [vmem:[%s1005] sm:$0xff] %vm61, %v2069
  %2075 = vst.msk [vmem:[%s1005 + $0x8] sm:$0xff] %vm61, %v2071
  %v2076 = vld [vmem:[%s1008] sm:$0xff]
  %v2077 = vld [vmem:[%s1008 + $0x8] sm:$0xff]
  %2080 = vrot.lane.b32.xlu0 %v2052, 32
  %v2081 = vpop.permute.xlu0 %2080
  %2082 = vrot.lane.b32.xlu0 %v2053, 32
  %v2083 = vpop.permute.xlu0 %2082
  %v2084 = vsel %vm61, %v2081, 0
  %v2086 = vsel %vm61, %v2083, 0
  %2088 = vmatpush.msra.mxu0 0.0
  %2089 = vmatpush.msra.mxu0 0.0
  %2090 = vmatpush.msra.mxu0 0.0
  %2091 = vmatpush.msra.mxu0 0.0
  %2092 = vmatpush.msra.mxu0 0.0
  %2093 = vmatpush.msra.mxu0 0.0
  %2094 = vmatpush.msra.mxu0 0.0
  %2095 = vmatpush.msra.mxu0 0.0
  %2096 = vmatpush.msra.mxu0 0.0
  %2097 = vmatpush.msra.mxu0 0.0
  %2098 = vmatpush.msra.mxu0 0.0
  %2099 = vmatpush.msra.mxu0 0.0
  %2100 = vmatpush.msra.mxu0 %v1128
  %2101 = vmatpush.msra.mxu0 %v1127
  %2102 = vmatpush.msra.mxu0 %v1126
  %2103 = vmatpush.msra.mxu0 %v1125
  %2104 = vmatmul.f32.gmra.mxu0 %v2084
  %v2105 = vpop.f32.mrf.mxu0
  %v2106 = vadd.f32 0.0, %v2105
  %2107 = vmatmul.f32.gmra.mxu0 %v2086
  %v2108 = vpop.f32.mrf.mxu0
  %v2109 = vadd.f32 0.0, %v2108
  %2110 = vdwg.mxu0
  %v2111 = vadd.f32 %v2076, %v2106
  %v2112 = vadd.f32 %v2077, %v2109
  %v2113 = vmul.f32 %v2111, 0.5
  %v2114 = vmul.f32 %v2112, 0.5
  %v2115 = vtanh.pop %v2113
  %v2116 = vtanh.pop %v2114
  %v2117 = vadd.f32 %v2115, 1.0
  %v2118 = vadd.f32 %v2116, 1.0
  %v2119 = vmul.f32 %v2117, 0.5
  %v2120 = vmul.f32 %v2118, 0.5
  %v2121 = vtanh.pop %v2111
  %v2122 = vtanh.pop %v2112
  %v2123 = vmul.f32 %v2119, %v2040
  %v2124 = vmul.f32 %v2120, %v2041
  %2127 = vrot.lane.b32.xlu0 %v2121, 64
  %v2128 = vpop.permute.xlu0 %2127
  %2129 = vrot.lane.b32.xlu0 %v2122, 64
  %v2130 = vpop.permute.xlu0 %2129
  %v2133 = vmul.f32 %v2119, %v2128
  %v2134 = vmul.f32 %v2120, %v2130
  %2137 = vrot.lane.b32.xlu0 %v2133, 32
  %v2138 = vpop.permute.xlu0 %2137
  %2139 = vrot.lane.b32.xlu0 %v2134, 32
  %v2140 = vpop.permute.xlu0 %2139
  %v2143 = vadd.f32 %v2123, %v2138
  %v2144 = vadd.f32 %v2124, %v2140
  %v2145 = vtanh.pop %v2143
  %v2146 = vtanh.pop %v2144
  %2149 = vrot.lane.b32.xlu0 %v2145, 64
  %v2150 = vpop.permute.xlu0 %2149
  %2151 = vrot.lane.b32.xlu0 %v2146, 64
  %v2152 = vpop.permute.xlu0 %2151
  %v2155 = vmul.f32 %v2119, %v2150
  %v2156 = vmul.f32 %v2120, %v2152
  %v2157 = vld [vmem:[%s1090] sm:$0xff]
  %v2158 = vld [vmem:[%s1090 + $0x8] sm:$0xff]
  %2161 = vrot.lane.b32.xlu0 %v2157, 96
  %v2162 = vpop.permute.xlu0 %2161
  %2163 = vrot.lane.b32.xlu0 %v2158, 96
  %v2164 = vpop.permute.xlu0 %2163
  %v2167 = vadd.f32 %v2155, %v2162
  %v2168 = vadd.f32 %v2156, %v2164
  %2171 = vrot.lane.b32.xlu0 %v2167, 32
  %v2172 = vpop.permute.xlu0 %2171
  %2173 = vrot.lane.b32.xlu0 %v2168, 32
  %v2174 = vpop.permute.xlu0 %2173
  %2177 = vst.msk [vmem:[%s1111] sm:$0xff] %vm61, %v2172
  %2178 = vst.msk [vmem:[%s1111 + $0x8] sm:$0xff] %vm61, %v2174
  %v2179 = vld [vmem:[#allocation2 + $0x70] sm:$0xff]
  %v2180 = vld [vmem:[#allocation2 + $0x78] sm:$0xff]
  %v2181 = vld [vmem:[%s6] sm:$0xff]
  %v2182 = vld [vmem:[%s6 + $0x8] sm:$0xff]
  %v2183 = vld [vmem:[%s6 + $0x10] sm:$0xff]
  %v2184 = vld [vmem:[%s6 + $0x18] sm:$0xff]
  %v2185 = vld [vmem:[%s7] sm:$0x1]
  %v2187 = vperm.slane %v2185, 0
  %v2190 = vsel %vm61, %v2179, 0
  %v2193 = vsel %vm61, %v2180, 0
  %2195 = vmatpush.msra.mxu0 0.0
  %2196 = vmatpush.msra.mxu0 0.0
  %2197 = vmatpush.msra.mxu0 0.0
  %2198 = vmatpush.msra.mxu0 0.0
  %2199 = vmatpush.msra.mxu0 0.0
  %2200 = vmatpush.msra.mxu0 0.0
  %2201 = vmatpush.msra.mxu0 0.0
  %2202 = vmatpush.msra.mxu0 0.0
  %2203 = vmatpush.msra.mxu0 0.0
  %2204 = vmatpush.msra.mxu0 0.0
  %2205 = vmatpush.msra.mxu0 0.0
  %2206 = vmatpush.msra.mxu0 0.0
  %2207 = vmatpush.msra.mxu0 %v2184
  %2208 = vmatpush.msra.mxu0 %v2183
  %2209 = vmatpush.msra.mxu0 %v2182
  %2210 = vmatpush.msra.mxu0 %v2181
  %2211 = vmatmul.f32.gmra.mxu0 %v2190
  %v2212 = vpop.f32.mrf.mxu0
  %v2213 = vadd.f32 %v2187, %v2212
  %2214 = vmatmul.f32.gmra.mxu0 %v2193
  %v2215 = vpop.f32.mrf.mxu0
  %v2216 = vadd.f32 %v2187, %v2215
  %2217 = vdwg.mxu0
  %vm2218 = vcmask 31744
  %2219 = vst.msk [vmem:[%s8] sm:$0xff] %vm2218, %v2213
  %2220 = vst.msk [vmem:[%s8 + $0x8] sm:$0xff] %vm2218, %v2216
  // Predicated region
  $region34: #{lstm_decoder_forward.1} parent=0 // pred_check
    _
  $region35: #{lstm_decoder_forward.1} parent=0 // pred_check_branch
    %2222 = sbr.rel (0) target = $region37
  $region36: #{lstm_decoder_forward.1} parent=0 // pred_region
    _
  $region37: #{lstm_decoder_forward.1} parent=0 // pred_fallthru
    _
  // Predicated region
  $region38: #{lstm_decoder_forward.1} parent=0 // pred_check
    _
  $region39: #{lstm_decoder_forward.1} parent=0 // pred_check_branch
    %2224 = sbr.rel (0) target = $region41
  $region40: #{lstm_decoder_forward.1} parent=0 // pred_region
    _
  $region41: #{lstm_decoder_forward.1} parent=0 // pred_fallthru
    _

</llo_original>
